<compile_context>
chip_gen: v7x
topology: tpu7x:2x2x1
jax: 0.10.0
libtpu: 0.0.40
codegen_flags: <defaults>
</compile_context>

<pallas_src>
import functools

import jax
import jax.numpy as jnp
from jax.experimental import pallas as pl
from jax.experimental.pallas import tpu as pltpu

SEQ_LEN = 155  # hard-coded in the PyTorch module's forward()


# ----------------------------------------------------------------------------
# Kernel 1: full LSTM recurrence + hidden2tag, single invocation (no grid).
# ----------------------------------------------------------------------------
def lstm_fused_kernel(x_ref, wih_ref, whh_ref, b_ref, wout_ref, bout_ref,
                      tag_ref, gx_scr, hall_scr, *, seq_len, hidden_dim, n_pad):
    H = hidden_dim
    NP = n_pad

    # Hoisted input projection for ALL timesteps (one MXU call):
    #   gx = x @ Wih^T + (b_ih + b_hh)   -> (SEQ*NP, 4H), kept in VMEM scratch.
    gx_scr[...] = (
        jnp.dot(x_ref[...], wih_ref[...], preferred_element_type=jnp.float32)
        + b_ref[...])

    whh = whh_ref[...]                          # (H, 4H), stays resident in vregs

    def step(t, carry):
        h_prev, c_prev = carry
        row = pl.multiple_of(t * NP, NP)        # 8-aligned sublane offset
        gates = gx_scr[pl.ds(row, NP), :] + jnp.dot(
            h_prev, whh, preferred_element_type=jnp.float32)   # (NP, 4H)

        # One sigmoid over the whole tile; slice i/f/o from it.  PyTorch gate
        # order is i, f, g, o.
        sig = jax.nn.sigmoid(gates)
        i_g = sig[:, 0 * H:1 * H]
        f_g = sig[:, 1 * H:2 * H]
        o_g = sig[:, 3 * H:4 * H]
        g_g = jnp.tanh(gates[:, 2 * H:3 * H])

        c_new = f_g * c_prev + i_g * g_g
        h_new = o_g * jnp.tanh(c_new)

        hall_scr[pl.ds(row, NP), :] = h_new     # stash h_t for the bulk projection
        return h_new, c_new

    h0 = jnp.zeros((NP, H), jnp.float32)
    c0 = jnp.zeros((NP, H), jnp.float32)
    jax.lax.fori_loop(0, seq_len, step, (h0, c0))

    # Hoisted hidden2tag over all timesteps at once, one dense output write:
    #   (SEQ*NP, H) @ (H, T) + b_out
    tag_ref[...] = (
        jnp.dot(hall_scr[...], wout_ref[...], preferred_element_type=jnp.float32)
        + bout_ref[...])


# ----------------------------------------------------------------------------
# Kernel 2: log_softmax over axis 0 (the sequence axis) on a 2-D (SEQ, Np*T)
# view — lane-denser than the old (SEQ, N, T) layout.
# ----------------------------------------------------------------------------
def log_softmax_seq_kernel(x_ref, o_ref):
    x = x_ref[...].astype(jnp.float32)
    m = jnp.max(x, axis=0, keepdims=True)
    s = x - m
    lse = jnp.log(jnp.sum(jnp.exp(s), axis=0, keepdims=True))
    o_ref[...] = (s - lse).astype(o_ref.dtype)


# ----------------------------------------------------------------------------
# Wrapper
# ----------------------------------------------------------------------------
def lstm_tagger_forward(sentence_inp, params, *, hidden_dim, tagset_size):
    """sentence_inp: (batch, 155, input_dim) float32 (or 2-D => batch of 1)."""
    if sentence_inp.ndim == 3:
        N = sentence_inp.shape[0]
    else:
        N = 1
    D = sentence_inp.shape[-1]
    H, T = hidden_dim, tagset_size
    NP = ((N + 7) // 8) * 8                       # pad batch to a sublane tile

    # Matches `sentence_inp.view((155, num_sentences, -1))` — a pure reshape.
    x = jnp.reshape(sentence_inp, (SEQ_LEN, N, D))
    x = jnp.pad(x, ((0, 0), (0, NP - N), (0, 0)))  # zero-pad batch (independent rows)
    x2 = jnp.reshape(x, (SEQ_LEN * NP, D))

    wih_t = params["w_ih"].T                      # (D, 4H)
    whh_t = params["w_hh"].T                      # (H, 4H)
    b_all = (params["b_ih"] + params["b_hh"]).reshape(1, 4 * H)
    wout_t = params["w_out"].T                    # (H, T)
    bout = params["b_out"].reshape(1, T)

    kernel = functools.partial(lstm_fused_kernel, seq_len=SEQ_LEN,
                               hidden_dim=H, n_pad=NP)

    tag_space = pl.pallas_call(
        kernel,
        out_shape=jax.ShapeDtypeStruct((SEQ_LEN * NP, T), jnp.float32),
        scratch_shapes=[
            pltpu.VMEM((SEQ_LEN * NP, 4 * H), jnp.float32),   # hoisted gates_x
            pltpu.VMEM((SEQ_LEN * NP, H), jnp.float32),       # all h_t
        ],
    )(x2, wih_t, whh_t, b_all, wout_t, bout)

    # log_softmax over the sequence axis (PyTorch implicit dim=0 for 3-D input).
    # (SEQ*NP, T) -> (SEQ, NP*T) is a pure row-major view (done outside the kernel).
    tag_2d = jnp.reshape(tag_space, (SEQ_LEN, NP * T))
    scores_2d = pl.pallas_call(
        log_softmax_seq_kernel,
        out_shape=jax.ShapeDtypeStruct((SEQ_LEN, NP * T), jnp.float32),
    )(tag_2d)

    # Drop batch padding, then match `tag_scores.view((N, 155, T))` — a reshape.
    scores = jnp.reshape(scores_2d, (SEQ_LEN, NP, T))[:, :N, :]
    return jnp.reshape(scores, (N, SEQ_LEN, T))


def init_params(key, input_dim, hidden_dim, tagset_size):
    """Deterministic PyTorch-like uniform(-1/sqrt(H), 1/sqrt(H)) init."""
    H, D, T = hidden_dim, input_dim, tagset_size
    k = 1.0 / jnp.sqrt(jnp.float32(H))
    ks = jax.random.split(key, 6)
    u = lambda kk, shape: jax.random.uniform(kk, shape, jnp.float32, -k, k)
    return {
        "w_ih": u(ks[0], (4 * H, D)),    # gate order i, f, g, o
        "w_hh": u(ks[1], (4 * H, H)),
        "b_ih": u(ks[2], (4 * H,)),
        "b_hh": u(ks[3], (4 * H,)),
        "w_out": u(ks[4], (T, H)),
        "b_out": u(ks[5], (T,)),
    }


if __name__ == "__main__":
    input_dim, hidden_dim, tagset_size, batch_size = 16, 32, 8, 2

    key = jax.random.PRNGKey(0)
    pkey, xkey = jax.random.split(key)
    params = init_params(pkey, input_dim, hidden_dim, tagset_size)

    sentence_inp = jax.random.normal(
        xkey, (batch_size, SEQ_LEN, input_dim), dtype=jnp.float32)

    fwd = jax.jit(functools.partial(
        lstm_tagger_forward, hidden_dim=hidden_dim, tagset_size=tagset_size))
    out = fwd(sentence_inp, params)
    jax.block_until_ready(out)

    assert out.shape == (batch_size, SEQ_LEN, tagset_size), out.shape
    assert bool(jnp.all(jnp.isfinite(out)))
    print("KERNEL_OK")
</pallas_src>

<mosaic_0001>
module attributes {stable_mosaic.version = 11 : i64} {
  func.func @lstm_fused_kernel(%arg0: memref<1240x16xf32, #tpu.memory_space<vmem>>, %arg1: memref<16x128xf32, #tpu.memory_space<vmem>>, %arg2: memref<32x128xf32, #tpu.memory_space<vmem>>, %arg3: memref<1x128xf32, #tpu.memory_space<vmem>>, %arg4: memref<32x8xf32, #tpu.memory_space<vmem>>, %arg5: memref<1x8xf32, #tpu.memory_space<vmem>>, %arg6: memref<1240x8xf32, #tpu.memory_space<vmem>>, %arg7: memref<1240x128xf32, #tpu.memory_space<vmem>>, %arg8: memref<1240x32xf32, #tpu.memory_space<vmem>>) attributes {dimension_semantics = [], scalar_prefetch = 0 : i64, scratch_operands = 2 : i64, tpu.core_type = #tpu.core_type<tc>} {
    %c0 = arith.constant 0 : index
    %c0_0 = arith.constant 0 : index
    %0 = vector.load %arg0[%c0, %c0_0] : memref<1240x16xf32, #tpu.memory_space<vmem>>, vector<1240x16xf32>
    %c0_1 = arith.constant 0 : index
    %c0_2 = arith.constant 0 : index
    %1 = vector.load %arg1[%c0_1, %c0_2] : memref<16x128xf32, #tpu.memory_space<vmem>>, vector<16x128xf32>
    %cst = arith.constant dense<0.000000e+00> : vector<1240x128xf32>
    %2 = tpu.matmul %0, %1, %cst {dimension_numbers = #tpu.dot_dimension_numbers<[1], [0], [0], [1], [0, 0, 1, 1], [], []>} : vector<1240x16xf32>, vector<16x128xf32>, vector<1240x128xf32> -> vector<1240x128xf32>
    %c0_3 = arith.constant 0 : index
    %c0_4 = arith.constant 0 : index
    %3 = vector.load %arg3[%c0_3, %c0_4] : memref<1x128xf32, #tpu.memory_space<vmem>>, vector<1x128xf32>
    %4 = vector.broadcast %3 : vector<1x128xf32> to vector<1240x128xf32>
    %5 = arith.addf %2, %4 : vector<1240x128xf32>
    %c0_5 = arith.constant 0 : index
    %c0_6 = arith.constant 0 : index
    %6 = vector.load %arg7[%c0_5, %c0_6] : memref<1240x128xf32, #tpu.memory_space<vmem>>, vector<1240x128xf32>
    tpu.vector_store %arg7[%c0_5, %c0_6], %5 {strides = array<i32>} : memref<1240x128xf32, #tpu.memory_space<vmem>>, vector<1240x128xf32>,
    %c0_7 = arith.constant 0 : index
    %c0_8 = arith.constant 0 : index
    %7 = vector.load %arg2[%c0_7, %c0_8] : memref<32x128xf32, #tpu.memory_space<vmem>>, vector<32x128xf32>
    %cst_9 = arith.constant 0.000000e+00 : f32
    %8 = vector.broadcast %cst_9 : f32 to vector<8x32xf32>
    %cst_10 = arith.constant 0.000000e+00 : f32
    %9 = vector.broadcast %cst_10 : f32 to vector<8x32xf32>
    %c0_i32 = arith.constant 0 : i32
    %c155_i32 = arith.constant 155 : i32
    %10 = arith.addi %c0_i32, %c155_i32 : i32
    %c1_i32 = arith.constant 1 : i32
    %11:2 = scf.for %arg9 = %c0_i32 to %10 step %c1_i32 iter_args(%arg10 = %8, %arg11 = %9) -> (vector<8x32xf32>, vector<8x32xf32>)  : i32 {
      %c8_i32 = arith.constant 8 : i32
      %19 = arith.muli %arg9, %c8_i32 : i32
      %20 = tpu.assume_multiple %19, 8 : i32
      %21 = arith.index_cast %20 : i32 to index
      %c0_21 = arith.constant 0 : index
      %22 = vector.load %arg7[%21, %c0_21] : memref<1240x128xf32, #tpu.memory_space<vmem>>, vector<8x128xf32>
      %cst_22 = arith.constant dense<0.000000e+00> : vector<8x128xf32>
      %23 = tpu.matmul %arg10, %7, %cst_22 {dimension_numbers = #tpu.dot_dimension_numbers<[1], [0], [0], [1], [0, 0, 1, 1], [], []>} : vector<8x32xf32>, vector<32x128xf32>, vector<8x128xf32> -> vector<8x128xf32>
      %24 = arith.addf %22, %23 : vector<8x128xf32>
      %25 = arith.negf %24 : vector<8x128xf32>
      %26 = math.exp %25 : vector<8x128xf32>
      %cst_23 = arith.constant 1.000000e+00 : f32
      %27 = vector.broadcast %cst_23 : f32 to vector<8x128xf32>
      %28 = arith.addf %27, %26 : vector<8x128xf32>
      %29 = arith.divf %27, %28 : vector<8x128xf32>
      %30 = vector.extract_strided_slice %29 {offsets = [0, 0], sizes = [8, 32], strides = [1, 1]} : vector<8x128xf32> to vector<8x32xf32>
      %31 = vector.extract_strided_slice %29 {offsets = [0, 32], sizes = [8, 32], strides = [1, 1]} : vector<8x128xf32> to vector<8x32xf32>
      %32 = vector.extract_strided_slice %29 {offsets = [0, 96], sizes = [8, 32], strides = [1, 1]} : vector<8x128xf32> to vector<8x32xf32>
      %33 = vector.extract_strided_slice %24 {offsets = [0, 64], sizes = [8, 32], strides = [1, 1]} : vector<8x128xf32> to vector<8x32xf32>
      %34 = math.tanh %33 : vector<8x32xf32>
      %35 = arith.mulf %31, %arg11 : vector<8x32xf32>
      %36 = arith.mulf %30, %34 : vector<8x32xf32>
      %37 = arith.addf %35, %36 : vector<8x32xf32>
      %38 = math.tanh %37 : vector<8x32xf32>
      %39 = arith.mulf %32, %38 : vector<8x32xf32>
      %40 = arith.index_cast %20 : i32 to index
      %c0_24 = arith.constant 0 : index
      %41 = vector.load %arg8[%40, %c0_24] : memref<1240x32xf32, #tpu.memory_space<vmem>>, vector<8x32xf32>
      tpu.vector_store %arg8[%40, %c0_24], %39 {strides = array<i32>} : memref<1240x32xf32, #tpu.memory_space<vmem>>, vector<8x32xf32>,
      scf.yield %39, %37 : vector<8x32xf32>, vector<8x32xf32>
    }
    %c155_i32_11 = arith.constant 155 : i32
    %c0_12 = arith.constant 0 : index
    %c0_13 = arith.constant 0 : index
    %12 = vector.load %arg8[%c0_12, %c0_13] : memref<1240x32xf32, #tpu.memory_space<vmem>>, vector<1240x32xf32>
    %c0_14 = arith.constant 0 : index
    %c0_15 = arith.constant 0 : index
    %13 = vector.load %arg4[%c0_14, %c0_15] : memref<32x8xf32, #tpu.memory_space<vmem>>, vector<32x8xf32>
    %cst_16 = arith.constant dense<0.000000e+00> : vector<1240x8xf32>
    %14 = tpu.matmul %12, %13, %cst_16 {dimension_numbers = #tpu.dot_dimension_numbers<[1], [0], [0], [1], [0, 0, 1, 1], [], []>} : vector<1240x32xf32>, vector<32x8xf32>, vector<1240x8xf32> -> vector<1240x8xf32>
    %c0_17 = arith.constant 0 : index
    %c0_18 = arith.constant 0 : index
    %15 = vector.load %arg5[%c0_17, %c0_18] : memref<1x8xf32, #tpu.memory_space<vmem>>, vector<1x8xf32>
    %16 = vector.broadcast %15 : vector<1x8xf32> to vector<1240x8xf32>
    %17 = arith.addf %14, %16 : vector<1240x8xf32>
    %c0_19 = arith.constant 0 : index
    %c0_20 = arith.constant 0 : index
    %18 = vector.load %arg6[%c0_19, %c0_20] : memref<1240x8xf32, #tpu.memory_space<vmem>>, vector<1240x8xf32>
    tpu.vector_store %arg6[%c0_19, %c0_20], %17 {strides = array<i32>} : memref<1240x8xf32, #tpu.memory_space<vmem>>, vector<1240x8xf32>,
    return
  }
}

module attributes {stable_mosaic.version = 11 : i64} {
  func.func @log_softmax_seq_kernel(%arg0: memref<155x64xf32, #tpu.memory_space<vmem>>, %arg1: memref<155x64xf32, #tpu.memory_space<vmem>>) attributes {dimension_semantics = [], scalar_prefetch = 0 : i64, scratch_operands = 0 : i64, tpu.core_type = #tpu.core_type<tc>} {
    %c0 = arith.constant 0 : index
    %c0_0 = arith.constant 0 : index
    %0 = vector.load %arg0[%c0, %c0_0] : memref<155x64xf32, #tpu.memory_space<vmem>>, vector<155x64xf32>
    %cst = arith.constant dense<0xFF800000> : vector<64xf32>
    %1 = vector.multi_reduction <maximumf>, %0, %cst [0] : vector<155x64xf32> to vector<64xf32>
    %2 = vector.shape_cast %1 : vector<64xf32> to vector<1x64xf32>
    %3 = vector.broadcast %2 : vector<1x64xf32> to vector<155x64xf32>
    %4 = arith.subf %0, %3 : vector<155x64xf32>
    %5 = math.exp %4 : vector<155x64xf32>
    %cst_1 = arith.constant dense<0.000000e+00> : vector<64xf32>
    %6 = vector.multi_reduction <add>, %5, %cst_1 [0] : vector<155x64xf32> to vector<64xf32>
    %7 = vector.shape_cast %6 : vector<64xf32> to vector<1x64xf32>
    %8 = math.log %7 : vector<1x64xf32>
    %9 = vector.broadcast %8 : vector<1x64xf32> to vector<155x64xf32>
    %10 = arith.subf %4, %9 : vector<155x64xf32>
    %c0_2 = arith.constant 0 : index
    %c0_3 = arith.constant 0 : index
    %11 = vector.load %arg1[%c0_2, %c0_3] : memref<155x64xf32, #tpu.memory_space<vmem>>, vector<155x64xf32>
    tpu.vector_store %arg1[%c0_2, %c0_3], %10 {strides = array<i32>} : memref<155x64xf32, #tpu.memory_space<vmem>>, vector<155x64xf32>,
    return
  }
}

</mosaic_0001>

<llo_original>
// kernel: lstm_tagger_forward.3
$region0: #{lstm_tagger_forward.3}
  #allocation0 [shape = 'u32[]', space=smem, size = 0x4, offset = 0x4, fixed_abs, tag = 'smem constant byte address 0x4 - core index']
  #allocation1 [shape = 'u32[144,128]{1,0:T(1,128)}', space=vmem, size = 0x12000, scoped, tag = 'internal scratch']
  %s0 = inlined_call_operand.vmem [shape: f32[155,64], index: 0, kind: input, shape index: {}]
  %s1 = inlined_call_operand.vmem [shape: f32[155,64], index: 1, kind: output, shape index: {}]
  %s2 = sld [smem:[#allocation0]]
  $region14: #{lstm_tagger_forward.3} parent=0
    _
  %s4 = ssub.s32 1, %s2
  %s5 = scalar_select 0, %s4, %s2
  // Predicated region
  $region2: #{lstm_tagger_forward.3} parent=0 // pred_check
    _
  $region3: #{lstm_tagger_forward.3} parent=0 // pred_check_branch
    %7 = sbr.rel (0) target = $region5
  $region4: #{lstm_tagger_forward.3} parent=0 // pred_region
    _
  $region5: #{lstm_tagger_forward.3} parent=0 // pred_fallthru
    _
  %v8 = vld [vmem:[%s0] sm:$0xff]
  %v9 = vld [vmem:[%s0 + $0x8] sm:$0xff]
  %v10 = vld [vmem:[%s0 + $0x10] sm:$0xff]
  %v11 = vld [vmem:[%s0 + $0x18] sm:$0xff]
  %v12 = vld [vmem:[%s0 + $0x20] sm:$0xff]
  %v13 = vld [vmem:[%s0 + $0x28] sm:$0xff]
  %v14 = vld [vmem:[%s0 + $0x30] sm:$0xff]
  %v15 = vld [vmem:[%s0 + $0x38] sm:$0xff]
  %v16 = vld [vmem:[%s0 + $0x40] sm:$0xff]
  %v17 = vld [vmem:[%s0 + $0x48] sm:$0xff]
  %v18 = vld [vmem:[%s0 + $0x50] sm:$0xff]
  %v19 = vld [vmem:[%s0 + $0x58] sm:$0xff]
  %v20 = vld [vmem:[%s0 + $0x60] sm:$0xff]
  %v21 = vld [vmem:[%s0 + $0x68] sm:$0xff]
  %v22 = vld [vmem:[%s0 + $0x70] sm:$0xff]
  %v23 = vld [vmem:[%s0 + $0x78] sm:$0xff]
  %v24 = vld [vmem:[%s0 + $0x80] sm:$0xff]
  %v25 = vld [vmem:[%s0 + $0x88] sm:$0xff]
  %v26 = vld [vmem:[%s0 + $0x90] sm:$0xff]
  %v27 = vld [vmem:[%s0 + $0x98] sm:$0x7]
  %vm28 = vcmask 523264
  %v29 = vsel %vm28, %v8, -inf
  %v30 = vsel %vm28, %v9, -inf
  %v31 = vsel %vm28, %v10, -inf
  %v32 = vsel %vm28, %v11, -inf
  %v33 = vsel %vm28, %v12, -inf
  %v34 = vmax.f32 %v29, %v33
  %v35 = vsel %vm28, %v13, -inf
  %v36 = vmax.f32 %v30, %v35
  %v37 = vsel %vm28, %v14, -inf
  %v38 = vmax.f32 %v31, %v37
  %v39 = vsel %vm28, %v15, -inf
  %v40 = vmax.f32 %v32, %v39
  %v41 = vsel %vm28, %v16, -inf
  %v42 = vmax.f32 %v34, %v41
  %v43 = vsel %vm28, %v17, -inf
  %v44 = vmax.f32 %v36, %v43
  %v45 = vsel %vm28, %v18, -inf
  %v46 = vmax.f32 %v38, %v45
  %v47 = vsel %vm28, %v19, -inf
  %v48 = vmax.f32 %v40, %v47
  %v49 = vsel %vm28, %v20, -inf
  %v50 = vmax.f32 %v42, %v49
  %v51 = vsel %vm28, %v21, -inf
  %v52 = vmax.f32 %v44, %v51
  %v53 = vsel %vm28, %v22, -inf
  %v54 = vmax.f32 %v46, %v53
  %v55 = vsel %vm28, %v23, -inf
  %v56 = vmax.f32 %v48, %v55
  %v57 = vsel %vm28, %v24, -inf
  %v58 = vmax.f32 %v50, %v57
  %v59 = vsel %vm28, %v25, -inf
  %v60 = vmax.f32 %v52, %v59
  %v61 = vsel %vm28, %v26, -inf
  %v62 = vmax.f32 %v54, %v61
  %vm63 = vcmask 518144
  %v64 = vsel %vm63, %v27, -inf
  %v65 = vmax.f32 %v56, %v64
  %v66 = vmax.f32 %v58, %v60
  %v67 = vmax.f32 %v62, %v65
  %v68 = vmax.f32 %v66, %v67
  %v69 = vrot.slane %v68, 4
  %v70 = vmax.f32 %v68, %v69
  %v71 = vrot.slane %v70, 2
  %v72 = vmax.f32 %v70, %v71
  %v73 = vrot.slane %v72, 1
  %v74 = vmax.f32 %v72, %v73
  %v75 = vsub.f32 %v8, %v74
  %v76 = vsub.f32 %v9, %v74
  %v77 = vsub.f32 %v10, %v74
  %v78 = vsub.f32 %v11, %v74
  %v79 = vsub.f32 %v12, %v74
  %v80 = vsub.f32 %v13, %v74
  %v81 = vsub.f32 %v14, %v74
  %v82 = vsub.f32 %v15, %v74
  %v83 = vsub.f32 %v16, %v74
  %v84 = vsub.f32 %v17, %v74
  %v85 = vsub.f32 %v18, %v74
  %v86 = vsub.f32 %v19, %v74
  %v87 = vsub.f32 %v20, %v74
  %v88 = vsub.f32 %v21, %v74
  %v89 = vsub.f32 %v22, %v74
  %v90 = vsub.f32 %v23, %v74
  %v91 = vsub.f32 %v24, %v74
  %v92 = vsub.f32 %v25, %v74
  %v93 = vsub.f32 %v26, %v74
  %v94 = vsub.f32 %v27, %v74
  %v95 = vmul.f32 %v75, 1.442695
  %v96 = vpow.pop %v95
  %v97 = vmul.f32 %v76, 1.442695
  %v98 = vpow.pop %v97
  %v99 = vmul.f32 %v77, 1.442695
  %v100 = vpow.pop %v99
  %v101 = vmul.f32 %v78, 1.442695
  %v102 = vpow.pop %v101
  %v103 = vmul.f32 %v79, 1.442695
  %v104 = vpow.pop %v103
  %v105 = vmul.f32 %v80, 1.442695
  %v106 = vpow.pop %v105
  %v107 = vmul.f32 %v81, 1.442695
  %v108 = vpow.pop %v107
  %v109 = vmul.f32 %v82, 1.442695
  %v110 = vpow.pop %v109
  %v111 = vmul.f32 %v83, 1.442695
  %v112 = vpow.pop %v111
  %v113 = vmul.f32 %v84, 1.442695
  %v114 = vpow.pop %v113
  %v115 = vmul.f32 %v85, 1.442695
  %v116 = vpow.pop %v115
  %v117 = vmul.f32 %v86, 1.442695
  %v118 = vpow.pop %v117
  %v119 = vmul.f32 %v87, 1.442695
  %v120 = vpow.pop %v119
  %v121 = vmul.f32 %v88, 1.442695
  %v122 = vpow.pop %v121
  %v123 = vmul.f32 %v89, 1.442695
  %v124 = vpow.pop %v123
  %v125 = vmul.f32 %v90, 1.442695
  %v126 = vpow.pop %v125
  %v127 = vmul.f32 %v91, 1.442695
  %v128 = vpow.pop %v127
  %v129 = vmul.f32 %v92, 1.442695
  %v130 = vpow.pop %v129
  %v131 = vmul.f32 %v93, 1.442695
  %v132 = vpow.pop %v131
  %v133 = vmul.f32 %v94, 1.442695
  %v134 = vpow.pop %v133
  %v135 = vsel %vm28, %v96, 0.0
  %v136 = vsel %vm28, %v98, 0.0
  %v137 = vadd.f32 %v135, %v136
  %v138 = vsel %vm28, %v100, 0.0
  %v139 = vadd.f32 %v137, %v138
  %v140 = vsel %vm28, %v102, 0.0
  %v141 = vadd.f32 %v139, %v140
  %v142 = vsel %vm28, %v104, 0.0
  %v143 = vadd.f32 %v141, %v142
  %v144 = vsel %vm28, %v106, 0.0
  %v145 = vadd.f32 %v143, %v144
  %v146 = vsel %vm28, %v108, 0.0
  %v147 = vadd.f32 %v145, %v146
  %v148 = vsel %vm28, %v110, 0.0
  %v149 = vadd.f32 %v147, %v148
  %v150 = vsel %vm28, %v112, 0.0
  %v151 = vadd.f32 %v149, %v150
  %v152 = vsel %vm28, %v114, 0.0
  %v153 = vadd.f32 %v151, %v152
  %v154 = vsel %vm28, %v116, 0.0
  %v155 = vadd.f32 %v153, %v154
  %v156 = vsel %vm28, %v118, 0.0
  %v157 = vadd.f32 %v155, %v156
  %v158 = vsel %vm28, %v120, 0.0
  %v159 = vadd.f32 %v157, %v158
  %v160 = vsel %vm28, %v122, 0.0
  %v161 = vadd.f32 %v159, %v160
  %v162 = vsel %vm28, %v124, 0.0
  %v163 = vadd.f32 %v161, %v162
  %v164 = vsel %vm28, %v126, 0.0
  %v165 = vadd.f32 %v163, %v164
  %v166 = vsel %vm28, %v128, 0.0
  %v167 = vadd.f32 %v165, %v166
  %v168 = vsel %vm28, %v130, 0.0
  %v169 = vadd.f32 %v167, %v168
  %v170 = vsel %vm28, %v132, 0.0
  %v171 = vadd.f32 %v169, %v170
  %v172 = vsel %vm63, %v134, 0.0
  %v173 = vadd.f32 %v171, %v172
  %v174 = vrot.slane %v173, 4
  %v175 = vadd.f32 %v173, %v174
  %v176 = vrot.slane %v175, 2
  %v177 = vadd.f32 %v175, %v176
  %v178 = vrot.slane %v177, 1
  %v179 = vadd.f32 %v177, %v178
  %v180 = vlog2.pop %v179
  %v181 = vmul.f32 %v180, 0.6931472
  %v182 = vsub.f32 %v75, %v181
  %v183 = vsub.f32 %v76, %v181
  %v184 = vsub.f32 %v77, %v181
  %v185 = vsub.f32 %v78, %v181
  %v186 = vsub.f32 %v79, %v181
  %v187 = vsub.f32 %v80, %v181
  %v188 = vsub.f32 %v81, %v181
  %v189 = vsub.f32 %v82, %v181
  %v190 = vsub.f32 %v83, %v181
  %v191 = vsub.f32 %v84, %v181
  %v192 = vsub.f32 %v85, %v181
  %v193 = vsub.f32 %v86, %v181
  %v194 = vsub.f32 %v87, %v181
  %v195 = vsub.f32 %v88, %v181
  %v196 = vsub.f32 %v89, %v181
  %v197 = vsub.f32 %v90, %v181
  %v198 = vsub.f32 %v91, %v181
  %v199 = vsub.f32 %v92, %v181
  %v200 = vsub.f32 %v93, %v181
  %v201 = vsub.f32 %v94, %v181
  %202 = vst.msk [vmem:[%s1] sm:$0xff] %vm28, %v182
  %203 = vst.msk [vmem:[%s1 + $0x8] sm:$0xff] %vm28, %v183
  %204 = vst.msk [vmem:[%s1 + $0x10] sm:$0xff] %vm28, %v184
  %205 = vst.msk [vmem:[%s1 + $0x18] sm:$0xff] %vm28, %v185
  %206 = vst.msk [vmem:[%s1 + $0x20] sm:$0xff] %vm28, %v186
  %207 = vst.msk [vmem:[%s1 + $0x28] sm:$0xff] %vm28, %v187
  %208 = vst.msk [vmem:[%s1 + $0x30] sm:$0xff] %vm28, %v188
  %209 = vst.msk [vmem:[%s1 + $0x38] sm:$0xff] %vm28, %v189
  %210 = vst.msk [vmem:[%s1 + $0x40] sm:$0xff] %vm28, %v190
  %211 = vst.msk [vmem:[%s1 + $0x48] sm:$0xff] %vm28, %v191
  %212 = vst.msk [vmem:[%s1 + $0x50] sm:$0xff] %vm28, %v192
  %213 = vst.msk [vmem:[%s1 + $0x58] sm:$0xff] %vm28, %v193
  %214 = vst.msk [vmem:[%s1 + $0x60] sm:$0xff] %vm28, %v194
  %215 = vst.msk [vmem:[%s1 + $0x68] sm:$0xff] %vm28, %v195
  %216 = vst.msk [vmem:[%s1 + $0x70] sm:$0xff] %vm28, %v196
  %217 = vst.msk [vmem:[%s1 + $0x78] sm:$0xff] %vm28, %v197
  %218 = vst.msk [vmem:[%s1 + $0x80] sm:$0xff] %vm28, %v198
  %219 = vst.msk [vmem:[%s1 + $0x88] sm:$0xff] %vm28, %v199
  %220 = vst.msk [vmem:[%s1 + $0x90] sm:$0xff] %vm28, %v200
  %221 = vst.msk [vmem:[%s1 + $0x98] sm:$0x7] %vm63, %v201
  // Predicated region
  $region6: #{lstm_tagger_forward.3} parent=0 // pred_check
    _
  $region7: #{lstm_tagger_forward.3} parent=0 // pred_check_branch
    %223 = sbr.rel (0) target = $region9
  $region8: #{lstm_tagger_forward.3} parent=0 // pred_region
    _
  $region9: #{lstm_tagger_forward.3} parent=0 // pred_fallthru
    _
  // Predicated region
  $region10: #{lstm_tagger_forward.3} parent=0 // pred_check
    _
  $region11: #{lstm_tagger_forward.3} parent=0 // pred_check_branch
    %225 = sbr.rel (0) target = $region13
  $region12: #{lstm_tagger_forward.3} parent=0 // pred_region
    _
  $region13: #{lstm_tagger_forward.3} parent=0 // pred_fallthru
    _

// kernel: lstm_tagger_forward.2
$region0: #{lstm_tagger_forward.2}
  #allocation0 [shape = 'u32[]', space=smem, size = 0x4, offset = 0x4, fixed_abs, tag = 'smem constant byte address 0x4 - core index']
  #allocation1 [shape = 'u32[144,128]{1,0:T(1,128)}', space=vmem, size = 0x12000, scoped, tag = 'internal scratch']
  #allocation2 [shape = 'f32[1240,128]{1,0:T(8,128)}', space=vmem, size = 0x9b000, scoped, tag = 'scratch operand']
  #allocation3 [shape = 'f32[1240,32]{1,0:T(8,128)}', space=vmem, size = 0x9b000, scoped, tag = 'scratch operand']
  %s0 = inlined_call_operand.vmem [shape: f32[1240,16], index: 0, kind: input, shape index: {}]
  %s1 = inlined_call_operand.vmem [shape: f32[16,128], index: 1, kind: input, shape index: {}]
  %s2 = inlined_call_operand.vmem [shape: f32[32,128], index: 2, kind: input, shape index: {}]
  %s3 = inlined_call_operand.vmem [shape: f32[1,128], index: 3, kind: input, shape index: {}]
  %s4 = inlined_call_operand.vmem [shape: f32[32,8], index: 4, kind: input, shape index: {}]
  %s5 = inlined_call_operand.vmem [shape: f32[1,8], index: 5, kind: input, shape index: {}]
  %s6 = inlined_call_operand.vmem [shape: f32[1240,8], index: 6, kind: output, shape index: {}]
  %s7 = sld [smem:[#allocation0]]
  $region41: #{lstm_tagger_forward.2} parent=0
    _
  %s9 = ssub.s32 1, %s7
  %s10 = scalar_select 0, %s9, %s7
  // Predicated region
  $region2: #{lstm_tagger_forward.2} parent=0 // pred_check
    _
  $region3: #{lstm_tagger_forward.2} parent=0 // pred_check_branch
    %12 = sbr.rel (0) target = $region5
  $region4: #{lstm_tagger_forward.2} parent=0 // pred_region
    _
  $region5: #{lstm_tagger_forward.2} parent=0 // pred_fallthru
    _
  // Predicated region
  $region6: #{lstm_tagger_forward.2} parent=0 // pred_check
    _
  $region7: #{lstm_tagger_forward.2} parent=0 // pred_check_branch
    %14 = sbr.rel (0) target = $region9
  $region8: #{lstm_tagger_forward.2} parent=0 // pred_region
    _
  $region9: #{lstm_tagger_forward.2} parent=0 // pred_fallthru
    _
  // Predicated region
  $region10: #{lstm_tagger_forward.2} parent=0 // pred_check
    _
  $region11: #{lstm_tagger_forward.2} parent=0 // pred_check_branch
    %16 = sbr.rel (0) target = $region13
  $region12: #{lstm_tagger_forward.2} parent=0 // pred_region
    _
  $region13: #{lstm_tagger_forward.2} parent=0 // pred_fallthru
    _
  // Predicated region
  $region14: #{lstm_tagger_forward.2} parent=0 // pred_check
    _
  $region15: #{lstm_tagger_forward.2} parent=0 // pred_check_branch
    %18 = sbr.rel (0) target = $region17
  $region16: #{lstm_tagger_forward.2} parent=0 // pred_region
    _
  $region17: #{lstm_tagger_forward.2} parent=0 // pred_fallthru
    _
  // Predicated region
  $region18: #{lstm_tagger_forward.2} parent=0 // pred_check
    _
  $region19: #{lstm_tagger_forward.2} parent=0 // pred_check_branch
    %20 = sbr.rel (0) target = $region21
  $region20: #{lstm_tagger_forward.2} parent=0 // pred_region
    _
  $region21: #{lstm_tagger_forward.2} parent=0 // pred_fallthru
    _
  // Predicated region
  $region22: #{lstm_tagger_forward.2} parent=0 // pred_check
    _
  $region23: #{lstm_tagger_forward.2} parent=0 // pred_check_branch
    %22 = sbr.rel (0) target = $region25
  $region24: #{lstm_tagger_forward.2} parent=0 // pred_region
    _
  $region25: #{lstm_tagger_forward.2} parent=0 // pred_fallthru
    _
  %v23 = vld [vmem:[%s0] sm:$0xff]
  %v24 = vld [vmem:[%s0 + $0x8] sm:$0xff]
  %v25 = vld [vmem:[%s0 + $0x10] sm:$0xff]
  %v26 = vld [vmem:[%s0 + $0x18] sm:$0xff]
  %v27 = vld [vmem:[%s0 + $0x20] sm:$0xff]
  %v28 = vld [vmem:[%s0 + $0x28] sm:$0xff]
  %v29 = vld [vmem:[%s0 + $0x30] sm:$0xff]
  %v30 = vld [vmem:[%s0 + $0x38] sm:$0xff]
  %v31 = vld [vmem:[%s0 + $0x40] sm:$0xff]
  %v32 = vld [vmem:[%s0 + $0x48] sm:$0xff]
  %v33 = vld [vmem:[%s0 + $0x50] sm:$0xff]
  %v34 = vld [vmem:[%s0 + $0x58] sm:$0xff]
  %v35 = vld [vmem:[%s0 + $0x60] sm:$0xff]
  %v36 = vld [vmem:[%s0 + $0x68] sm:$0xff]
  %v37 = vld [vmem:[%s0 + $0x70] sm:$0xff]
  %v38 = vld [vmem:[%s0 + $0x78] sm:$0xff]
  %v39 = vld [vmem:[%s0 + $0x80] sm:$0xff]
  %v40 = vld [vmem:[%s0 + $0x88] sm:$0xff]
  %v41 = vld [vmem:[%s0 + $0x90] sm:$0xff]
  %v42 = vld [vmem:[%s0 + $0x98] sm:$0xff]
  %v43 = vld [vmem:[%s0 + $0xa0] sm:$0xff]
  %v44 = vld [vmem:[%s0 + $0xa8] sm:$0xff]
  %v45 = vld [vmem:[%s0 + $0xb0] sm:$0xff]
  %v46 = vld [vmem:[%s0 + $0xb8] sm:$0xff]
  %v47 = vld [vmem:[%s0 + $0xc0] sm:$0xff]
  %v48 = vld [vmem:[%s0 + $0xc8] sm:$0xff]
  %v49 = vld [vmem:[%s0 + $0xd0] sm:$0xff]
  %v50 = vld [vmem:[%s0 + $0xd8] sm:$0xff]
  %v51 = vld [vmem:[%s0 + $0xe0] sm:$0xff]
  %v52 = vld [vmem:[%s0 + $0xe8] sm:$0xff]
  %v53 = vld [vmem:[%s0 + $0xf0] sm:$0xff]
  %v54 = vld [vmem:[%s0 + $0xf8] sm:$0xff]
  %v55 = vld [vmem:[%s0 + $0x100] sm:$0xff]
  %v56 = vld [vmem:[%s0 + $0x108] sm:$0xff]
  %v57 = vld [vmem:[%s0 + $0x110] sm:$0xff]
  %v58 = vld [vmem:[%s0 + $0x118] sm:$0xff]
  %v59 = vld [vmem:[%s0 + $0x120] sm:$0xff]
  %v60 = vld [vmem:[%s0 + $0x128] sm:$0xff]
  %v61 = vld [vmem:[%s0 + $0x130] sm:$0xff]
  %v62 = vld [vmem:[%s0 + $0x138] sm:$0xff]
  %v63 = vld [vmem:[%s0 + $0x140] sm:$0xff]
  %v64 = vld [vmem:[%s0 + $0x148] sm:$0xff]
  %v65 = vld [vmem:[%s0 + $0x150] sm:$0xff]
  %v66 = vld [vmem:[%s0 + $0x158] sm:$0xff]
  %v67 = vld [vmem:[%s0 + $0x160] sm:$0xff]
  %v68 = vld [vmem:[%s0 + $0x168] sm:$0xff]
  %v69 = vld [vmem:[%s0 + $0x170] sm:$0xff]
  %v70 = vld [vmem:[%s0 + $0x178] sm:$0xff]
  %v71 = vld [vmem:[%s0 + $0x180] sm:$0xff]
  %v72 = vld [vmem:[%s0 + $0x188] sm:$0xff]
  %v73 = vld [vmem:[%s0 + $0x190] sm:$0xff]
  %v74 = vld [vmem:[%s0 + $0x198] sm:$0xff]
  %v75 = vld [vmem:[%s0 + $0x1a0] sm:$0xff]
  %v76 = vld [vmem:[%s0 + $0x1a8] sm:$0xff]
  %v77 = vld [vmem:[%s0 + $0x1b0] sm:$0xff]
  %v78 = vld [vmem:[%s0 + $0x1b8] sm:$0xff]
  %v79 = vld [vmem:[%s0 + $0x1c0] sm:$0xff]
  %v80 = vld [vmem:[%s0 + $0x1c8] sm:$0xff]
  %v81 = vld [vmem:[%s0 + $0x1d0] sm:$0xff]
  %v82 = vld [vmem:[%s0 + $0x1d8] sm:$0xff]
  %v83 = vld [vmem:[%s0 + $0x1e0] sm:$0xff]
  %v84 = vld [vmem:[%s0 + $0x1e8] sm:$0xff]
  %v85 = vld [vmem:[%s0 + $0x1f0] sm:$0xff]
  %v86 = vld [vmem:[%s0 + $0x1f8] sm:$0xff]
  %v87 = vld [vmem:[%s0 + $0x200] sm:$0xff]
  %v88 = vld [vmem:[%s0 + $0x208] sm:$0xff]
  %v89 = vld [vmem:[%s0 + $0x210] sm:$0xff]
  %v90 = vld [vmem:[%s0 + $0x218] sm:$0xff]
  %v91 = vld [vmem:[%s0 + $0x220] sm:$0xff]
  %v92 = vld [vmem:[%s0 + $0x228] sm:$0xff]
  %v93 = vld [vmem:[%s0 + $0x230] sm:$0xff]
  %v94 = vld [vmem:[%s0 + $0x238] sm:$0xff]
  %v95 = vld [vmem:[%s0 + $0x240] sm:$0xff]
  %v96 = vld [vmem:[%s0 + $0x248] sm:$0xff]
  %v97 = vld [vmem:[%s0 + $0x250] sm:$0xff]
  %v98 = vld [vmem:[%s0 + $0x258] sm:$0xff]
  %v99 = vld [vmem:[%s0 + $0x260] sm:$0xff]
  %v100 = vld [vmem:[%s0 + $0x268] sm:$0xff]
  %v101 = vld [vmem:[%s0 + $0x270] sm:$0xff]
  %v102 = vld [vmem:[%s0 + $0x278] sm:$0xff]
  %v103 = vld [vmem:[%s0 + $0x280] sm:$0xff]
  %v104 = vld [vmem:[%s0 + $0x288] sm:$0xff]
  %v105 = vld [vmem:[%s0 + $0x290] sm:$0xff]
  %v106 = vld [vmem:[%s0 + $0x298] sm:$0xff]
  %v107 = vld [vmem:[%s0 + $0x2a0] sm:$0xff]
  %v108 = vld [vmem:[%s0 + $0x2a8] sm:$0xff]
  %v109 = vld [vmem:[%s0 + $0x2b0] sm:$0xff]
  %v110 = vld [vmem:[%s0 + $0x2b8] sm:$0xff]
  %v111 = vld [vmem:[%s0 + $0x2c0] sm:$0xff]
  %v112 = vld [vmem:[%s0 + $0x2c8] sm:$0xff]
  %v113 = vld [vmem:[%s0 + $0x2d0] sm:$0xff]
  %v114 = vld [vmem:[%s0 + $0x2d8] sm:$0xff]
  %v115 = vld [vmem:[%s0 + $0x2e0] sm:$0xff]
  %v116 = vld [vmem:[%s0 + $0x2e8] sm:$0xff]
  %v117 = vld [vmem:[%s0 + $0x2f0] sm:$0xff]
  %v118 = vld [vmem:[%s0 + $0x2f8] sm:$0xff]
  %v119 = vld [vmem:[%s0 + $0x300] sm:$0xff]
  %v120 = vld [vmem:[%s0 + $0x308] sm:$0xff]
  %v121 = vld [vmem:[%s0 + $0x310] sm:$0xff]
  %v122 = vld [vmem:[%s0 + $0x318] sm:$0xff]
  %v123 = vld [vmem:[%s0 + $0x320] sm:$0xff]
  %v124 = vld [vmem:[%s0 + $0x328] sm:$0xff]
  %v125 = vld [vmem:[%s0 + $0x330] sm:$0xff]
  %v126 = vld [vmem:[%s0 + $0x338] sm:$0xff]
  %v127 = vld [vmem:[%s0 + $0x340] sm:$0xff]
  %v128 = vld [vmem:[%s0 + $0x348] sm:$0xff]
  %v129 = vld [vmem:[%s0 + $0x350] sm:$0xff]
  %v130 = vld [vmem:[%s0 + $0x358] sm:$0xff]
  %v131 = vld [vmem:[%s0 + $0x360] sm:$0xff]
  %v132 = vld [vmem:[%s0 + $0x368] sm:$0xff]
  %v133 = vld [vmem:[%s0 + $0x370] sm:$0xff]
  %v134 = vld [vmem:[%s0 + $0x378] sm:$0xff]
  %v135 = vld [vmem:[%s0 + $0x380] sm:$0xff]
  %v136 = vld [vmem:[%s0 + $0x388] sm:$0xff]
  %v137 = vld [vmem:[%s0 + $0x390] sm:$0xff]
  %v138 = vld [vmem:[%s0 + $0x398] sm:$0xff]
  %v139 = vld [vmem:[%s0 + $0x3a0] sm:$0xff]
  %v140 = vld [vmem:[%s0 + $0x3a8] sm:$0xff]
  %v141 = vld [vmem:[%s0 + $0x3b0] sm:$0xff]
  %v142 = vld [vmem:[%s0 + $0x3b8] sm:$0xff]
  %v143 = vld [vmem:[%s0 + $0x3c0] sm:$0xff]
  %v144 = vld [vmem:[%s0 + $0x3c8] sm:$0xff]
  %v145 = vld [vmem:[%s0 + $0x3d0] sm:$0xff]
  %v146 = vld [vmem:[%s0 + $0x3d8] sm:$0xff]
  %v147 = vld [vmem:[%s0 + $0x3e0] sm:$0xff]
  %v148 = vld [vmem:[%s0 + $0x3e8] sm:$0xff]
  %v149 = vld [vmem:[%s0 + $0x3f0] sm:$0xff]
  %v150 = vld [vmem:[%s0 + $0x3f8] sm:$0xff]
  %v151 = vld [vmem:[%s0 + $0x400] sm:$0xff]
  %v152 = vld [vmem:[%s0 + $0x408] sm:$0xff]
  %v153 = vld [vmem:[%s0 + $0x410] sm:$0xff]
  %v154 = vld [vmem:[%s0 + $0x418] sm:$0xff]
  %v155 = vld [vmem:[%s0 + $0x420] sm:$0xff]
  %v156 = vld [vmem:[%s0 + $0x428] sm:$0xff]
  %v157 = vld [vmem:[%s0 + $0x430] sm:$0xff]
  %v158 = vld [vmem:[%s0 + $0x438] sm:$0xff]
  %v159 = vld [vmem:[%s0 + $0x440] sm:$0xff]
  %v160 = vld [vmem:[%s0 + $0x448] sm:$0xff]
  %v161 = vld [vmem:[%s0 + $0x450] sm:$0xff]
  %v162 = vld [vmem:[%s0 + $0x458] sm:$0xff]
  %v163 = vld [vmem:[%s0 + $0x460] sm:$0xff]
  %v164 = vld [vmem:[%s0 + $0x468] sm:$0xff]
  %v165 = vld [vmem:[%s0 + $0x470] sm:$0xff]
  %v166 = vld [vmem:[%s0 + $0x478] sm:$0xff]
  %v167 = vld [vmem:[%s0 + $0x480] sm:$0xff]
  %v168 = vld [vmem:[%s0 + $0x488] sm:$0xff]
  %v169 = vld [vmem:[%s0 + $0x490] sm:$0xff]
  %v170 = vld [vmem:[%s0 + $0x498] sm:$0xff]
  %v171 = vld [vmem:[%s0 + $0x4a0] sm:$0xff]
  %v172 = vld [vmem:[%s0 + $0x4a8] sm:$0xff]
  %v173 = vld [vmem:[%s0 + $0x4b0] sm:$0xff]
  %v174 = vld [vmem:[%s0 + $0x4b8] sm:$0xff]
  %v175 = vld [vmem:[%s0 + $0x4c0] sm:$0xff]
  %v176 = vld [vmem:[%s0 + $0x4c8] sm:$0xff]
  %v177 = vld [vmem:[%s0 + $0x4d0] sm:$0xff]
  %v178 = vld [vmem:[%s1] sm:$0xff]
  %v179 = vld [vmem:[%s1 + $0x8] sm:$0xff]
  %v180 = vld [vmem:[%s3] sm:$0x1]
  %v182 = vlaneseq
  %v183 = vshrl.u32 %v182, 7
  %v184 = vsub.s32 0, %v183
  %v185 = vrot.slane %v180, %v184
  %vm187 = vcmask 130048
  %v189 = vsel %vm187, %v23, 0
  %v192 = vsel %vm187, %v24, 0
  %v195 = vsel %vm187, %v25, 0
  %v198 = vsel %vm187, %v26, 0
  %v201 = vsel %vm187, %v27, 0
  %v204 = vsel %vm187, %v28, 0
  %v207 = vsel %vm187, %v29, 0
  %v210 = vsel %vm187, %v30, 0
  %v213 = vsel %vm187, %v31, 0
  %v216 = vsel %vm187, %v32, 0
  %v219 = vsel %vm187, %v33, 0
  %v222 = vsel %vm187, %v34, 0
  %v225 = vsel %vm187, %v35, 0
  %v228 = vsel %vm187, %v36, 0
  %v231 = vsel %vm187, %v37, 0
  %v234 = vsel %vm187, %v38, 0
  %v237 = vsel %vm187, %v39, 0
  %v240 = vsel %vm187, %v40, 0
  %v243 = vsel %vm187, %v41, 0
  %v246 = vsel %vm187, %v42, 0
  %v249 = vsel %vm187, %v43, 0
  %v252 = vsel %vm187, %v44, 0
  %v255 = vsel %vm187, %v45, 0
  %v258 = vsel %vm187, %v46, 0
  %v261 = vsel %vm187, %v47, 0
  %v264 = vsel %vm187, %v48, 0
  %v267 = vsel %vm187, %v49, 0
  %v270 = vsel %vm187, %v50, 0
  %v273 = vsel %vm187, %v51, 0
  %v276 = vsel %vm187, %v52, 0
  %v279 = vsel %vm187, %v53, 0
  %v282 = vsel %vm187, %v54, 0
  %v285 = vsel %vm187, %v55, 0
  %v288 = vsel %vm187, %v56, 0
  %v291 = vsel %vm187, %v57, 0
  %v294 = vsel %vm187, %v58, 0
  %v297 = vsel %vm187, %v59, 0
  %v300 = vsel %vm187, %v60, 0
  %v303 = vsel %vm187, %v61, 0
  %v306 = vsel %vm187, %v62, 0
  %v309 = vsel %vm187, %v63, 0
  %v312 = vsel %vm187, %v64, 0
  %v315 = vsel %vm187, %v65, 0
  %v318 = vsel %vm187, %v66, 0
  %v321 = vsel %vm187, %v67, 0
  %v324 = vsel %vm187, %v68, 0
  %v327 = vsel %vm187, %v69, 0
  %v330 = vsel %vm187, %v70, 0
  %v333 = vsel %vm187, %v71, 0
  %v336 = vsel %vm187, %v72, 0
  %v339 = vsel %vm187, %v73, 0
  %v342 = vsel %vm187, %v74, 0
  %v345 = vsel %vm187, %v75, 0
  %v348 = vsel %vm187, %v76, 0
  %v351 = vsel %vm187, %v77, 0
  %v354 = vsel %vm187, %v78, 0
  %v357 = vsel %vm187, %v79, 0
  %v360 = vsel %vm187, %v80, 0
  %v363 = vsel %vm187, %v81, 0
  %v366 = vsel %vm187, %v82, 0
  %v369 = vsel %vm187, %v83, 0
  %v372 = vsel %vm187, %v84, 0
  %v375 = vsel %vm187, %v85, 0
  %v378 = vsel %vm187, %v86, 0
  %v381 = vsel %vm187, %v87, 0
  %v384 = vsel %vm187, %v88, 0
  %v387 = vsel %vm187, %v89, 0
  %v390 = vsel %vm187, %v90, 0
  %v393 = vsel %vm187, %v91, 0
  %v396 = vsel %vm187, %v92, 0
  %v399 = vsel %vm187, %v93, 0
  %v402 = vsel %vm187, %v94, 0
  %v405 = vsel %vm187, %v95, 0
  %v408 = vsel %vm187, %v96, 0
  %v411 = vsel %vm187, %v97, 0
  %v414 = vsel %vm187, %v98, 0
  %v417 = vsel %vm187, %v99, 0
  %v420 = vsel %vm187, %v100, 0
  %v423 = vsel %vm187, %v101, 0
  %v426 = vsel %vm187, %v102, 0
  %v429 = vsel %vm187, %v103, 0
  %v432 = vsel %vm187, %v104, 0
  %v435 = vsel %vm187, %v105, 0
  %v438 = vsel %vm187, %v106, 0
  %v441 = vsel %vm187, %v107, 0
  %v444 = vsel %vm187, %v108, 0
  %v447 = vsel %vm187, %v109, 0
  %v450 = vsel %vm187, %v110, 0
  %v453 = vsel %vm187, %v111, 0
  %v456 = vsel %vm187, %v112, 0
  %v459 = vsel %vm187, %v113, 0
  %v462 = vsel %vm187, %v114, 0
  %v465 = vsel %vm187, %v115, 0
  %v468 = vsel %vm187, %v116, 0
  %v471 = vsel %vm187, %v117, 0
  %v474 = vsel %vm187, %v118, 0
  %v477 = vsel %vm187, %v119, 0
  %v480 = vsel %vm187, %v120, 0
  %v483 = vsel %vm187, %v121, 0
  %v486 = vsel %vm187, %v122, 0
  %v489 = vsel %vm187, %v123, 0
  %v492 = vsel %vm187, %v124, 0
  %v495 = vsel %vm187, %v125, 0
  %v498 = vsel %vm187, %v126, 0
  %v501 = vsel %vm187, %v127, 0
  %v504 = vsel %vm187, %v128, 0
  %v507 = vsel %vm187, %v129, 0
  %v510 = vsel %vm187, %v130, 0
  %v513 = vsel %vm187, %v131, 0
  %v516 = vsel %vm187, %v132, 0
  %v519 = vsel %vm187, %v133, 0
  %v522 = vsel %vm187, %v134, 0
  %v525 = vsel %vm187, %v135, 0
  %v528 = vsel %vm187, %v136, 0
  %v531 = vsel %vm187, %v137, 0
  %v534 = vsel %vm187, %v138, 0
  %v537 = vsel %vm187, %v139, 0
  %v540 = vsel %vm187, %v140, 0
  %v543 = vsel %vm187, %v141, 0
  %v546 = vsel %vm187, %v142, 0
  %v549 = vsel %vm187, %v143, 0
  %v552 = vsel %vm187, %v144, 0
  %v555 = vsel %vm187, %v145, 0
  %v558 = vsel %vm187, %v146, 0
  %v561 = vsel %vm187, %v147, 0
  %v564 = vsel %vm187, %v148, 0
  %v567 = vsel %vm187, %v149, 0
  %v570 = vsel %vm187, %v150, 0
  %v573 = vsel %vm187, %v151, 0
  %v576 = vsel %vm187, %v152, 0
  %v579 = vsel %vm187, %v153, 0
  %v582 = vsel %vm187, %v154, 0
  %v585 = vsel %vm187, %v155, 0
  %v588 = vsel %vm187, %v156, 0
  %v591 = vsel %vm187, %v157, 0
  %v594 = vsel %vm187, %v158, 0
  %v597 = vsel %vm187, %v159, 0
  %v600 = vsel %vm187, %v160, 0
  %v603 = vsel %vm187, %v161, 0
  %v606 = vsel %vm187, %v162, 0
  %v609 = vsel %vm187, %v163, 0
  %v612 = vsel %vm187, %v164, 0
  %v615 = vsel %vm187, %v165, 0
  %v618 = vsel %vm187, %v166, 0
  %v621 = vsel %vm187, %v167, 0
  %v624 = vsel %vm187, %v168, 0
  %v627 = vsel %vm187, %v169, 0
  %v630 = vsel %vm187, %v170, 0
  %v633 = vsel %vm187, %v171, 0
  %v636 = vsel %vm187, %v172, 0
  %v639 = vsel %vm187, %v173, 0
  %v642 = vsel %vm187, %v174, 0
  %v645 = vsel %vm187, %v175, 0
  %v648 = vsel %vm187, %v176, 0
  %v651 = vsel %vm187, %v177, 0
  %653 = vmatprep.subr.mxu0 0.0
  %654 = vmatpush1.msra.mxu0 %v178
  %655 = vmatprep.subr.mxu0 0.0
  %656 = vmatpush1.msra.mxu0 %v179
  %657 = vmatprep.subr.mxu0 0.0
  %658 = vmatpush1.msra.mxu0 0.0
  %659 = vmatprep.subr.mxu0 0.0
  %660 = vmatpush1.msra.mxu0 0.0
  %661 = vmatprep.subr.mxu0 0.0
  %662 = vmatpush1.msra.mxu0 0.0
  %663 = vmatprep.subr.mxu0 0.0
  %664 = vmatpush1.msra.mxu0 0.0
  %665 = vmatprep.subr.mxu0 0.0
  %666 = vmatpush1.msra.mxu0 0.0
  %667 = vmatprep.subr.mxu0 0.0
  %668 = vmatpush1.msra.mxu0 0.0
  %669 = vmatprep.subr.mxu0 0.0
  %670 = vmatpush1.msra.mxu0 0.0
  %671 = vmatprep.subr.mxu0 0.0
  %672 = vmatpush1.msra.mxu0 0.0
  %673 = vmatprep.subr.mxu0 0.0
  %674 = vmatpush1.msra.mxu0 0.0
  %675 = vmatprep.subr.mxu0 0.0
  %676 = vmatpush1.msra.mxu0 0.0
  %677 = vmatprep.subr.mxu0 0.0
  %678 = vmatpush1.msra.mxu0 0.0
  %679 = vmatprep.subr.mxu0 0.0
  %680 = vmatpush1.msra.mxu0 0.0
  %681 = vmatprep.subr.mxu0 0.0
  %682 = vmatpush1.msra.mxu0 0.0
  %683 = vmatprep.subr.mxu0 0.0
  %684 = vmatpush1.msra.mxu0 0.0
  %685 = vmatprep.subr.mxu0 0.0
  %686 = vmatpush1.msra.mxu0 0.0
  %687 = vmatprep.subr.mxu0 0.0
  %688 = vmatpush1.msra.mxu0 0.0
  %689 = vmatprep.subr.mxu0 0.0
  %690 = vmatpush1.msra.mxu0 0.0
  %691 = vmatprep.subr.mxu0 0.0
  %692 = vmatpush1.msra.mxu0 0.0
  %693 = vmatprep.subr.mxu0 0.0
  %694 = vmatpush1.msra.mxu0 0.0
  %695 = vmatprep.subr.mxu0 0.0
  %696 = vmatpush1.msra.mxu0 0.0
  %697 = vmatprep.subr.mxu0 0.0
  %698 = vmatpush1.msra.mxu0 0.0
  %699 = vmatprep.subr.mxu0 0.0
  %700 = vmatpush1.msra.mxu0 0.0
  %701 = vmatprep.subr.mxu0 0.0
  %702 = vmatpush1.msra.mxu0 0.0
  %703 = vmatprep.subr.mxu0 0.0
  %704 = vmatpush1.msra.mxu0 0.0
  %705 = vmatprep.subr.mxu0 0.0
  %706 = vmatpush1.msra.mxu0 0.0
  %707 = vmatprep.subr.mxu0 0.0
  %708 = vmatpush1.msra.mxu0 0.0
  %709 = vmatprep.subr.mxu0 0.0
  %710 = vmatpush1.msra.mxu0 0.0
  %711 = vmatprep.subr.mxu0 0.0
  %712 = vmatpush1.msra.mxu0 0.0
  %713 = vmatprep.subr.mxu0 0.0
  %714 = vmatpush1.msra.mxu0 0.0
  %715 = vmatprep.subr.mxu0 0.0
  %716 = vmatpush1.msra.mxu0 0.0
  %717 = vmatprep.mubr.f32.mxu0 0.0
  %718 = vmatmul.mubr.f32.gmra.mrb[0].mxu0 %v189
  %v719 = vpop.f32.mrb[0].mxu0
  %v720 = vadd.f32 %v185, %v719
  %v721 = vpop.f32.mrb[0].mxu0
  %722 = vmatprep.mubr.f32.mxu0 0.0
  %723 = vmatmul.mubr.f32.gmra.mrb[0].mxu0 %v192
  %v724 = vpop.f32.mrb[0].mxu0
  %v725 = vadd.f32 %v185, %v724
  %v726 = vpop.f32.mrb[0].mxu0
  %727 = vmatprep.mubr.f32.mxu0 0.0
  %728 = vmatmul.mubr.f32.gmra.mrb[0].mxu0 %v195
  %v729 = vpop.f32.mrb[0].mxu0
  %v730 = vadd.f32 %v185, %v729
  %v731 = vpop.f32.mrb[0].mxu0
  %732 = vmatprep.mubr.f32.mxu0 0.0
  %733 = vmatmul.mubr.f32.gmra.mrb[0].mxu0 %v198
  %v734 = vpop.f32.mrb[0].mxu0
  %v735 = vadd.f32 %v185, %v734
  %v736 = vpop.f32.mrb[0].mxu0
  %737 = vmatprep.mubr.f32.mxu0 0.0
  %738 = vmatmul.mubr.f32.gmra.mrb[0].mxu0 %v201
  %v739 = vpop.f32.mrb[0].mxu0
  %v740 = vadd.f32 %v185, %v739
  %v741 = vpop.f32.mrb[0].mxu0
  %742 = vmatprep.mubr.f32.mxu0 0.0
  %743 = vmatmul.mubr.f32.gmra.mrb[0].mxu0 %v204
  %v744 = vpop.f32.mrb[0].mxu0
  %v745 = vadd.f32 %v185, %v744
  %v746 = vpop.f32.mrb[0].mxu0
  %747 = vmatprep.mubr.f32.mxu0 0.0
  %748 = vmatmul.mubr.f32.gmra.mrb[0].mxu0 %v207
  %v749 = vpop.f32.mrb[0].mxu0
  %v750 = vadd.f32 %v185, %v749
  %v751 = vpop.f32.mrb[0].mxu0
  %752 = vmatprep.mubr.f32.mxu0 0.0
  %753 = vmatmul.mubr.f32.gmra.mrb[0].mxu0 %v210
  %v754 = vpop.f32.mrb[0].mxu0
  %v755 = vadd.f32 %v185, %v754
  %v756 = vpop.f32.mrb[0].mxu0
  %757 = vmatprep.mubr.f32.mxu0 0.0
  %758 = vmatmul.mubr.f32.gmra.mrb[0].mxu0 %v213
  %v759 = vpop.f32.mrb[0].mxu0
  %v760 = vadd.f32 %v185, %v759
  %v761 = vpop.f32.mrb[0].mxu0
  %762 = vmatprep.mubr.f32.mxu0 0.0
  %763 = vmatmul.mubr.f32.gmra.mrb[0].mxu0 %v216
  %v764 = vpop.f32.mrb[0].mxu0
  %v765 = vadd.f32 %v185, %v764
  %v766 = vpop.f32.mrb[0].mxu0
  %767 = vmatprep.mubr.f32.mxu0 0.0
  %768 = vmatmul.mubr.f32.gmra.mrb[0].mxu0 %v219
  %v769 = vpop.f32.mrb[0].mxu0
  %v770 = vadd.f32 %v185, %v769
  %v771 = vpop.f32.mrb[0].mxu0
  %772 = vmatprep.mubr.f32.mxu0 0.0
  %773 = vmatmul.mubr.f32.gmra.mrb[0].mxu0 %v222
  %v774 = vpop.f32.mrb[0].mxu0
  %v775 = vadd.f32 %v185, %v774
  %v776 = vpop.f32.mrb[0].mxu0
  %777 = vmatprep.mubr.f32.mxu0 0.0
  %778 = vmatmul.mubr.f32.gmra.mrb[0].mxu0 %v225
  %v779 = vpop.f32.mrb[0].mxu0
  %v780 = vadd.f32 %v185, %v779
  %v781 = vpop.f32.mrb[0].mxu0
  %782 = vmatprep.mubr.f32.mxu0 0.0
  %783 = vmatmul.mubr.f32.gmra.mrb[0].mxu0 %v228
  %v784 = vpop.f32.mrb[0].mxu0
  %v785 = vadd.f32 %v185, %v784
  %v786 = vpop.f32.mrb[0].mxu0
  %787 = vmatprep.mubr.f32.mxu0 0.0
  %788 = vmatmul.mubr.f32.gmra.mrb[0].mxu0 %v231
  %v789 = vpop.f32.mrb[0].mxu0
  %v790 = vadd.f32 %v185, %v789
  %v791 = vpop.f32.mrb[0].mxu0
  %792 = vmatprep.mubr.f32.mxu0 0.0
  %793 = vmatmul.mubr.f32.gmra.mrb[0].mxu0 %v234
  %v794 = vpop.f32.mrb[0].mxu0
  %v795 = vadd.f32 %v185, %v794
  %v796 = vpop.f32.mrb[0].mxu0
  %797 = vmatprep.mubr.f32.mxu0 0.0
  %798 = vmatmul.mubr.f32.gmra.mrb[0].mxu0 %v237
  %v799 = vpop.f32.mrb[0].mxu0
  %v800 = vadd.f32 %v185, %v799
  %v801 = vpop.f32.mrb[0].mxu0
  %802 = vmatprep.mubr.f32.mxu0 0.0
  %803 = vmatmul.mubr.f32.gmra.mrb[0].mxu0 %v240
  %v804 = vpop.f32.mrb[0].mxu0
  %v805 = vadd.f32 %v185, %v804
  %v806 = vpop.f32.mrb[0].mxu0
  %807 = vmatprep.mubr.f32.mxu0 0.0
  %808 = vmatmul.mubr.f32.gmra.mrb[0].mxu0 %v243
  %v809 = vpop.f32.mrb[0].mxu0
  %v810 = vadd.f32 %v185, %v809
  %v811 = vpop.f32.mrb[0].mxu0
  %812 = vmatprep.mubr.f32.mxu0 0.0
  %813 = vmatmul.mubr.f32.gmra.mrb[0].mxu0 %v246
  %v814 = vpop.f32.mrb[0].mxu0
  %v815 = vadd.f32 %v185, %v814
  %v816 = vpop.f32.mrb[0].mxu0
  %817 = vmatprep.mubr.f32.mxu0 0.0
  %818 = vmatmul.mubr.f32.gmra.mrb[0].mxu0 %v249
  %v819 = vpop.f32.mrb[0].mxu0
  %v820 = vadd.f32 %v185, %v819
  %v821 = vpop.f32.mrb[0].mxu0
  %822 = vmatprep.mubr.f32.mxu0 0.0
  %823 = vmatmul.mubr.f32.gmra.mrb[0].mxu0 %v252
  %v824 = vpop.f32.mrb[0].mxu0
  %v825 = vadd.f32 %v185, %v824
  %v826 = vpop.f32.mrb[0].mxu0
  %827 = vmatprep.mubr.f32.mxu0 0.0
  %828 = vmatmul.mubr.f32.gmra.mrb[0].mxu0 %v255
  %v829 = vpop.f32.mrb[0].mxu0
  %v830 = vadd.f32 %v185, %v829
  %v831 = vpop.f32.mrb[0].mxu0
  %832 = vmatprep.mubr.f32.mxu0 0.0
  %833 = vmatmul.mubr.f32.gmra.mrb[0].mxu0 %v258
  %v834 = vpop.f32.mrb[0].mxu0
  %v835 = vadd.f32 %v185, %v834
  %v836 = vpop.f32.mrb[0].mxu0
  %837 = vmatprep.mubr.f32.mxu0 0.0
  %838 = vmatmul.mubr.f32.gmra.mrb[0].mxu0 %v261
  %v839 = vpop.f32.mrb[0].mxu0
  %v840 = vadd.f32 %v185, %v839
  %v841 = vpop.f32.mrb[0].mxu0
  %842 = vmatprep.mubr.f32.mxu0 0.0
  %843 = vmatmul.mubr.f32.gmra.mrb[0].mxu0 %v264
  %v844 = vpop.f32.mrb[0].mxu0
  %v845 = vadd.f32 %v185, %v844
  %v846 = vpop.f32.mrb[0].mxu0
  %847 = vmatprep.mubr.f32.mxu0 0.0
  %848 = vmatmul.mubr.f32.gmra.mrb[0].mxu0 %v267
  %v849 = vpop.f32.mrb[0].mxu0
  %v850 = vadd.f32 %v185, %v849
  %v851 = vpop.f32.mrb[0].mxu0
  %852 = vmatprep.mubr.f32.mxu0 0.0
  %853 = vmatmul.mubr.f32.gmra.mrb[0].mxu0 %v270
  %v854 = vpop.f32.mrb[0].mxu0
  %v855 = vadd.f32 %v185, %v854
  %v856 = vpop.f32.mrb[0].mxu0
  %857 = vmatprep.mubr.f32.mxu0 0.0
  %858 = vmatmul.mubr.f32.gmra.mrb[0].mxu0 %v273
  %v859 = vpop.f32.mrb[0].mxu0
  %v860 = vadd.f32 %v185, %v859
  %v861 = vpop.f32.mrb[0].mxu0
  %862 = vmatprep.mubr.f32.mxu0 0.0
  %863 = vmatmul.mubr.f32.gmra.mrb[0].mxu0 %v276
  %v864 = vpop.f32.mrb[0].mxu0
  %v865 = vadd.f32 %v185, %v864
  %v866 = vpop.f32.mrb[0].mxu0
  %867 = vmatprep.mubr.f32.mxu0 0.0
  %868 = vmatmul.mubr.f32.gmra.mrb[0].mxu0 %v279
  %v869 = vpop.f32.mrb[0].mxu0
  %v870 = vadd.f32 %v185, %v869
  %v871 = vpop.f32.mrb[0].mxu0
  %872 = vmatprep.mubr.f32.mxu0 0.0
  %873 = vmatmul.mubr.f32.gmra.mrb[0].mxu0 %v282
  %v874 = vpop.f32.mrb[0].mxu0
  %v875 = vadd.f32 %v185, %v874
  %v876 = vpop.f32.mrb[0].mxu0
  %877 = vmatprep.mubr.f32.mxu0 0.0
  %878 = vmatmul.mubr.f32.gmra.mrb[0].mxu0 %v285
  %v879 = vpop.f32.mrb[0].mxu0
  %v880 = vadd.f32 %v185, %v879
  %v881 = vpop.f32.mrb[0].mxu0
  %882 = vmatprep.mubr.f32.mxu0 0.0
  %883 = vmatmul.mubr.f32.gmra.mrb[0].mxu0 %v288
  %v884 = vpop.f32.mrb[0].mxu0
  %v885 = vadd.f32 %v185, %v884
  %v886 = vpop.f32.mrb[0].mxu0
  %887 = vmatprep.mubr.f32.mxu0 0.0
  %888 = vmatmul.mubr.f32.gmra.mrb[0].mxu0 %v291
  %v889 = vpop.f32.mrb[0].mxu0
  %v890 = vadd.f32 %v185, %v889
  %v891 = vpop.f32.mrb[0].mxu0
  %892 = vmatprep.mubr.f32.mxu0 0.0
  %893 = vmatmul.mubr.f32.gmra.mrb[0].mxu0 %v294
  %v894 = vpop.f32.mrb[0].mxu0
  %v895 = vadd.f32 %v185, %v894
  %v896 = vpop.f32.mrb[0].mxu0
  %897 = vmatprep.mubr.f32.mxu0 0.0
  %898 = vmatmul.mubr.f32.gmra.mrb[0].mxu0 %v297
  %v899 = vpop.f32.mrb[0].mxu0
  %v900 = vadd.f32 %v185, %v899
  %v901 = vpop.f32.mrb[0].mxu0
  %902 = vmatprep.mubr.f32.mxu0 0.0
  %903 = vmatmul.mubr.f32.gmra.mrb[0].mxu0 %v300
  %v904 = vpop.f32.mrb[0].mxu0
  %v905 = vadd.f32 %v185, %v904
  %v906 = vpop.f32.mrb[0].mxu0
  %907 = vmatprep.mubr.f32.mxu0 0.0
  %908 = vmatmul.mubr.f32.gmra.mrb[0].mxu0 %v303
  %v909 = vpop.f32.mrb[0].mxu0
  %v910 = vadd.f32 %v185, %v909
  %v911 = vpop.f32.mrb[0].mxu0
  %912 = vmatprep.mubr.f32.mxu0 0.0
  %913 = vmatmul.mubr.f32.gmra.mrb[0].mxu0 %v306
  %v914 = vpop.f32.mrb[0].mxu0
  %v915 = vadd.f32 %v185, %v914
  %v916 = vpop.f32.mrb[0].mxu0
  %917 = vmatprep.mubr.f32.mxu0 0.0
  %918 = vmatmul.mubr.f32.gmra.mrb[0].mxu0 %v309
  %v919 = vpop.f32.mrb[0].mxu0
  %v920 = vadd.f32 %v185, %v919
  %v921 = vpop.f32.mrb[0].mxu0
  %922 = vmatprep.mubr.f32.mxu0 0.0
  %923 = vmatmul.mubr.f32.gmra.mrb[0].mxu0 %v312
  %v924 = vpop.f32.mrb[0].mxu0
  %v925 = vadd.f32 %v185, %v924
  %v926 = vpop.f32.mrb[0].mxu0
  %927 = vmatprep.mubr.f32.mxu0 0.0
  %928 = vmatmul.mubr.f32.gmra.mrb[0].mxu0 %v315
  %v929 = vpop.f32.mrb[0].mxu0
  %v930 = vadd.f32 %v185, %v929
  %v931 = vpop.f32.mrb[0].mxu0
  %932 = vmatprep.mubr.f32.mxu0 0.0
  %933 = vmatmul.mubr.f32.gmra.mrb[0].mxu0 %v318
  %v934 = vpop.f32.mrb[0].mxu0
  %v935 = vadd.f32 %v185, %v934
  %v936 = vpop.f32.mrb[0].mxu0
  %937 = vmatprep.mubr.f32.mxu0 0.0
  %938 = vmatmul.mubr.f32.gmra.mrb[0].mxu0 %v321
  %v939 = vpop.f32.mrb[0].mxu0
  %v940 = vadd.f32 %v185, %v939
  %v941 = vpop.f32.mrb[0].mxu0
  %942 = vmatprep.mubr.f32.mxu0 0.0
  %943 = vmatmul.mubr.f32.gmra.mrb[0].mxu0 %v324
  %v944 = vpop.f32.mrb[0].mxu0
  %v945 = vadd.f32 %v185, %v944
  %v946 = vpop.f32.mrb[0].mxu0
  %947 = vmatprep.mubr.f32.mxu0 0.0
  %948 = vmatmul.mubr.f32.gmra.mrb[0].mxu0 %v327
  %v949 = vpop.f32.mrb[0].mxu0
  %v950 = vadd.f32 %v185, %v949
  %v951 = vpop.f32.mrb[0].mxu0
  %952 = vmatprep.mubr.f32.mxu0 0.0
  %953 = vmatmul.mubr.f32.gmra.mrb[0].mxu0 %v330
  %v954 = vpop.f32.mrb[0].mxu0
  %v955 = vadd.f32 %v185, %v954
  %v956 = vpop.f32.mrb[0].mxu0
  %957 = vmatprep.mubr.f32.mxu0 0.0
  %958 = vmatmul.mubr.f32.gmra.mrb[0].mxu0 %v333
  %v959 = vpop.f32.mrb[0].mxu0
  %v960 = vadd.f32 %v185, %v959
  %v961 = vpop.f32.mrb[0].mxu0
  %962 = vmatprep.mubr.f32.mxu0 0.0
  %963 = vmatmul.mubr.f32.gmra.mrb[0].mxu0 %v336
  %v964 = vpop.f32.mrb[0].mxu0
  %v965 = vadd.f32 %v185, %v964
  %v966 = vpop.f32.mrb[0].mxu0
  %967 = vmatprep.mubr.f32.mxu0 0.0
  %968 = vmatmul.mubr.f32.gmra.mrb[0].mxu0 %v339
  %v969 = vpop.f32.mrb[0].mxu0
  %v970 = vadd.f32 %v185, %v969
  %v971 = vpop.f32.mrb[0].mxu0
  %972 = vmatprep.mubr.f32.mxu0 0.0
  %973 = vmatmul.mubr.f32.gmra.mrb[0].mxu0 %v342
  %v974 = vpop.f32.mrb[0].mxu0
  %v975 = vadd.f32 %v185, %v974
  %v976 = vpop.f32.mrb[0].mxu0
  %977 = vmatprep.mubr.f32.mxu0 0.0
  %978 = vmatmul.mubr.f32.gmra.mrb[0].mxu0 %v345
  %v979 = vpop.f32.mrb[0].mxu0
  %v980 = vadd.f32 %v185, %v979
  %v981 = vpop.f32.mrb[0].mxu0
  %982 = vmatprep.mubr.f32.mxu0 0.0
  %983 = vmatmul.mubr.f32.gmra.mrb[0].mxu0 %v348
  %v984 = vpop.f32.mrb[0].mxu0
  %v985 = vadd.f32 %v185, %v984
  %v986 = vpop.f32.mrb[0].mxu0
  %987 = vmatprep.mubr.f32.mxu0 0.0
  %988 = vmatmul.mubr.f32.gmra.mrb[0].mxu0 %v351
  %v989 = vpop.f32.mrb[0].mxu0
  %v990 = vadd.f32 %v185, %v989
  %v991 = vpop.f32.mrb[0].mxu0
  %992 = vmatprep.mubr.f32.mxu0 0.0
  %993 = vmatmul.mubr.f32.gmra.mrb[0].mxu0 %v354
  %v994 = vpop.f32.mrb[0].mxu0
  %v995 = vadd.f32 %v185, %v994
  %v996 = vpop.f32.mrb[0].mxu0
  %997 = vmatprep.mubr.f32.mxu0 0.0
  %998 = vmatmul.mubr.f32.gmra.mrb[0].mxu0 %v357
  %v999 = vpop.f32.mrb[0].mxu0
  %v1000 = vadd.f32 %v185, %v999
  %v1001 = vpop.f32.mrb[0].mxu0
  %1002 = vmatprep.mubr.f32.mxu0 0.0
  %1003 = vmatmul.mubr.f32.gmra.mrb[0].mxu0 %v360
  %v1004 = vpop.f32.mrb[0].mxu0
  %v1005 = vadd.f32 %v185, %v1004
  %v1006 = vpop.f32.mrb[0].mxu0
  %1007 = vmatprep.mubr.f32.mxu0 0.0
  %1008 = vmatmul.mubr.f32.gmra.mrb[0].mxu0 %v363
  %v1009 = vpop.f32.mrb[0].mxu0
  %v1010 = vadd.f32 %v185, %v1009
  %v1011 = vpop.f32.mrb[0].mxu0
  %1012 = vmatprep.mubr.f32.mxu0 0.0
  %1013 = vmatmul.mubr.f32.gmra.mrb[0].mxu0 %v366
  %v1014 = vpop.f32.mrb[0].mxu0
  %v1015 = vadd.f32 %v185, %v1014
  %v1016 = vpop.f32.mrb[0].mxu0
  %1017 = vmatprep.mubr.f32.mxu0 0.0
  %1018 = vmatmul.mubr.f32.gmra.mrb[0].mxu0 %v369
  %v1019 = vpop.f32.mrb[0].mxu0
  %v1020 = vadd.f32 %v185, %v1019
  %v1021 = vpop.f32.mrb[0].mxu0
  %1022 = vmatprep.mubr.f32.mxu0 0.0
  %1023 = vmatmul.mubr.f32.gmra.mrb[0].mxu0 %v372
  %v1024 = vpop.f32.mrb[0].mxu0
  %v1025 = vadd.f32 %v185, %v1024
  %v1026 = vpop.f32.mrb[0].mxu0
  %1027 = vmatprep.mubr.f32.mxu0 0.0
  %1028 = vmatmul.mubr.f32.gmra.mrb[0].mxu0 %v375
  %v1029 = vpop.f32.mrb[0].mxu0
  %v1030 = vadd.f32 %v185, %v1029
  %v1031 = vpop.f32.mrb[0].mxu0
  %1032 = vmatprep.mubr.f32.mxu0 0.0
  %1033 = vmatmul.mubr.f32.gmra.mrb[0].mxu0 %v378
  %v1034 = vpop.f32.mrb[0].mxu0
  %v1035 = vadd.f32 %v185, %v1034
  %v1036 = vpop.f32.mrb[0].mxu0
  %1037 = vmatprep.mubr.f32.mxu0 0.0
  %1038 = vmatmul.mubr.f32.gmra.mrb[0].mxu0 %v381
  %v1039 = vpop.f32.mrb[0].mxu0
  %v1040 = vadd.f32 %v185, %v1039
  %v1041 = vpop.f32.mrb[0].mxu0
  %1042 = vmatprep.mubr.f32.mxu0 0.0
  %1043 = vmatmul.mubr.f32.gmra.mrb[0].mxu0 %v384
  %v1044 = vpop.f32.mrb[0].mxu0
  %v1045 = vadd.f32 %v185, %v1044
  %v1046 = vpop.f32.mrb[0].mxu0
  %1047 = vmatprep.mubr.f32.mxu0 0.0
  %1048 = vmatmul.mubr.f32.gmra.mrb[0].mxu0 %v387
  %v1049 = vpop.f32.mrb[0].mxu0
  %v1050 = vadd.f32 %v185, %v1049
  %v1051 = vpop.f32.mrb[0].mxu0
  %1052 = vmatprep.mubr.f32.mxu0 0.0
  %1053 = vmatmul.mubr.f32.gmra.mrb[0].mxu0 %v390
  %v1054 = vpop.f32.mrb[0].mxu0
  %v1055 = vadd.f32 %v185, %v1054
  %v1056 = vpop.f32.mrb[0].mxu0
  %1057 = vmatprep.mubr.f32.mxu0 0.0
  %1058 = vmatmul.mubr.f32.gmra.mrb[0].mxu0 %v393
  %v1059 = vpop.f32.mrb[0].mxu0
  %v1060 = vadd.f32 %v185, %v1059
  %v1061 = vpop.f32.mrb[0].mxu0
  %1062 = vmatprep.mubr.f32.mxu0 0.0
  %1063 = vmatmul.mubr.f32.gmra.mrb[0].mxu0 %v396
  %v1064 = vpop.f32.mrb[0].mxu0
  %v1065 = vadd.f32 %v185, %v1064
  %v1066 = vpop.f32.mrb[0].mxu0
  %1067 = vmatprep.mubr.f32.mxu0 0.0
  %1068 = vmatmul.mubr.f32.gmra.mrb[0].mxu0 %v399
  %v1069 = vpop.f32.mrb[0].mxu0
  %v1070 = vadd.f32 %v185, %v1069
  %v1071 = vpop.f32.mrb[0].mxu0
  %1072 = vmatprep.mubr.f32.mxu0 0.0
  %1073 = vmatmul.mubr.f32.gmra.mrb[0].mxu0 %v402
  %v1074 = vpop.f32.mrb[0].mxu0
  %v1075 = vadd.f32 %v185, %v1074
  %v1076 = vpop.f32.mrb[0].mxu0
  %1077 = vmatprep.mubr.f32.mxu0 0.0
  %1078 = vmatmul.mubr.f32.gmra.mrb[0].mxu0 %v405
  %v1079 = vpop.f32.mrb[0].mxu0
  %v1080 = vadd.f32 %v185, %v1079
  %v1081 = vpop.f32.mrb[0].mxu0
  %1082 = vmatprep.mubr.f32.mxu0 0.0
  %1083 = vmatmul.mubr.f32.gmra.mrb[0].mxu0 %v408
  %v1084 = vpop.f32.mrb[0].mxu0
  %v1085 = vadd.f32 %v185, %v1084
  %v1086 = vpop.f32.mrb[0].mxu0
  %1087 = vmatprep.mubr.f32.mxu0 0.0
  %1088 = vmatmul.mubr.f32.gmra.mrb[0].mxu0 %v411
  %v1089 = vpop.f32.mrb[0].mxu0
  %v1090 = vadd.f32 %v185, %v1089
  %v1091 = vpop.f32.mrb[0].mxu0
  %1092 = vmatprep.mubr.f32.mxu0 0.0
  %1093 = vmatmul.mubr.f32.gmra.mrb[0].mxu0 %v414
  %v1094 = vpop.f32.mrb[0].mxu0
  %v1095 = vadd.f32 %v185, %v1094
  %v1096 = vpop.f32.mrb[0].mxu0
  %1097 = vmatprep.mubr.f32.mxu0 0.0
  %1098 = vmatmul.mubr.f32.gmra.mrb[0].mxu0 %v417
  %v1099 = vpop.f32.mrb[0].mxu0
  %v1100 = vadd.f32 %v185, %v1099
  %v1101 = vpop.f32.mrb[0].mxu0
  %1102 = vmatprep.mubr.f32.mxu0 0.0
  %1103 = vmatmul.mubr.f32.gmra.mrb[0].mxu0 %v420
  %v1104 = vpop.f32.mrb[0].mxu0
  %v1105 = vadd.f32 %v185, %v1104
  %v1106 = vpop.f32.mrb[0].mxu0
  %1107 = vmatprep.mubr.f32.mxu0 0.0
  %1108 = vmatmul.mubr.f32.gmra.mrb[0].mxu0 %v423
  %v1109 = vpop.f32.mrb[0].mxu0
  %v1110 = vadd.f32 %v185, %v1109
  %v1111 = vpop.f32.mrb[0].mxu0
  %1112 = vmatprep.mubr.f32.mxu0 0.0
  %1113 = vmatmul.mubr.f32.gmra.mrb[0].mxu0 %v426
  %v1114 = vpop.f32.mrb[0].mxu0
  %v1115 = vadd.f32 %v185, %v1114
  %v1116 = vpop.f32.mrb[0].mxu0
  %1117 = vmatprep.mubr.f32.mxu0 0.0
  %1118 = vmatmul.mubr.f32.gmra.mrb[0].mxu0 %v429
  %v1119 = vpop.f32.mrb[0].mxu0
  %v1120 = vadd.f32 %v185, %v1119
  %v1121 = vpop.f32.mrb[0].mxu0
  %1122 = vmatprep.mubr.f32.mxu0 0.0
  %1123 = vmatmul.mubr.f32.gmra.mrb[0].mxu0 %v432
  %v1124 = vpop.f32.mrb[0].mxu0
  %v1125 = vadd.f32 %v185, %v1124
  %v1126 = vpop.f32.mrb[0].mxu0
  %1127 = vmatprep.mubr.f32.mxu0 0.0
  %1128 = vmatmul.mubr.f32.gmra.mrb[0].mxu0 %v435
  %v1129 = vpop.f32.mrb[0].mxu0
  %v1130 = vadd.f32 %v185, %v1129
  %v1131 = vpop.f32.mrb[0].mxu0
  %1132 = vmatprep.mubr.f32.mxu0 0.0
  %1133 = vmatmul.mubr.f32.gmra.mrb[0].mxu0 %v438
  %v1134 = vpop.f32.mrb[0].mxu0
  %v1135 = vadd.f32 %v185, %v1134
  %v1136 = vpop.f32.mrb[0].mxu0
  %1137 = vmatprep.mubr.f32.mxu0 0.0
  %1138 = vmatmul.mubr.f32.gmra.mrb[0].mxu0 %v441
  %v1139 = vpop.f32.mrb[0].mxu0
  %v1140 = vadd.f32 %v185, %v1139
  %v1141 = vpop.f32.mrb[0].mxu0
  %1142 = vmatprep.mubr.f32.mxu0 0.0
  %1143 = vmatmul.mubr.f32.gmra.mrb[0].mxu0 %v444
  %v1144 = vpop.f32.mrb[0].mxu0
  %v1145 = vadd.f32 %v185, %v1144
  %v1146 = vpop.f32.mrb[0].mxu0
  %1147 = vmatprep.mubr.f32.mxu0 0.0
  %1148 = vmatmul.mubr.f32.gmra.mrb[0].mxu0 %v447
  %v1149 = vpop.f32.mrb[0].mxu0
  %v1150 = vadd.f32 %v185, %v1149
  %v1151 = vpop.f32.mrb[0].mxu0
  %1152 = vmatprep.mubr.f32.mxu0 0.0
  %1153 = vmatmul.mubr.f32.gmra.mrb[0].mxu0 %v450
  %v1154 = vpop.f32.mrb[0].mxu0
  %v1155 = vadd.f32 %v185, %v1154
  %v1156 = vpop.f32.mrb[0].mxu0
  %1157 = vmatprep.mubr.f32.mxu0 0.0
  %1158 = vmatmul.mubr.f32.gmra.mrb[0].mxu0 %v453
  %v1159 = vpop.f32.mrb[0].mxu0
  %v1160 = vadd.f32 %v185, %v1159
  %v1161 = vpop.f32.mrb[0].mxu0
  %1162 = vmatprep.mubr.f32.mxu0 0.0
  %1163 = vmatmul.mubr.f32.gmra.mrb[0].mxu0 %v456
  %v1164 = vpop.f32.mrb[0].mxu0
  %v1165 = vadd.f32 %v185, %v1164
  %v1166 = vpop.f32.mrb[0].mxu0
  %1167 = vmatprep.mubr.f32.mxu0 0.0
  %1168 = vmatmul.mubr.f32.gmra.mrb[0].mxu0 %v459
  %v1169 = vpop.f32.mrb[0].mxu0
  %v1170 = vadd.f32 %v185, %v1169
  %v1171 = vpop.f32.mrb[0].mxu0
  %1172 = vmatprep.mubr.f32.mxu0 0.0
  %1173 = vmatmul.mubr.f32.gmra.mrb[0].mxu0 %v462
  %v1174 = vpop.f32.mrb[0].mxu0
  %v1175 = vadd.f32 %v185, %v1174
  %v1176 = vpop.f32.mrb[0].mxu0
  %1177 = vmatprep.mubr.f32.mxu0 0.0
  %1178 = vmatmul.mubr.f32.gmra.mrb[0].mxu0 %v465
  %v1179 = vpop.f32.mrb[0].mxu0
  %v1180 = vadd.f32 %v185, %v1179
  %v1181 = vpop.f32.mrb[0].mxu0
  %1182 = vmatprep.mubr.f32.mxu0 0.0
  %1183 = vmatmul.mubr.f32.gmra.mrb[0].mxu0 %v468
  %v1184 = vpop.f32.mrb[0].mxu0
  %v1185 = vadd.f32 %v185, %v1184
  %v1186 = vpop.f32.mrb[0].mxu0
  %1187 = vmatprep.mubr.f32.mxu0 0.0
  %1188 = vmatmul.mubr.f32.gmra.mrb[0].mxu0 %v471
  %v1189 = vpop.f32.mrb[0].mxu0
  %v1190 = vadd.f32 %v185, %v1189
  %v1191 = vpop.f32.mrb[0].mxu0
  %1192 = vmatprep.mubr.f32.mxu0 0.0
  %1193 = vmatmul.mubr.f32.gmra.mrb[0].mxu0 %v474
  %v1194 = vpop.f32.mrb[0].mxu0
  %v1195 = vadd.f32 %v185, %v1194
  %v1196 = vpop.f32.mrb[0].mxu0
  %1197 = vmatprep.mubr.f32.mxu0 0.0
  %1198 = vmatmul.mubr.f32.gmra.mrb[0].mxu0 %v477
  %v1199 = vpop.f32.mrb[0].mxu0
  %v1200 = vadd.f32 %v185, %v1199
  %v1201 = vpop.f32.mrb[0].mxu0
  %1202 = vmatprep.mubr.f32.mxu0 0.0
  %1203 = vmatmul.mubr.f32.gmra.mrb[0].mxu0 %v480
  %v1204 = vpop.f32.mrb[0].mxu0
  %v1205 = vadd.f32 %v185, %v1204
  %v1206 = vpop.f32.mrb[0].mxu0
  %1207 = vmatprep.mubr.f32.mxu0 0.0
  %1208 = vmatmul.mubr.f32.gmra.mrb[0].mxu0 %v483
  %v1209 = vpop.f32.mrb[0].mxu0
  %v1210 = vadd.f32 %v185, %v1209
  %v1211 = vpop.f32.mrb[0].mxu0
  %1212 = vmatprep.mubr.f32.mxu0 0.0
  %1213 = vmatmul.mubr.f32.gmra.mrb[0].mxu0 %v486
  %v1214 = vpop.f32.mrb[0].mxu0
  %v1215 = vadd.f32 %v185, %v1214
  %v1216 = vpop.f32.mrb[0].mxu0
  %1217 = vmatprep.mubr.f32.mxu0 0.0
  %1218 = vmatmul.mubr.f32.gmra.mrb[0].mxu0 %v489
  %v1219 = vpop.f32.mrb[0].mxu0
  %v1220 = vadd.f32 %v185, %v1219
  %v1221 = vpop.f32.mrb[0].mxu0
  %1222 = vmatprep.mubr.f32.mxu0 0.0
  %1223 = vmatmul.mubr.f32.gmra.mrb[0].mxu0 %v492
  %v1224 = vpop.f32.mrb[0].mxu0
  %v1225 = vadd.f32 %v185, %v1224
  %v1226 = vpop.f32.mrb[0].mxu0
  %1227 = vmatprep.mubr.f32.mxu0 0.0
  %1228 = vmatmul.mubr.f32.gmra.mrb[0].mxu0 %v495
  %v1229 = vpop.f32.mrb[0].mxu0
  %v1230 = vadd.f32 %v185, %v1229
  %v1231 = vpop.f32.mrb[0].mxu0
  %1232 = vmatprep.mubr.f32.mxu0 0.0
  %1233 = vmatmul.mubr.f32.gmra.mrb[0].mxu0 %v498
  %v1234 = vpop.f32.mrb[0].mxu0
  %v1235 = vadd.f32 %v185, %v1234
  %v1236 = vpop.f32.mrb[0].mxu0
  %1237 = vmatprep.mubr.f32.mxu0 0.0
  %1238 = vmatmul.mubr.f32.gmra.mrb[0].mxu0 %v501
  %v1239 = vpop.f32.mrb[0].mxu0
  %v1240 = vadd.f32 %v185, %v1239
  %v1241 = vpop.f32.mrb[0].mxu0
  %1242 = vmatprep.mubr.f32.mxu0 0.0
  %1243 = vmatmul.mubr.f32.gmra.mrb[0].mxu0 %v504
  %v1244 = vpop.f32.mrb[0].mxu0
  %v1245 = vadd.f32 %v185, %v1244
  %v1246 = vpop.f32.mrb[0].mxu0
  %1247 = vmatprep.mubr.f32.mxu0 0.0
  %1248 = vmatmul.mubr.f32.gmra.mrb[0].mxu0 %v507
  %v1249 = vpop.f32.mrb[0].mxu0
  %v1250 = vadd.f32 %v185, %v1249
  %v1251 = vpop.f32.mrb[0].mxu0
  %1252 = vmatprep.mubr.f32.mxu0 0.0
  %1253 = vmatmul.mubr.f32.gmra.mrb[0].mxu0 %v510
  %v1254 = vpop.f32.mrb[0].mxu0
  %v1255 = vadd.f32 %v185, %v1254
  %v1256 = vpop.f32.mrb[0].mxu0
  %1257 = vmatprep.mubr.f32.mxu0 0.0
  %1258 = vmatmul.mubr.f32.gmra.mrb[0].mxu0 %v513
  %v1259 = vpop.f32.mrb[0].mxu0
  %v1260 = vadd.f32 %v185, %v1259
  %v1261 = vpop.f32.mrb[0].mxu0
  %1262 = vmatprep.mubr.f32.mxu0 0.0
  %1263 = vmatmul.mubr.f32.gmra.mrb[0].mxu0 %v516
  %v1264 = vpop.f32.mrb[0].mxu0
  %v1265 = vadd.f32 %v185, %v1264
  %v1266 = vpop.f32.mrb[0].mxu0
  %1267 = vmatprep.mubr.f32.mxu0 0.0
  %1268 = vmatmul.mubr.f32.gmra.mrb[0].mxu0 %v519
  %v1269 = vpop.f32.mrb[0].mxu0
  %v1270 = vadd.f32 %v185, %v1269
  %v1271 = vpop.f32.mrb[0].mxu0
  %1272 = vmatprep.mubr.f32.mxu0 0.0
  %1273 = vmatmul.mubr.f32.gmra.mrb[0].mxu0 %v522
  %v1274 = vpop.f32.mrb[0].mxu0
  %v1275 = vadd.f32 %v185, %v1274
  %v1276 = vpop.f32.mrb[0].mxu0
  %1277 = vmatprep.mubr.f32.mxu0 0.0
  %1278 = vmatmul.mubr.f32.gmra.mrb[0].mxu0 %v525
  %v1279 = vpop.f32.mrb[0].mxu0
  %v1280 = vadd.f32 %v185, %v1279
  %v1281 = vpop.f32.mrb[0].mxu0
  %1282 = vmatprep.mubr.f32.mxu0 0.0
  %1283 = vmatmul.mubr.f32.gmra.mrb[0].mxu0 %v528
  %v1284 = vpop.f32.mrb[0].mxu0
  %v1285 = vadd.f32 %v185, %v1284
  %v1286 = vpop.f32.mrb[0].mxu0
  %1287 = vmatprep.mubr.f32.mxu0 0.0
  %1288 = vmatmul.mubr.f32.gmra.mrb[0].mxu0 %v531
  %v1289 = vpop.f32.mrb[0].mxu0
  %v1290 = vadd.f32 %v185, %v1289
  %v1291 = vpop.f32.mrb[0].mxu0
  %1292 = vmatprep.mubr.f32.mxu0 0.0
  %1293 = vmatmul.mubr.f32.gmra.mrb[0].mxu0 %v534
  %v1294 = vpop.f32.mrb[0].mxu0
  %v1295 = vadd.f32 %v185, %v1294
  %v1296 = vpop.f32.mrb[0].mxu0
  %1297 = vmatprep.mubr.f32.mxu0 0.0
  %1298 = vmatmul.mubr.f32.gmra.mrb[0].mxu0 %v537
  %v1299 = vpop.f32.mrb[0].mxu0
  %v1300 = vadd.f32 %v185, %v1299
  %v1301 = vpop.f32.mrb[0].mxu0
  %1302 = vmatprep.mubr.f32.mxu0 0.0
  %1303 = vmatmul.mubr.f32.gmra.mrb[0].mxu0 %v540
  %v1304 = vpop.f32.mrb[0].mxu0
  %v1305 = vadd.f32 %v185, %v1304
  %v1306 = vpop.f32.mrb[0].mxu0
  %1307 = vmatprep.mubr.f32.mxu0 0.0
  %1308 = vmatmul.mubr.f32.gmra.mrb[0].mxu0 %v543
  %v1309 = vpop.f32.mrb[0].mxu0
  %v1310 = vadd.f32 %v185, %v1309
  %v1311 = vpop.f32.mrb[0].mxu0
  %1312 = vmatprep.mubr.f32.mxu0 0.0
  %1313 = vmatmul.mubr.f32.gmra.mrb[0].mxu0 %v546
  %v1314 = vpop.f32.mrb[0].mxu0
  %v1315 = vadd.f32 %v185, %v1314
  %v1316 = vpop.f32.mrb[0].mxu0
  %1317 = vmatprep.mubr.f32.mxu0 0.0
  %1318 = vmatmul.mubr.f32.gmra.mrb[0].mxu0 %v549
  %v1319 = vpop.f32.mrb[0].mxu0
  %v1320 = vadd.f32 %v185, %v1319
  %v1321 = vpop.f32.mrb[0].mxu0
  %1322 = vmatprep.mubr.f32.mxu0 0.0
  %1323 = vmatmul.mubr.f32.gmra.mrb[0].mxu0 %v552
  %v1324 = vpop.f32.mrb[0].mxu0
  %v1325 = vadd.f32 %v185, %v1324
  %v1326 = vpop.f32.mrb[0].mxu0
  %1327 = vmatprep.mubr.f32.mxu0 0.0
  %1328 = vmatmul.mubr.f32.gmra.mrb[0].mxu0 %v555
  %v1329 = vpop.f32.mrb[0].mxu0
  %v1330 = vadd.f32 %v185, %v1329
  %v1331 = vpop.f32.mrb[0].mxu0
  %1332 = vmatprep.mubr.f32.mxu0 0.0
  %1333 = vmatmul.mubr.f32.gmra.mrb[0].mxu0 %v558
  %v1334 = vpop.f32.mrb[0].mxu0
  %v1335 = vadd.f32 %v185, %v1334
  %v1336 = vpop.f32.mrb[0].mxu0
  %1337 = vmatprep.mubr.f32.mxu0 0.0
  %1338 = vmatmul.mubr.f32.gmra.mrb[0].mxu0 %v561
  %v1339 = vpop.f32.mrb[0].mxu0
  %v1340 = vadd.f32 %v185, %v1339
  %v1341 = vpop.f32.mrb[0].mxu0
  %1342 = vmatprep.mubr.f32.mxu0 0.0
  %1343 = vmatmul.mubr.f32.gmra.mrb[0].mxu0 %v564
  %v1344 = vpop.f32.mrb[0].mxu0
  %v1345 = vadd.f32 %v185, %v1344
  %v1346 = vpop.f32.mrb[0].mxu0
  %1347 = vmatprep.mubr.f32.mxu0 0.0
  %1348 = vmatmul.mubr.f32.gmra.mrb[0].mxu0 %v567
  %v1349 = vpop.f32.mrb[0].mxu0
  %v1350 = vadd.f32 %v185, %v1349
  %v1351 = vpop.f32.mrb[0].mxu0
  %1352 = vmatprep.mubr.f32.mxu0 0.0
  %1353 = vmatmul.mubr.f32.gmra.mrb[0].mxu0 %v570
  %v1354 = vpop.f32.mrb[0].mxu0
  %v1355 = vadd.f32 %v185, %v1354
  %v1356 = vpop.f32.mrb[0].mxu0
  %1357 = vmatprep.mubr.f32.mxu0 0.0
  %1358 = vmatmul.mubr.f32.gmra.mrb[0].mxu0 %v573
  %v1359 = vpop.f32.mrb[0].mxu0
  %v1360 = vadd.f32 %v185, %v1359
  %v1361 = vpop.f32.mrb[0].mxu0
  %1362 = vmatprep.mubr.f32.mxu0 0.0
  %1363 = vmatmul.mubr.f32.gmra.mrb[0].mxu0 %v576
  %v1364 = vpop.f32.mrb[0].mxu0
  %v1365 = vadd.f32 %v185, %v1364
  %v1366 = vpop.f32.mrb[0].mxu0
  %1367 = vmatprep.mubr.f32.mxu0 0.0
  %1368 = vmatmul.mubr.f32.gmra.mrb[0].mxu0 %v579
  %v1369 = vpop.f32.mrb[0].mxu0
  %v1370 = vadd.f32 %v185, %v1369
  %v1371 = vpop.f32.mrb[0].mxu0
  %1372 = vmatprep.mubr.f32.mxu0 0.0
  %1373 = vmatmul.mubr.f32.gmra.mrb[0].mxu0 %v582
  %v1374 = vpop.f32.mrb[0].mxu0
  %v1375 = vadd.f32 %v185, %v1374
  %v1376 = vpop.f32.mrb[0].mxu0
  %1377 = vmatprep.mubr.f32.mxu0 0.0
  %1378 = vmatmul.mubr.f32.gmra.mrb[0].mxu0 %v585
  %v1379 = vpop.f32.mrb[0].mxu0
  %v1380 = vadd.f32 %v185, %v1379
  %v1381 = vpop.f32.mrb[0].mxu0
  %1382 = vmatprep.mubr.f32.mxu0 0.0
  %1383 = vmatmul.mubr.f32.gmra.mrb[0].mxu0 %v588
  %v1384 = vpop.f32.mrb[0].mxu0
  %v1385 = vadd.f32 %v185, %v1384
  %v1386 = vpop.f32.mrb[0].mxu0
  %1387 = vmatprep.mubr.f32.mxu0 0.0
  %1388 = vmatmul.mubr.f32.gmra.mrb[0].mxu0 %v591
  %v1389 = vpop.f32.mrb[0].mxu0
  %v1390 = vadd.f32 %v185, %v1389
  %v1391 = vpop.f32.mrb[0].mxu0
  %1392 = vmatprep.mubr.f32.mxu0 0.0
  %1393 = vmatmul.mubr.f32.gmra.mrb[0].mxu0 %v594
  %v1394 = vpop.f32.mrb[0].mxu0
  %v1395 = vadd.f32 %v185, %v1394
  %v1396 = vpop.f32.mrb[0].mxu0
  %1397 = vmatprep.mubr.f32.mxu0 0.0
  %1398 = vmatmul.mubr.f32.gmra.mrb[0].mxu0 %v597
  %v1399 = vpop.f32.mrb[0].mxu0
  %v1400 = vadd.f32 %v185, %v1399
  %v1401 = vpop.f32.mrb[0].mxu0
  %1402 = vmatprep.mubr.f32.mxu0 0.0
  %1403 = vmatmul.mubr.f32.gmra.mrb[0].mxu0 %v600
  %v1404 = vpop.f32.mrb[0].mxu0
  %v1405 = vadd.f32 %v185, %v1404
  %v1406 = vpop.f32.mrb[0].mxu0
  %1407 = vmatprep.mubr.f32.mxu0 0.0
  %1408 = vmatmul.mubr.f32.gmra.mrb[0].mxu0 %v603
  %v1409 = vpop.f32.mrb[0].mxu0
  %v1410 = vadd.f32 %v185, %v1409
  %v1411 = vpop.f32.mrb[0].mxu0
  %1412 = vmatprep.mubr.f32.mxu0 0.0
  %1413 = vmatmul.mubr.f32.gmra.mrb[0].mxu0 %v606
  %v1414 = vpop.f32.mrb[0].mxu0
  %v1415 = vadd.f32 %v185, %v1414
  %v1416 = vpop.f32.mrb[0].mxu0
  %1417 = vmatprep.mubr.f32.mxu0 0.0
  %1418 = vmatmul.mubr.f32.gmra.mrb[0].mxu0 %v609
  %v1419 = vpop.f32.mrb[0].mxu0
  %v1420 = vadd.f32 %v185, %v1419
  %v1421 = vpop.f32.mrb[0].mxu0
  %1422 = vmatprep.mubr.f32.mxu0 0.0
  %1423 = vmatmul.mubr.f32.gmra.mrb[0].mxu0 %v612
  %v1424 = vpop.f32.mrb[0].mxu0
  %v1425 = vadd.f32 %v185, %v1424
  %v1426 = vpop.f32.mrb[0].mxu0
  %1427 = vmatprep.mubr.f32.mxu0 0.0
  %1428 = vmatmul.mubr.f32.gmra.mrb[0].mxu0 %v615
  %v1429 = vpop.f32.mrb[0].mxu0
  %v1430 = vadd.f32 %v185, %v1429
  %v1431 = vpop.f32.mrb[0].mxu0
  %1432 = vmatprep.mubr.f32.mxu0 0.0
  %1433 = vmatmul.mubr.f32.gmra.mrb[0].mxu0 %v618
  %v1434 = vpop.f32.mrb[0].mxu0
  %v1435 = vadd.f32 %v185, %v1434
  %v1436 = vpop.f32.mrb[0].mxu0
  %1437 = vmatprep.mubr.f32.mxu0 0.0
  %1438 = vmatmul.mubr.f32.gmra.mrb[0].mxu0 %v621
  %v1439 = vpop.f32.mrb[0].mxu0
  %v1440 = vadd.f32 %v185, %v1439
  %v1441 = vpop.f32.mrb[0].mxu0
  %1442 = vmatprep.mubr.f32.mxu0 0.0
  %1443 = vmatmul.mubr.f32.gmra.mrb[0].mxu0 %v624
  %v1444 = vpop.f32.mrb[0].mxu0
  %v1445 = vadd.f32 %v185, %v1444
  %v1446 = vpop.f32.mrb[0].mxu0
  %1447 = vmatprep.mubr.f32.mxu0 0.0
  %1448 = vmatmul.mubr.f32.gmra.mrb[0].mxu0 %v627
  %v1449 = vpop.f32.mrb[0].mxu0
  %v1450 = vadd.f32 %v185, %v1449
  %v1451 = vpop.f32.mrb[0].mxu0
  %1452 = vmatprep.mubr.f32.mxu0 0.0
  %1453 = vmatmul.mubr.f32.gmra.mrb[0].mxu0 %v630
  %v1454 = vpop.f32.mrb[0].mxu0
  %v1455 = vadd.f32 %v185, %v1454
  %v1456 = vpop.f32.mrb[0].mxu0
  %1457 = vmatprep.mubr.f32.mxu0 0.0
  %1458 = vmatmul.mubr.f32.gmra.mrb[0].mxu0 %v633
  %v1459 = vpop.f32.mrb[0].mxu0
  %v1460 = vadd.f32 %v185, %v1459
  %v1461 = vpop.f32.mrb[0].mxu0
  %1462 = vmatprep.mubr.f32.mxu0 0.0
  %1463 = vmatmul.mubr.f32.gmra.mrb[0].mxu0 %v636
  %v1464 = vpop.f32.mrb[0].mxu0
  %v1465 = vadd.f32 %v185, %v1464
  %v1466 = vpop.f32.mrb[0].mxu0
  %1467 = vmatprep.mubr.f32.mxu0 0.0
  %1468 = vmatmul.mubr.f32.gmra.mrb[0].mxu0 %v639
  %v1469 = vpop.f32.mrb[0].mxu0
  %v1470 = vadd.f32 %v185, %v1469
  %v1471 = vpop.f32.mrb[0].mxu0
  %1472 = vmatprep.mubr.f32.mxu0 0.0
  %1473 = vmatmul.mubr.f32.gmra.mrb[0].mxu0 %v642
  %v1474 = vpop.f32.mrb[0].mxu0
  %v1475 = vadd.f32 %v185, %v1474
  %v1476 = vpop.f32.mrb[0].mxu0
  %1477 = vmatprep.mubr.f32.mxu0 0.0
  %1478 = vmatmul.mubr.f32.gmra.mrb[0].mxu0 %v645
  %v1479 = vpop.f32.mrb[0].mxu0
  %v1480 = vadd.f32 %v185, %v1479
  %v1481 = vpop.f32.mrb[0].mxu0
  %1482 = vmatprep.mubr.f32.mxu0 0.0
  %1483 = vmatmul.mubr.f32.gmra.mrb[0].mxu0 %v648
  %v1484 = vpop.f32.mrb[0].mxu0
  %v1485 = vadd.f32 %v185, %v1484
  %v1486 = vpop.f32.mrb[0].mxu0
  %1487 = vmatprep.mubr.f32.mxu0 0.0
  %1488 = vmatmul.mubr.f32.gmra.mrb[0].mxu0 %v651
  %v1489 = vpop.f32.mrb[0].mxu0
  %v1490 = vadd.f32 %v185, %v1489
  %v1491 = vpop.f32.mrb[0].mxu0
  %1492 = vdwg.mxu0
  %1493 = vst [vmem:[#allocation2] sm:$0xff] %v720
  %1494 = vst [vmem:[#allocation2 + $0x8] sm:$0xff] %v725
  %1495 = vst [vmem:[#allocation2 + $0x10] sm:$0xff] %v730
  %1496 = vst [vmem:[#allocation2 + $0x18] sm:$0xff] %v735
  %1497 = vst [vmem:[#allocation2 + $0x20] sm:$0xff] %v740
  %1498 = vst [vmem:[#allocation2 + $0x28] sm:$0xff] %v745
  %1499 = vst [vmem:[#allocation2 + $0x30] sm:$0xff] %v750
  %1500 = vst [vmem:[#allocation2 + $0x38] sm:$0xff] %v755
  %1501 = vst [vmem:[#allocation2 + $0x40] sm:$0xff] %v760
  %1502 = vst [vmem:[#allocation2 + $0x48] sm:$0xff] %v765
  %1503 = vst [vmem:[#allocation2 + $0x50] sm:$0xff] %v770
  %1504 = vst [vmem:[#allocation2 + $0x58] sm:$0xff] %v775
  %1505 = vst [vmem:[#allocation2 + $0x60] sm:$0xff] %v780
  %1506 = vst [vmem:[#allocation2 + $0x68] sm:$0xff] %v785
  %1507 = vst [vmem:[#allocation2 + $0x70] sm:$0xff] %v790
  %1508 = vst [vmem:[#allocation2 + $0x78] sm:$0xff] %v795
  %1509 = vst [vmem:[#allocation2 + $0x80] sm:$0xff] %v800
  %1510 = vst [vmem:[#allocation2 + $0x88] sm:$0xff] %v805
  %1511 = vst [vmem:[#allocation2 + $0x90] sm:$0xff] %v810
  %1512 = vst [vmem:[#allocation2 + $0x98] sm:$0xff] %v815
  %1513 = vst [vmem:[#allocation2 + $0xa0] sm:$0xff] %v820
  %1514 = vst [vmem:[#allocation2 + $0xa8] sm:$0xff] %v825
  %1515 = vst [vmem:[#allocation2 + $0xb0] sm:$0xff] %v830
  %1516 = vst [vmem:[#allocation2 + $0xb8] sm:$0xff] %v835
  %1517 = vst [vmem:[#allocation2 + $0xc0] sm:$0xff] %v840
  %1518 = vst [vmem:[#allocation2 + $0xc8] sm:$0xff] %v845
  %1519 = vst [vmem:[#allocation2 + $0xd0] sm:$0xff] %v850
  %1520 = vst [vmem:[#allocation2 + $0xd8] sm:$0xff] %v855
  %1521 = vst [vmem:[#allocation2 + $0xe0] sm:$0xff] %v860
  %1522 = vst [vmem:[#allocation2 + $0xe8] sm:$0xff] %v865
  %1523 = vst [vmem:[#allocation2 + $0xf0] sm:$0xff] %v870
  %1524 = vst [vmem:[#allocation2 + $0xf8] sm:$0xff] %v875
  %1525 = vst [vmem:[#allocation2 + $0x100] sm:$0xff] %v880
  %1526 = vst [vmem:[#allocation2 + $0x108] sm:$0xff] %v885
  %1527 = vst [vmem:[#allocation2 + $0x110] sm:$0xff] %v890
  %1528 = vst [vmem:[#allocation2 + $0x118] sm:$0xff] %v895
  %1529 = vst [vmem:[#allocation2 + $0x120] sm:$0xff] %v900
  %1530 = vst [vmem:[#allocation2 + $0x128] sm:$0xff] %v905
  %1531 = vst [vmem:[#allocation2 + $0x130] sm:$0xff] %v910
  %1532 = vst [vmem:[#allocation2 + $0x138] sm:$0xff] %v915
  %1533 = vst [vmem:[#allocation2 + $0x140] sm:$0xff] %v920
  %1534 = vst [vmem:[#allocation2 + $0x148] sm:$0xff] %v925
  %1535 = vst [vmem:[#allocation2 + $0x150] sm:$0xff] %v930
  %1536 = vst [vmem:[#allocation2 + $0x158] sm:$0xff] %v935
  %1537 = vst [vmem:[#allocation2 + $0x160] sm:$0xff] %v940
  %1538 = vst [vmem:[#allocation2 + $0x168] sm:$0xff] %v945
  %1539 = vst [vmem:[#allocation2 + $0x170] sm:$0xff] %v950
  %1540 = vst [vmem:[#allocation2 + $0x178] sm:$0xff] %v955
  %1541 = vst [vmem:[#allocation2 + $0x180] sm:$0xff] %v960
  %1542 = vst [vmem:[#allocation2 + $0x188] sm:$0xff] %v965
  %1543 = vst [vmem:[#allocation2 + $0x190] sm:$0xff] %v970
  %1544 = vst [vmem:[#allocation2 + $0x198] sm:$0xff] %v975
  %1545 = vst [vmem:[#allocation2 + $0x1a0] sm:$0xff] %v980
  %1546 = vst [vmem:[#allocation2 + $0x1a8] sm:$0xff] %v985
  %1547 = vst [vmem:[#allocation2 + $0x1b0] sm:$0xff] %v990
  %1548 = vst [vmem:[#allocation2 + $0x1b8] sm:$0xff] %v995
  %1549 = vst [vmem:[#allocation2 + $0x1c0] sm:$0xff] %v1000
  %1550 = vst [vmem:[#allocation2 + $0x1c8] sm:$0xff] %v1005
  %1551 = vst [vmem:[#allocation2 + $0x1d0] sm:$0xff] %v1010
  %1552 = vst [vmem:[#allocation2 + $0x1d8] sm:$0xff] %v1015
  %1553 = vst [vmem:[#allocation2 + $0x1e0] sm:$0xff] %v1020
  %1554 = vst [vmem:[#allocation2 + $0x1e8] sm:$0xff] %v1025
  %1555 = vst [vmem:[#allocation2 + $0x1f0] sm:$0xff] %v1030
  %1556 = vst [vmem:[#allocation2 + $0x1f8] sm:$0xff] %v1035
  %1557 = vst [vmem:[#allocation2 + $0x200] sm:$0xff] %v1040
  %1558 = vst [vmem:[#allocation2 + $0x208] sm:$0xff] %v1045
  %1559 = vst [vmem:[#allocation2 + $0x210] sm:$0xff] %v1050
  %1560 = vst [vmem:[#allocation2 + $0x218] sm:$0xff] %v1055
  %1561 = vst [vmem:[#allocation2 + $0x220] sm:$0xff] %v1060
  %1562 = vst [vmem:[#allocation2 + $0x228] sm:$0xff] %v1065
  %1563 = vst [vmem:[#allocation2 + $0x230] sm:$0xff] %v1070
  %1564 = vst [vmem:[#allocation2 + $0x238] sm:$0xff] %v1075
  %1565 = vst [vmem:[#allocation2 + $0x240] sm:$0xff] %v1080
  %1566 = vst [vmem:[#allocation2 + $0x248] sm:$0xff] %v1085
  %1567 = vst [vmem:[#allocation2 + $0x250] sm:$0xff] %v1090
  %1568 = vst [vmem:[#allocation2 + $0x258] sm:$0xff] %v1095
  %1569 = vst [vmem:[#allocation2 + $0x260] sm:$0xff] %v1100
  %1570 = vst [vmem:[#allocation2 + $0x268] sm:$0xff] %v1105
  %1571 = vst [vmem:[#allocation2 + $0x270] sm:$0xff] %v1110
  %1572 = vst [vmem:[#allocation2 + $0x278] sm:$0xff] %v1115
  %1573 = vst [vmem:[#allocation2 + $0x280] sm:$0xff] %v1120
  %1574 = vst [vmem:[#allocation2 + $0x288] sm:$0xff] %v1125
  %1575 = vst [vmem:[#allocation2 + $0x290] sm:$0xff] %v1130
  %1576 = vst [vmem:[#allocation2 + $0x298] sm:$0xff] %v1135
  %1577 = vst [vmem:[#allocation2 + $0x2a0] sm:$0xff] %v1140
  %1578 = vst [vmem:[#allocation2 + $0x2a8] sm:$0xff] %v1145
  %1579 = vst [vmem:[#allocation2 + $0x2b0] sm:$0xff] %v1150
  %1580 = vst [vmem:[#allocation2 + $0x2b8] sm:$0xff] %v1155
  %1581 = vst [vmem:[#allocation2 + $0x2c0] sm:$0xff] %v1160
  %1582 = vst [vmem:[#allocation2 + $0x2c8] sm:$0xff] %v1165
  %1583 = vst [vmem:[#allocation2 + $0x2d0] sm:$0xff] %v1170
  %1584 = vst [vmem:[#allocation2 + $0x2d8] sm:$0xff] %v1175
  %1585 = vst [vmem:[#allocation2 + $0x2e0] sm:$0xff] %v1180
  %1586 = vst [vmem:[#allocation2 + $0x2e8] sm:$0xff] %v1185
  %1587 = vst [vmem:[#allocation2 + $0x2f0] sm:$0xff] %v1190
  %1588 = vst [vmem:[#allocation2 + $0x2f8] sm:$0xff] %v1195
  %1589 = vst [vmem:[#allocation2 + $0x300] sm:$0xff] %v1200
  %1590 = vst [vmem:[#allocation2 + $0x308] sm:$0xff] %v1205
  %1591 = vst [vmem:[#allocation2 + $0x310] sm:$0xff] %v1210
  %1592 = vst [vmem:[#allocation2 + $0x318] sm:$0xff] %v1215
  %1593 = vst [vmem:[#allocation2 + $0x320] sm:$0xff] %v1220
  %1594 = vst [vmem:[#allocation2 + $0x328] sm:$0xff] %v1225
  %1595 = vst [vmem:[#allocation2 + $0x330] sm:$0xff] %v1230
  %1596 = vst [vmem:[#allocation2 + $0x338] sm:$0xff] %v1235
  %1597 = vst [vmem:[#allocation2 + $0x340] sm:$0xff] %v1240
  %1598 = vst [vmem:[#allocation2 + $0x348] sm:$0xff] %v1245
  %1599 = vst [vmem:[#allocation2 + $0x350] sm:$0xff] %v1250
  %1600 = vst [vmem:[#allocation2 + $0x358] sm:$0xff] %v1255
  %1601 = vst [vmem:[#allocation2 + $0x360] sm:$0xff] %v1260
  %1602 = vst [vmem:[#allocation2 + $0x368] sm:$0xff] %v1265
  %1603 = vst [vmem:[#allocation2 + $0x370] sm:$0xff] %v1270
  %1604 = vst [vmem:[#allocation2 + $0x378] sm:$0xff] %v1275
  %1605 = vst [vmem:[#allocation2 + $0x380] sm:$0xff] %v1280
  %1606 = vst [vmem:[#allocation2 + $0x388] sm:$0xff] %v1285
  %1607 = vst [vmem:[#allocation2 + $0x390] sm:$0xff] %v1290
  %1608 = vst [vmem:[#allocation2 + $0x398] sm:$0xff] %v1295
  %1609 = vst [vmem:[#allocation2 + $0x3a0] sm:$0xff] %v1300
  %1610 = vst [vmem:[#allocation2 + $0x3a8] sm:$0xff] %v1305
  %1611 = vst [vmem:[#allocation2 + $0x3b0] sm:$0xff] %v1310
  %1612 = vst [vmem:[#allocation2 + $0x3b8] sm:$0xff] %v1315
  %1613 = vst [vmem:[#allocation2 + $0x3c0] sm:$0xff] %v1320
  %1614 = vst [vmem:[#allocation2 + $0x3c8] sm:$0xff] %v1325
  %1615 = vst [vmem:[#allocation2 + $0x3d0] sm:$0xff] %v1330
  %1616 = vst [vmem:[#allocation2 + $0x3d8] sm:$0xff] %v1335
  %1617 = vst [vmem:[#allocation2 + $0x3e0] sm:$0xff] %v1340
  %1618 = vst [vmem:[#allocation2 + $0x3e8] sm:$0xff] %v1345
  %1619 = vst [vmem:[#allocation2 + $0x3f0] sm:$0xff] %v1350
  %1620 = vst [vmem:[#allocation2 + $0x3f8] sm:$0xff] %v1355
  %1621 = vst [vmem:[#allocation2 + $0x400] sm:$0xff] %v1360
  %1622 = vst [vmem:[#allocation2 + $0x408] sm:$0xff] %v1365
  %1623 = vst [vmem:[#allocation2 + $0x410] sm:$0xff] %v1370
  %1624 = vst [vmem:[#allocation2 + $0x418] sm:$0xff] %v1375
  %1625 = vst [vmem:[#allocation2 + $0x420] sm:$0xff] %v1380
  %1626 = vst [vmem:[#allocation2 + $0x428] sm:$0xff] %v1385
  %1627 = vst [vmem:[#allocation2 + $0x430] sm:$0xff] %v1390
  %1628 = vst [vmem:[#allocation2 + $0x438] sm:$0xff] %v1395
  %1629 = vst [vmem:[#allocation2 + $0x440] sm:$0xff] %v1400
  %1630 = vst [vmem:[#allocation2 + $0x448] sm:$0xff] %v1405
  %1631 = vst [vmem:[#allocation2 + $0x450] sm:$0xff] %v1410
  %1632 = vst [vmem:[#allocation2 + $0x458] sm:$0xff] %v1415
  %1633 = vst [vmem:[#allocation2 + $0x460] sm:$0xff] %v1420
  %1634 = vst [vmem:[#allocation2 + $0x468] sm:$0xff] %v1425
  %1635 = vst [vmem:[#allocation2 + $0x470] sm:$0xff] %v1430
  %1636 = vst [vmem:[#allocation2 + $0x478] sm:$0xff] %v1435
  %1637 = vst [vmem:[#allocation2 + $0x480] sm:$0xff] %v1440
  %1638 = vst [vmem:[#allocation2 + $0x488] sm:$0xff] %v1445
  %1639 = vst [vmem:[#allocation2 + $0x490] sm:$0xff] %v1450
  %1640 = vst [vmem:[#allocation2 + $0x498] sm:$0xff] %v1455
  %1641 = vst [vmem:[#allocation2 + $0x4a0] sm:$0xff] %v1460
  %1642 = vst [vmem:[#allocation2 + $0x4a8] sm:$0xff] %v1465
  %1643 = vst [vmem:[#allocation2 + $0x4b0] sm:$0xff] %v1470
  %1644 = vst [vmem:[#allocation2 + $0x4b8] sm:$0xff] %v1475
  %1645 = vst [vmem:[#allocation2 + $0x4c0] sm:$0xff] %v1480
  %1646 = vst [vmem:[#allocation2 + $0x4c8] sm:$0xff] %v1485
  %1647 = vst [vmem:[#allocation2 + $0x4d0] sm:$0xff] %v1490
  %v1648 = vld [vmem:[%s2] sm:$0xff]
  %v1649 = vld [vmem:[%s2 + $0x8] sm:$0xff]
  %v1650 = vld [vmem:[%s2 + $0x10] sm:$0xff]
  %v1651 = vld [vmem:[%s2 + $0x18] sm:$0xff]
  loop: start=0, step=1, limit=155
  $region26: #{lstm_tagger_forward.2} parent=0 // loop_pre_header
    _
  $region27: #{lstm_tagger_forward.2} parent=0 // loop_header
    %s1653 = sphi 0, %s1657
    %p1654 = scmp.ge.s32.totalorder %s1653, 155
    %v1658 = vphi 0.0, %v1763
    %v1659 = vphi 0.0, %v1757
  $region28: #{lstm_tagger_forward.2} parent=0 // loop_header_branch
    %1656 = sbr.rel (%p1654) target = $region32
  $region29: #{lstm_tagger_forward.2} parent=0 // loop_body
    %s1660 = smul.u32 %s1653, 8
    %s1661 = scalar_lea.vmem [#allocation2], %s1660
    %v1662 = vld [vmem:[%s1661] sm:$0xff]
    %1664 = vrot.lane.b32.xlu0 %v1658, 32
    %v1665 = vpop.permute.xlu0 %1664
    %vm1666 = vcmask 261120
    %v1667 = vsel %vm1666, %v1665, 0
    %1669 = vmatprep.subr.mxu0 0.0
    %1670 = vmatpush1.msra.mxu0 %v1648
    %1671 = vmatprep.subr.mxu0 0.0
    %1672 = vmatpush1.msra.mxu0 %v1649
    %1673 = vmatprep.subr.mxu0 0.0
    %1674 = vmatpush1.msra.mxu0 %v1650
    %1675 = vmatprep.subr.mxu0 0.0
    %1676 = vmatpush1.msra.mxu0 %v1651
    %1677 = vmatprep.subr.mxu0 0.0
    %1678 = vmatpush1.msra.mxu0 0.0
    %1679 = vmatprep.subr.mxu0 0.0
    %1680 = vmatpush1.msra.mxu0 0.0
    %1681 = vmatprep.subr.mxu0 0.0
    %1682 = vmatpush1.msra.mxu0 0.0
    %1683 = vmatprep.subr.mxu0 0.0
    %1684 = vmatpush1.msra.mxu0 0.0
    %1685 = vmatprep.subr.mxu0 0.0
    %1686 = vmatpush1.msra.mxu0 0.0
    %1687 = vmatprep.subr.mxu0 0.0
    %1688 = vmatpush1.msra.mxu0 0.0
    %1689 = vmatprep.subr.mxu0 0.0
    %1690 = vmatpush1.msra.mxu0 0.0
    %1691 = vmatprep.subr.mxu0 0.0
    %1692 = vmatpush1.msra.mxu0 0.0
    %1693 = vmatprep.subr.mxu0 0.0
    %1694 = vmatpush1.msra.mxu0 0.0
    %1695 = vmatprep.subr.mxu0 0.0
    %1696 = vmatpush1.msra.mxu0 0.0
    %1697 = vmatprep.subr.mxu0 0.0
    %1698 = vmatpush1.msra.mxu0 0.0
    %1699 = vmatprep.subr.mxu0 0.0
    %1700 = vmatpush1.msra.mxu0 0.0
    %1701 = vmatprep.subr.mxu0 0.0
    %1702 = vmatpush1.msra.mxu0 0.0
    %1703 = vmatprep.subr.mxu0 0.0
    %1704 = vmatpush1.msra.mxu0 0.0
    %1705 = vmatprep.subr.mxu0 0.0
    %1706 = vmatpush1.msra.mxu0 0.0
    %1707 = vmatprep.subr.mxu0 0.0
    %1708 = vmatpush1.msra.mxu0 0.0
    %1709 = vmatprep.subr.mxu0 0.0
    %1710 = vmatpush1.msra.mxu0 0.0
    %1711 = vmatprep.subr.mxu0 0.0
    %1712 = vmatpush1.msra.mxu0 0.0
    %1713 = vmatprep.subr.mxu0 0.0
    %1714 = vmatpush1.msra.mxu0 0.0
    %1715 = vmatprep.subr.mxu0 0.0
    %1716 = vmatpush1.msra.mxu0 0.0
    %1717 = vmatprep.subr.mxu0 0.0
    %1718 = vmatpush1.msra.mxu0 0.0
    %1719 = vmatprep.subr.mxu0 0.0
    %1720 = vmatpush1.msra.mxu0 0.0
    %1721 = vmatprep.subr.mxu0 0.0
    %1722 = vmatpush1.msra.mxu0 0.0
    %1723 = vmatprep.subr.mxu0 0.0
    %1724 = vmatpush1.msra.mxu0 0.0
    %1725 = vmatprep.subr.mxu0 0.0
    %1726 = vmatpush1.msra.mxu0 0.0
    %1727 = vmatprep.subr.mxu0 0.0
    %1728 = vmatpush1.msra.mxu0 0.0
    %1729 = vmatprep.subr.mxu0 0.0
    %1730 = vmatpush1.msra.mxu0 0.0
    %1731 = vmatprep.subr.mxu0 0.0
    %1732 = vmatpush1.msra.mxu0 0.0
    %1733 = vmatprep.mubr.f32.mxu0 0.0
    %1734 = vmatmul.mubr.f32.gmra.mrb[0].mxu0 %v1667
    %v1735 = vpop.f32.mrb[0].mxu0
    %v1736 = vadd.f32 0.0, %v1735
    %v1737 = vpop.f32.mrb[0].mxu0
    %1738 = vdwg.mxu0
    %v1739 = vadd.f32 %v1662, %v1736
    %v1740 = vxor.u32 %v1739, 2147483648
    %v1741 = vmul.f32 %v1740, 1.442695
    %v1742 = vpow.pop %v1741
    %v1743 = vadd.f32 %v1742, 1.0
    %v1744 = vrcp.pop %v1743
    %v1745 = vmul.f32 1.0, %v1744
    %v1746 = vtanh.pop %v1739
    %v1747 = vmul.f32 %v1745, %v1659
    %1749 = vrot.lane.b32.xlu0 %v1746, 64
    %v1750 = vpop.permute.xlu0 %1749
    %v1752 = vmul.f32 %v1745, %v1750
    %1754 = vrot.lane.b32.xlu0 %v1752, 32
    %v1755 = vpop.permute.xlu0 %1754
    %v1757 = vadd.f32 %v1747, %v1755
    %v1758 = vtanh.pop %v1757
    %1760 = vrot.lane.b32.xlu0 %v1758, 64
    %v1761 = vpop.permute.xlu0 %1760
    %v1763 = vmul.f32 %v1745, %v1761
    %1765 = vrot.lane.b32.xlu0 %v1763, 32
    %v1766 = vpop.permute.xlu0 %1765
    %s1768 = scalar_lea.vmem [#allocation3], %s1660
    %1769 = vst.msk [vmem:[%s1768] sm:$0xff] %vm1666, %v1766
  $region30: #{lstm_tagger_forward.2} parent=0 // loop_footer
    %s1657 = sadd.s32 1, %s1653
  $region31: #{lstm_tagger_forward.2} parent=0 // loop_footer_branch
    %1652 = sbr.rel target = $region27
  $region32: #{lstm_tagger_forward.2} parent=0 // loop_exit
    _
  %v1770 = vld [vmem:[#allocation3] sm:$0xff]
  %v1771 = vld [vmem:[#allocation3 + $0x8] sm:$0xff]
  %v1772 = vld [vmem:[#allocation3 + $0x10] sm:$0xff]
  %v1773 = vld [vmem:[#allocation3 + $0x18] sm:$0xff]
  %v1774 = vld [vmem:[#allocation3 + $0x20] sm:$0xff]
  %v1775 = vld [vmem:[#allocation3 + $0x28] sm:$0xff]
  %v1776 = vld [vmem:[#allocation3 + $0x30] sm:$0xff]
  %v1777 = vld [vmem:[#allocation3 + $0x38] sm:$0xff]
  %v1778 = vld [vmem:[#allocation3 + $0x40] sm:$0xff]
  %v1779 = vld [vmem:[#allocation3 + $0x48] sm:$0xff]
  %v1780 = vld [vmem:[#allocation3 + $0x50] sm:$0xff]
  %v1781 = vld [vmem:[#allocation3 + $0x58] sm:$0xff]
  %v1782 = vld [vmem:[#allocation3 + $0x60] sm:$0xff]
  %v1783 = vld [vmem:[#allocation3 + $0x68] sm:$0xff]
  %v1784 = vld [vmem:[#allocation3 + $0x70] sm:$0xff]
  %v1785 = vld [vmem:[#allocation3 + $0x78] sm:$0xff]
  %v1786 = vld [vmem:[#allocation3 + $0x80] sm:$0xff]
  %v1787 = vld [vmem:[#allocation3 + $0x88] sm:$0xff]
  %v1788 = vld [vmem:[#allocation3 + $0x90] sm:$0xff]
  %v1789 = vld [vmem:[#allocation3 + $0x98] sm:$0xff]
  %v1790 = vld [vmem:[#allocation3 + $0xa0] sm:$0xff]
  %v1791 = vld [vmem:[#allocation3 + $0xa8] sm:$0xff]
  %v1792 = vld [vmem:[#allocation3 + $0xb0] sm:$0xff]
  %v1793 = vld [vmem:[#allocation3 + $0xb8] sm:$0xff]
  %v1794 = vld [vmem:[#allocation3 + $0xc0] sm:$0xff]
  %v1795 = vld [vmem:[#allocation3 + $0xc8] sm:$0xff]
  %v1796 = vld [vmem:[#allocation3 + $0xd0] sm:$0xff]
  %v1797 = vld [vmem:[#allocation3 + $0xd8] sm:$0xff]
  %v1798 = vld [vmem:[#allocation3 + $0xe0] sm:$0xff]
  %v1799 = vld [vmem:[#allocation3 + $0xe8] sm:$0xff]
  %v1800 = vld [vmem:[#allocation3 + $0xf0] sm:$0xff]
  %v1801 = vld [vmem:[#allocation3 + $0xf8] sm:$0xff]
  %v1802 = vld [vmem:[#allocation3 + $0x100] sm:$0xff]
  %v1803 = vld [vmem:[#allocation3 + $0x108] sm:$0xff]
  %v1804 = vld [vmem:[#allocation3 + $0x110] sm:$0xff]
  %v1805 = vld [vmem:[#allocation3 + $0x118] sm:$0xff]
  %v1806 = vld [vmem:[#allocation3 + $0x120] sm:$0xff]
  %v1807 = vld [vmem:[#allocation3 + $0x128] sm:$0xff]
  %v1808 = vld [vmem:[#allocation3 + $0x130] sm:$0xff]
  %v1809 = vld [vmem:[#allocation3 + $0x138] sm:$0xff]
  %v1810 = vld [vmem:[#allocation3 + $0x140] sm:$0xff]
  %v1811 = vld [vmem:[#allocation3 + $0x148] sm:$0xff]
  %v1812 = vld [vmem:[#allocation3 + $0x150] sm:$0xff]
  %v1813 = vld [vmem:[#allocation3 + $0x158] sm:$0xff]
  %v1814 = vld [vmem:[#allocation3 + $0x160] sm:$0xff]
  %v1815 = vld [vmem:[#allocation3 + $0x168] sm:$0xff]
  %v1816 = vld [vmem:[#allocation3 + $0x170] sm:$0xff]
  %v1817 = vld [vmem:[#allocation3 + $0x178] sm:$0xff]
  %v1818 = vld [vmem:[#allocation3 + $0x180] sm:$0xff]
  %v1819 = vld [vmem:[#allocation3 + $0x188] sm:$0xff]
  %v1820 = vld [vmem:[#allocation3 + $0x190] sm:$0xff]
  %v1821 = vld [vmem:[#allocation3 + $0x198] sm:$0xff]
  %v1822 = vld [vmem:[#allocation3 + $0x1a0] sm:$0xff]
  %v1823 = vld [vmem:[#allocation3 + $0x1a8] sm:$0xff]
  %v1824 = vld [vmem:[#allocation3 + $0x1b0] sm:$0xff]
  %v1825 = vld [vmem:[#allocation3 + $0x1b8] sm:$0xff]
  %v1826 = vld [vmem:[#allocation3 + $0x1c0] sm:$0xff]
  %v1827 = vld [vmem:[#allocation3 + $0x1c8] sm:$0xff]
  %v1828 = vld [vmem:[#allocation3 + $0x1d0] sm:$0xff]
  %v1829 = vld [vmem:[#allocation3 + $0x1d8] sm:$0xff]
  %v1830 = vld [vmem:[#allocation3 + $0x1e0] sm:$0xff]
  %v1831 = vld [vmem:[#allocation3 + $0x1e8] sm:$0xff]
  %v1832 = vld [vmem:[#allocation3 + $0x1f0] sm:$0xff]
  %v1833 = vld [vmem:[#allocation3 + $0x1f8] sm:$0xff]
  %v1834 = vld [vmem:[#allocation3 + $0x200] sm:$0xff]
  %v1835 = vld [vmem:[#allocation3 + $0x208] sm:$0xff]
  %v1836 = vld [vmem:[#allocation3 + $0x210] sm:$0xff]
  %v1837 = vld [vmem:[#allocation3 + $0x218] sm:$0xff]
  %v1838 = vld [vmem:[#allocation3 + $0x220] sm:$0xff]
  %v1839 = vld [vmem:[#allocation3 + $0x228] sm:$0xff]
  %v1840 = vld [vmem:[#allocation3 + $0x230] sm:$0xff]
  %v1841 = vld [vmem:[#allocation3 + $0x238] sm:$0xff]
  %v1842 = vld [vmem:[#allocation3 + $0x240] sm:$0xff]
  %v1843 = vld [vmem:[#allocation3 + $0x248] sm:$0xff]
  %v1844 = vld [vmem:[#allocation3 + $0x250] sm:$0xff]
  %v1845 = vld [vmem:[#allocation3 + $0x258] sm:$0xff]
  %v1846 = vld [vmem:[#allocation3 + $0x260] sm:$0xff]
  %v1847 = vld [vmem:[#allocation3 + $0x268] sm:$0xff]
  %v1848 = vld [vmem:[#allocation3 + $0x270] sm:$0xff]
  %v1849 = vld [vmem:[#allocation3 + $0x278] sm:$0xff]
  %v1850 = vld [vmem:[#allocation3 + $0x280] sm:$0xff]
  %v1851 = vld [vmem:[#allocation3 + $0x288] sm:$0xff]
  %v1852 = vld [vmem:[#allocation3 + $0x290] sm:$0xff]
  %v1853 = vld [vmem:[#allocation3 + $0x298] sm:$0xff]
  %v1854 = vld [vmem:[#allocation3 + $0x2a0] sm:$0xff]
  %v1855 = vld [vmem:[#allocation3 + $0x2a8] sm:$0xff]
  %v1856 = vld [vmem:[#allocation3 + $0x2b0] sm:$0xff]
  %v1857 = vld [vmem:[#allocation3 + $0x2b8] sm:$0xff]
  %v1858 = vld [vmem:[#allocation3 + $0x2c0] sm:$0xff]
  %v1859 = vld [vmem:[#allocation3 + $0x2c8] sm:$0xff]
  %v1860 = vld [vmem:[#allocation3 + $0x2d0] sm:$0xff]
  %v1861 = vld [vmem:[#allocation3 + $0x2d8] sm:$0xff]
  %v1862 = vld [vmem:[#allocation3 + $0x2e0] sm:$0xff]
  %v1863 = vld [vmem:[#allocation3 + $0x2e8] sm:$0xff]
  %v1864 = vld [vmem:[#allocation3 + $0x2f0] sm:$0xff]
  %v1865 = vld [vmem:[#allocation3 + $0x2f8] sm:$0xff]
  %v1866 = vld [vmem:[#allocation3 + $0x300] sm:$0xff]
  %v1867 = vld [vmem:[#allocation3 + $0x308] sm:$0xff]
  %v1868 = vld [vmem:[#allocation3 + $0x310] sm:$0xff]
  %v1869 = vld [vmem:[#allocation3 + $0x318] sm:$0xff]
  %v1870 = vld [vmem:[#allocation3 + $0x320] sm:$0xff]
  %v1871 = vld [vmem:[#allocation3 + $0x328] sm:$0xff]
  %v1872 = vld [vmem:[#allocation3 + $0x330] sm:$0xff]
  %v1873 = vld [vmem:[#allocation3 + $0x338] sm:$0xff]
  %v1874 = vld [vmem:[#allocation3 + $0x340] sm:$0xff]
  %v1875 = vld [vmem:[#allocation3 + $0x348] sm:$0xff]
  %v1876 = vld [vmem:[#allocation3 + $0x350] sm:$0xff]
  %v1877 = vld [vmem:[#allocation3 + $0x358] sm:$0xff]
  %v1878 = vld [vmem:[#allocation3 + $0x360] sm:$0xff]
  %v1879 = vld [vmem:[#allocation3 + $0x368] sm:$0xff]
  %v1880 = vld [vmem:[#allocation3 + $0x370] sm:$0xff]
  %v1881 = vld [vmem:[#allocation3 + $0x378] sm:$0xff]
  %v1882 = vld [vmem:[#allocation3 + $0x380] sm:$0xff]
  %v1883 = vld [vmem:[#allocation3 + $0x388] sm:$0xff]
  %v1884 = vld [vmem:[#allocation3 + $0x390] sm:$0xff]
  %v1885 = vld [vmem:[#allocation3 + $0x398] sm:$0xff]
  %v1886 = vld [vmem:[#allocation3 + $0x3a0] sm:$0xff]
  %v1887 = vld [vmem:[#allocation3 + $0x3a8] sm:$0xff]
  %v1888 = vld [vmem:[#allocation3 + $0x3b0] sm:$0xff]
  %v1889 = vld [vmem:[#allocation3 + $0x3b8] sm:$0xff]
  %v1890 = vld [vmem:[#allocation3 + $0x3c0] sm:$0xff]
  %v1891 = vld [vmem:[#allocation3 + $0x3c8] sm:$0xff]
  %v1892 = vld [vmem:[#allocation3 + $0x3d0] sm:$0xff]
  %v1893 = vld [vmem:[#allocation3 + $0x3d8] sm:$0xff]
  %v1894 = vld [vmem:[#allocation3 + $0x3e0] sm:$0xff]
  %v1895 = vld [vmem:[#allocation3 + $0x3e8] sm:$0xff]
  %v1896 = vld [vmem:[#allocation3 + $0x3f0] sm:$0xff]
  %v1897 = vld [vmem:[#allocation3 + $0x3f8] sm:$0xff]
  %v1898 = vld [vmem:[#allocation3 + $0x400] sm:$0xff]
  %v1899 = vld [vmem:[#allocation3 + $0x408] sm:$0xff]
  %v1900 = vld [vmem:[#allocation3 + $0x410] sm:$0xff]
  %v1901 = vld [vmem:[#allocation3 + $0x418] sm:$0xff]
  %v1902 = vld [vmem:[#allocation3 + $0x420] sm:$0xff]
  %v1903 = vld [vmem:[#allocation3 + $0x428] sm:$0xff]
  %v1904 = vld [vmem:[#allocation3 + $0x430] sm:$0xff]
  %v1905 = vld [vmem:[#allocation3 + $0x438] sm:$0xff]
  %v1906 = vld [vmem:[#allocation3 + $0x440] sm:$0xff]
  %v1907 = vld [vmem:[#allocation3 + $0x448] sm:$0xff]
  %v1908 = vld [vmem:[#allocation3 + $0x450] sm:$0xff]
  %v1909 = vld [vmem:[#allocation3 + $0x458] sm:$0xff]
  %v1910 = vld [vmem:[#allocation3 + $0x460] sm:$0xff]
  %v1911 = vld [vmem:[#allocation3 + $0x468] sm:$0xff]
  %v1912 = vld [vmem:[#allocation3 + $0x470] sm:$0xff]
  %v1913 = vld [vmem:[#allocation3 + $0x478] sm:$0xff]
  %v1914 = vld [vmem:[#allocation3 + $0x480] sm:$0xff]
  %v1915 = vld [vmem:[#allocation3 + $0x488] sm:$0xff]
  %v1916 = vld [vmem:[#allocation3 + $0x490] sm:$0xff]
  %v1917 = vld [vmem:[#allocation3 + $0x498] sm:$0xff]
  %v1918 = vld [vmem:[#allocation3 + $0x4a0] sm:$0xff]
  %v1919 = vld [vmem:[#allocation3 + $0x4a8] sm:$0xff]
  %v1920 = vld [vmem:[#allocation3 + $0x4b0] sm:$0xff]
  %v1921 = vld [vmem:[#allocation3 + $0x4b8] sm:$0xff]
  %v1922 = vld [vmem:[#allocation3 + $0x4c0] sm:$0xff]
  %v1923 = vld [vmem:[#allocation3 + $0x4c8] sm:$0xff]
  %v1924 = vld [vmem:[#allocation3 + $0x4d0] sm:$0xff]
  %v1925 = vld [vmem:[%s4] sm:$0xff]
  %v1926 = vld [vmem:[%s4 + $0x8] sm:$0xff]
  %v1927 = vld [vmem:[%s4 + $0x10] sm:$0xff]
  %v1928 = vld [vmem:[%s4 + $0x18] sm:$0xff]
  %v1929 = vld [vmem:[%s5] sm:$0x1]
  %v1931 = vlaneseq
  %v1932 = vshrl.u32 %v1931, 7
  %v1933 = vsub.s32 0, %v1932
  %v1934 = vrot.slane %v1929, %v1933
  %vm1936 = vcmask 261120
  %v1938 = vsel %vm1936, %v1770, 0
  %v1941 = vsel %vm1936, %v1771, 0
  %v1944 = vsel %vm1936, %v1772, 0
  %v1947 = vsel %vm1936, %v1773, 0
  %v1950 = vsel %vm1936, %v1774, 0
  %v1953 = vsel %vm1936, %v1775, 0
  %v1956 = vsel %vm1936, %v1776, 0
  %v1959 = vsel %vm1936, %v1777, 0
  %v1962 = vsel %vm1936, %v1778, 0
  %v1965 = vsel %vm1936, %v1779, 0
  %v1968 = vsel %vm1936, %v1780, 0
  %v1971 = vsel %vm1936, %v1781, 0
  %v1974 = vsel %vm1936, %v1782, 0
  %v1977 = vsel %vm1936, %v1783, 0
  %v1980 = vsel %vm1936, %v1784, 0
  %v1983 = vsel %vm1936, %v1785, 0
  %v1986 = vsel %vm1936, %v1786, 0
  %v1989 = vsel %vm1936, %v1787, 0
  %v1992 = vsel %vm1936, %v1788, 0
  %v1995 = vsel %vm1936, %v1789, 0
  %v1998 = vsel %vm1936, %v1790, 0
  %v2001 = vsel %vm1936, %v1791, 0
  %v2004 = vsel %vm1936, %v1792, 0
  %v2007 = vsel %vm1936, %v1793, 0
  %v2010 = vsel %vm1936, %v1794, 0
  %v2013 = vsel %vm1936, %v1795, 0
  %v2016 = vsel %vm1936, %v1796, 0
  %v2019 = vsel %vm1936, %v1797, 0
  %v2022 = vsel %vm1936, %v1798, 0
  %v2025 = vsel %vm1936, %v1799, 0
  %v2028 = vsel %vm1936, %v1800, 0
  %v2031 = vsel %vm1936, %v1801, 0
  %v2034 = vsel %vm1936, %v1802, 0
  %v2037 = vsel %vm1936, %v1803, 0
  %v2040 = vsel %vm1936, %v1804, 0
  %v2043 = vsel %vm1936, %v1805, 0
  %v2046 = vsel %vm1936, %v1806, 0
  %v2049 = vsel %vm1936, %v1807, 0
  %v2052 = vsel %vm1936, %v1808, 0
  %v2055 = vsel %vm1936, %v1809, 0
  %v2058 = vsel %vm1936, %v1810, 0
  %v2061 = vsel %vm1936, %v1811, 0
  %v2064 = vsel %vm1936, %v1812, 0
  %v2067 = vsel %vm1936, %v1813, 0
  %v2070 = vsel %vm1936, %v1814, 0
  %v2073 = vsel %vm1936, %v1815, 0
  %v2076 = vsel %vm1936, %v1816, 0
  %v2079 = vsel %vm1936, %v1817, 0
  %v2082 = vsel %vm1936, %v1818, 0
  %v2085 = vsel %vm1936, %v1819, 0
  %v2088 = vsel %vm1936, %v1820, 0
  %v2091 = vsel %vm1936, %v1821, 0
  %v2094 = vsel %vm1936, %v1822, 0
  %v2097 = vsel %vm1936, %v1823, 0
  %v2100 = vsel %vm1936, %v1824, 0
  %v2103 = vsel %vm1936, %v1825, 0
  %v2106 = vsel %vm1936, %v1826, 0
  %v2109 = vsel %vm1936, %v1827, 0
  %v2112 = vsel %vm1936, %v1828, 0
  %v2115 = vsel %vm1936, %v1829, 0
  %v2118 = vsel %vm1936, %v1830, 0
  %v2121 = vsel %vm1936, %v1831, 0
  %v2124 = vsel %vm1936, %v1832, 0
  %v2127 = vsel %vm1936, %v1833, 0
  %v2130 = vsel %vm1936, %v1834, 0
  %v2133 = vsel %vm1936, %v1835, 0
  %v2136 = vsel %vm1936, %v1836, 0
  %v2139 = vsel %vm1936, %v1837, 0
  %v2142 = vsel %vm1936, %v1838, 0
  %v2145 = vsel %vm1936, %v1839, 0
  %v2148 = vsel %vm1936, %v1840, 0
  %v2151 = vsel %vm1936, %v1841, 0
  %v2154 = vsel %vm1936, %v1842, 0
  %v2157 = vsel %vm1936, %v1843, 0
  %v2160 = vsel %vm1936, %v1844, 0
  %v2163 = vsel %vm1936, %v1845, 0
  %v2166 = vsel %vm1936, %v1846, 0
  %v2169 = vsel %vm1936, %v1847, 0
  %v2172 = vsel %vm1936, %v1848, 0
  %v2175 = vsel %vm1936, %v1849, 0
  %v2178 = vsel %vm1936, %v1850, 0
  %v2181 = vsel %vm1936, %v1851, 0
  %v2184 = vsel %vm1936, %v1852, 0
  %v2187 = vsel %vm1936, %v1853, 0
  %v2190 = vsel %vm1936, %v1854, 0
  %v2193 = vsel %vm1936, %v1855, 0
  %v2196 = vsel %vm1936, %v1856, 0
  %v2199 = vsel %vm1936, %v1857, 0
  %v2202 = vsel %vm1936, %v1858, 0
  %v2205 = vsel %vm1936, %v1859, 0
  %v2208 = vsel %vm1936, %v1860, 0
  %v2211 = vsel %vm1936, %v1861, 0
  %v2214 = vsel %vm1936, %v1862, 0
  %v2217 = vsel %vm1936, %v1863, 0
  %v2220 = vsel %vm1936, %v1864, 0
  %v2223 = vsel %vm1936, %v1865, 0
  %v2226 = vsel %vm1936, %v1866, 0
  %v2229 = vsel %vm1936, %v1867, 0
  %v2232 = vsel %vm1936, %v1868, 0
  %v2235 = vsel %vm1936, %v1869, 0
  %v2238 = vsel %vm1936, %v1870, 0
  %v2241 = vsel %vm1936, %v1871, 0
  %v2244 = vsel %vm1936, %v1872, 0
  %v2247 = vsel %vm1936, %v1873, 0
  %v2250 = vsel %vm1936, %v1874, 0
  %v2253 = vsel %vm1936, %v1875, 0
  %v2256 = vsel %vm1936, %v1876, 0
  %v2259 = vsel %vm1936, %v1877, 0
  %v2262 = vsel %vm1936, %v1878, 0
  %v2265 = vsel %vm1936, %v1879, 0
  %v2268 = vsel %vm1936, %v1880, 0
  %v2271 = vsel %vm1936, %v1881, 0
  %v2274 = vsel %vm1936, %v1882, 0
  %v2277 = vsel %vm1936, %v1883, 0
  %v2280 = vsel %vm1936, %v1884, 0
  %v2283 = vsel %vm1936, %v1885, 0
  %v2286 = vsel %vm1936, %v1886, 0
  %v2289 = vsel %vm1936, %v1887, 0
  %v2292 = vsel %vm1936, %v1888, 0
  %v2295 = vsel %vm1936, %v1889, 0
  %v2298 = vsel %vm1936, %v1890, 0
  %v2301 = vsel %vm1936, %v1891, 0
  %v2304 = vsel %vm1936, %v1892, 0
  %v2307 = vsel %vm1936, %v1893, 0
  %v2310 = vsel %vm1936, %v1894, 0
  %v2313 = vsel %vm1936, %v1895, 0
  %v2316 = vsel %vm1936, %v1896, 0
  %v2319 = vsel %vm1936, %v1897, 0
  %v2322 = vsel %vm1936, %v1898, 0
  %v2325 = vsel %vm1936, %v1899, 0
  %v2328 = vsel %vm1936, %v1900, 0
  %v2331 = vsel %vm1936, %v1901, 0
  %v2334 = vsel %vm1936, %v1902, 0
  %v2337 = vsel %vm1936, %v1903, 0
  %v2340 = vsel %vm1936, %v1904, 0
  %v2343 = vsel %vm1936, %v1905, 0
  %v2346 = vsel %vm1936, %v1906, 0
  %v2349 = vsel %vm1936, %v1907, 0
  %v2352 = vsel %vm1936, %v1908, 0
  %v2355 = vsel %vm1936, %v1909, 0
  %v2358 = vsel %vm1936, %v1910, 0
  %v2361 = vsel %vm1936, %v1911, 0
  %v2364 = vsel %vm1936, %v1912, 0
  %v2367 = vsel %vm1936, %v1913, 0
  %v2370 = vsel %vm1936, %v1914, 0
  %v2373 = vsel %vm1936, %v1915, 0
  %v2376 = vsel %vm1936, %v1916, 0
  %v2379 = vsel %vm1936, %v1917, 0
  %v2382 = vsel %vm1936, %v1918, 0
  %v2385 = vsel %vm1936, %v1919, 0
  %v2388 = vsel %vm1936, %v1920, 0
  %v2391 = vsel %vm1936, %v1921, 0
  %v2394 = vsel %vm1936, %v1922, 0
  %v2397 = vsel %vm1936, %v1923, 0
  %v2400 = vsel %vm1936, %v1924, 0
  %2402 = vmatprep.subr.mxu0 0.0
  %2403 = vmatpush1.msra.mxu0 %v1925
  %2404 = vmatprep.subr.mxu0 0.0
  %2405 = vmatpush1.msra.mxu0 %v1926
  %2406 = vmatprep.subr.mxu0 0.0
  %2407 = vmatpush1.msra.mxu0 %v1927
  %2408 = vmatprep.subr.mxu0 0.0
  %2409 = vmatpush1.msra.mxu0 %v1928
  %2410 = vmatprep.subr.mxu0 0.0
  %2411 = vmatpush1.msra.mxu0 0.0
  %2412 = vmatprep.subr.mxu0 0.0
  %2413 = vmatpush1.msra.mxu0 0.0
  %2414 = vmatprep.subr.mxu0 0.0
  %2415 = vmatpush1.msra.mxu0 0.0
  %2416 = vmatprep.subr.mxu0 0.0
  %2417 = vmatpush1.msra.mxu0 0.0
  %2418 = vmatprep.subr.mxu0 0.0
  %2419 = vmatpush1.msra.mxu0 0.0
  %2420 = vmatprep.subr.mxu0 0.0
  %2421 = vmatpush1.msra.mxu0 0.0
  %2422 = vmatprep.subr.mxu0 0.0
  %2423 = vmatpush1.msra.mxu0 0.0
  %2424 = vmatprep.subr.mxu0 0.0
  %2425 = vmatpush1.msra.mxu0 0.0
  %2426 = vmatprep.subr.mxu0 0.0
  %2427 = vmatpush1.msra.mxu0 0.0
  %2428 = vmatprep.subr.mxu0 0.0
  %2429 = vmatpush1.msra.mxu0 0.0
  %2430 = vmatprep.subr.mxu0 0.0
  %2431 = vmatpush1.msra.mxu0 0.0
  %2432 = vmatprep.subr.mxu0 0.0
  %2433 = vmatpush1.msra.mxu0 0.0
  %2434 = vmatprep.subr.mxu0 0.0
  %2435 = vmatpush1.msra.mxu0 0.0
  %2436 = vmatprep.subr.mxu0 0.0
  %2437 = vmatpush1.msra.mxu0 0.0
  %2438 = vmatprep.subr.mxu0 0.0
  %2439 = vmatpush1.msra.mxu0 0.0
  %2440 = vmatprep.subr.mxu0 0.0
  %2441 = vmatpush1.msra.mxu0 0.0
  %2442 = vmatprep.subr.mxu0 0.0
  %2443 = vmatpush1.msra.mxu0 0.0
  %2444 = vmatprep.subr.mxu0 0.0
  %2445 = vmatpush1.msra.mxu0 0.0
  %2446 = vmatprep.subr.mxu0 0.0
  %2447 = vmatpush1.msra.mxu0 0.0
  %2448 = vmatprep.subr.mxu0 0.0
  %2449 = vmatpush1.msra.mxu0 0.0
  %2450 = vmatprep.subr.mxu0 0.0
  %2451 = vmatpush1.msra.mxu0 0.0
  %2452 = vmatprep.subr.mxu0 0.0
  %2453 = vmatpush1.msra.mxu0 0.0
  %2454 = vmatprep.subr.mxu0 0.0
  %2455 = vmatpush1.msra.mxu0 0.0
  %2456 = vmatprep.subr.mxu0 0.0
  %2457 = vmatpush1.msra.mxu0 0.0
  %2458 = vmatprep.subr.mxu0 0.0
  %2459 = vmatpush1.msra.mxu0 0.0
  %2460 = vmatprep.subr.mxu0 0.0
  %2461 = vmatpush1.msra.mxu0 0.0
  %2462 = vmatprep.subr.mxu0 0.0
  %2463 = vmatpush1.msra.mxu0 0.0
  %2464 = vmatprep.subr.mxu0 0.0
  %2465 = vmatpush1.msra.mxu0 0.0
  %2466 = vmatprep.mubr.f32.mxu0 0.0
  %2467 = vmatmul.mubr.f32.gmra.mrb[0].mxu0 %v1938
  %v2468 = vpop.f32.mrb[0].mxu0
  %v2469 = vadd.f32 %v1934, %v2468
  %v2470 = vpop.f32.mrb[0].mxu0
  %2471 = vmatprep.mubr.f32.mxu0 0.0
  %2472 = vmatmul.mubr.f32.gmra.mrb[0].mxu0 %v1941
  %v2473 = vpop.f32.mrb[0].mxu0
  %v2474 = vadd.f32 %v1934, %v2473
  %v2475 = vpop.f32.mrb[0].mxu0
  %2476 = vmatprep.mubr.f32.mxu0 0.0
  %2477 = vmatmul.mubr.f32.gmra.mrb[0].mxu0 %v1944
  %v2478 = vpop.f32.mrb[0].mxu0
  %v2479 = vadd.f32 %v1934, %v2478
  %v2480 = vpop.f32.mrb[0].mxu0
  %2481 = vmatprep.mubr.f32.mxu0 0.0
  %2482 = vmatmul.mubr.f32.gmra.mrb[0].mxu0 %v1947
  %v2483 = vpop.f32.mrb[0].mxu0
  %v2484 = vadd.f32 %v1934, %v2483
  %v2485 = vpop.f32.mrb[0].mxu0
  %2486 = vmatprep.mubr.f32.mxu0 0.0
  %2487 = vmatmul.mubr.f32.gmra.mrb[0].mxu0 %v1950
  %v2488 = vpop.f32.mrb[0].mxu0
  %v2489 = vadd.f32 %v1934, %v2488
  %v2490 = vpop.f32.mrb[0].mxu0
  %2491 = vmatprep.mubr.f32.mxu0 0.0
  %2492 = vmatmul.mubr.f32.gmra.mrb[0].mxu0 %v1953
  %v2493 = vpop.f32.mrb[0].mxu0
  %v2494 = vadd.f32 %v1934, %v2493
  %v2495 = vpop.f32.mrb[0].mxu0
  %2496 = vmatprep.mubr.f32.mxu0 0.0
  %2497 = vmatmul.mubr.f32.gmra.mrb[0].mxu0 %v1956
  %v2498 = vpop.f32.mrb[0].mxu0
  %v2499 = vadd.f32 %v1934, %v2498
  %v2500 = vpop.f32.mrb[0].mxu0
  %2501 = vmatprep.mubr.f32.mxu0 0.0
  %2502 = vmatmul.mubr.f32.gmra.mrb[0].mxu0 %v1959
  %v2503 = vpop.f32.mrb[0].mxu0
  %v2504 = vadd.f32 %v1934, %v2503
  %v2505 = vpop.f32.mrb[0].mxu0
  %2506 = vmatprep.mubr.f32.mxu0 0.0
  %2507 = vmatmul.mubr.f32.gmra.mrb[0].mxu0 %v1962
  %v2508 = vpop.f32.mrb[0].mxu0
  %v2509 = vadd.f32 %v1934, %v2508
  %v2510 = vpop.f32.mrb[0].mxu0
  %2511 = vmatprep.mubr.f32.mxu0 0.0
  %2512 = vmatmul.mubr.f32.gmra.mrb[0].mxu0 %v1965
  %v2513 = vpop.f32.mrb[0].mxu0
  %v2514 = vadd.f32 %v1934, %v2513
  %v2515 = vpop.f32.mrb[0].mxu0
  %2516 = vmatprep.mubr.f32.mxu0 0.0
  %2517 = vmatmul.mubr.f32.gmra.mrb[0].mxu0 %v1968
  %v2518 = vpop.f32.mrb[0].mxu0
  %v2519 = vadd.f32 %v1934, %v2518
  %v2520 = vpop.f32.mrb[0].mxu0
  %2521 = vmatprep.mubr.f32.mxu0 0.0
  %2522 = vmatmul.mubr.f32.gmra.mrb[0].mxu0 %v1971
  %v2523 = vpop.f32.mrb[0].mxu0
  %v2524 = vadd.f32 %v1934, %v2523
  %v2525 = vpop.f32.mrb[0].mxu0
  %2526 = vmatprep.mubr.f32.mxu0 0.0
  %2527 = vmatmul.mubr.f32.gmra.mrb[0].mxu0 %v1974
  %v2528 = vpop.f32.mrb[0].mxu0
  %v2529 = vadd.f32 %v1934, %v2528
  %v2530 = vpop.f32.mrb[0].mxu0
  %2531 = vmatprep.mubr.f32.mxu0 0.0
  %2532 = vmatmul.mubr.f32.gmra.mrb[0].mxu0 %v1977
  %v2533 = vpop.f32.mrb[0].mxu0
  %v2534 = vadd.f32 %v1934, %v2533
  %v2535 = vpop.f32.mrb[0].mxu0
  %2536 = vmatprep.mubr.f32.mxu0 0.0
  %2537 = vmatmul.mubr.f32.gmra.mrb[0].mxu0 %v1980
  %v2538 = vpop.f32.mrb[0].mxu0
  %v2539 = vadd.f32 %v1934, %v2538
  %v2540 = vpop.f32.mrb[0].mxu0
  %2541 = vmatprep.mubr.f32.mxu0 0.0
  %2542 = vmatmul.mubr.f32.gmra.mrb[0].mxu0 %v1983
  %v2543 = vpop.f32.mrb[0].mxu0
  %v2544 = vadd.f32 %v1934, %v2543
  %v2545 = vpop.f32.mrb[0].mxu0
  %2546 = vmatprep.mubr.f32.mxu0 0.0
  %2547 = vmatmul.mubr.f32.gmra.mrb[0].mxu0 %v1986
  %v2548 = vpop.f32.mrb[0].mxu0
  %v2549 = vadd.f32 %v1934, %v2548
  %v2550 = vpop.f32.mrb[0].mxu0
  %2551 = vmatprep.mubr.f32.mxu0 0.0
  %2552 = vmatmul.mubr.f32.gmra.mrb[0].mxu0 %v1989
  %v2553 = vpop.f32.mrb[0].mxu0
  %v2554 = vadd.f32 %v1934, %v2553
  %v2555 = vpop.f32.mrb[0].mxu0
  %2556 = vmatprep.mubr.f32.mxu0 0.0
  %2557 = vmatmul.mubr.f32.gmra.mrb[0].mxu0 %v1992
  %v2558 = vpop.f32.mrb[0].mxu0
  %v2559 = vadd.f32 %v1934, %v2558
  %v2560 = vpop.f32.mrb[0].mxu0
  %2561 = vmatprep.mubr.f32.mxu0 0.0
  %2562 = vmatmul.mubr.f32.gmra.mrb[0].mxu0 %v1995
  %v2563 = vpop.f32.mrb[0].mxu0
  %v2564 = vadd.f32 %v1934, %v2563
  %v2565 = vpop.f32.mrb[0].mxu0
  %2566 = vmatprep.mubr.f32.mxu0 0.0
  %2567 = vmatmul.mubr.f32.gmra.mrb[0].mxu0 %v1998
  %v2568 = vpop.f32.mrb[0].mxu0
  %v2569 = vadd.f32 %v1934, %v2568
  %v2570 = vpop.f32.mrb[0].mxu0
  %2571 = vmatprep.mubr.f32.mxu0 0.0
  %2572 = vmatmul.mubr.f32.gmra.mrb[0].mxu0 %v2001
  %v2573 = vpop.f32.mrb[0].mxu0
  %v2574 = vadd.f32 %v1934, %v2573
  %v2575 = vpop.f32.mrb[0].mxu0
  %2576 = vmatprep.mubr.f32.mxu0 0.0
  %2577 = vmatmul.mubr.f32.gmra.mrb[0].mxu0 %v2004
  %v2578 = vpop.f32.mrb[0].mxu0
  %v2579 = vadd.f32 %v1934, %v2578
  %v2580 = vpop.f32.mrb[0].mxu0
  %2581 = vmatprep.mubr.f32.mxu0 0.0
  %2582 = vmatmul.mubr.f32.gmra.mrb[0].mxu0 %v2007
  %v2583 = vpop.f32.mrb[0].mxu0
  %v2584 = vadd.f32 %v1934, %v2583
  %v2585 = vpop.f32.mrb[0].mxu0
  %2586 = vmatprep.mubr.f32.mxu0 0.0
  %2587 = vmatmul.mubr.f32.gmra.mrb[0].mxu0 %v2010
  %v2588 = vpop.f32.mrb[0].mxu0
  %v2589 = vadd.f32 %v1934, %v2588
  %v2590 = vpop.f32.mrb[0].mxu0
  %2591 = vmatprep.mubr.f32.mxu0 0.0
  %2592 = vmatmul.mubr.f32.gmra.mrb[0].mxu0 %v2013
  %v2593 = vpop.f32.mrb[0].mxu0
  %v2594 = vadd.f32 %v1934, %v2593
  %v2595 = vpop.f32.mrb[0].mxu0
  %2596 = vmatprep.mubr.f32.mxu0 0.0
  %2597 = vmatmul.mubr.f32.gmra.mrb[0].mxu0 %v2016
  %v2598 = vpop.f32.mrb[0].mxu0
  %v2599 = vadd.f32 %v1934, %v2598
  %v2600 = vpop.f32.mrb[0].mxu0
  %2601 = vmatprep.mubr.f32.mxu0 0.0
  %2602 = vmatmul.mubr.f32.gmra.mrb[0].mxu0 %v2019
  %v2603 = vpop.f32.mrb[0].mxu0
  %v2604 = vadd.f32 %v1934, %v2603
  %v2605 = vpop.f32.mrb[0].mxu0
  %2606 = vmatprep.mubr.f32.mxu0 0.0
  %2607 = vmatmul.mubr.f32.gmra.mrb[0].mxu0 %v2022
  %v2608 = vpop.f32.mrb[0].mxu0
  %v2609 = vadd.f32 %v1934, %v2608
  %v2610 = vpop.f32.mrb[0].mxu0
  %2611 = vmatprep.mubr.f32.mxu0 0.0
  %2612 = vmatmul.mubr.f32.gmra.mrb[0].mxu0 %v2025
  %v2613 = vpop.f32.mrb[0].mxu0
  %v2614 = vadd.f32 %v1934, %v2613
  %v2615 = vpop.f32.mrb[0].mxu0
  %2616 = vmatprep.mubr.f32.mxu0 0.0
  %2617 = vmatmul.mubr.f32.gmra.mrb[0].mxu0 %v2028
  %v2618 = vpop.f32.mrb[0].mxu0
  %v2619 = vadd.f32 %v1934, %v2618
  %v2620 = vpop.f32.mrb[0].mxu0
  %2621 = vmatprep.mubr.f32.mxu0 0.0
  %2622 = vmatmul.mubr.f32.gmra.mrb[0].mxu0 %v2031
  %v2623 = vpop.f32.mrb[0].mxu0
  %v2624 = vadd.f32 %v1934, %v2623
  %v2625 = vpop.f32.mrb[0].mxu0
  %2626 = vmatprep.mubr.f32.mxu0 0.0
  %2627 = vmatmul.mubr.f32.gmra.mrb[0].mxu0 %v2034
  %v2628 = vpop.f32.mrb[0].mxu0
  %v2629 = vadd.f32 %v1934, %v2628
  %v2630 = vpop.f32.mrb[0].mxu0
  %2631 = vmatprep.mubr.f32.mxu0 0.0
  %2632 = vmatmul.mubr.f32.gmra.mrb[0].mxu0 %v2037
  %v2633 = vpop.f32.mrb[0].mxu0
  %v2634 = vadd.f32 %v1934, %v2633
  %v2635 = vpop.f32.mrb[0].mxu0
  %2636 = vmatprep.mubr.f32.mxu0 0.0
  %2637 = vmatmul.mubr.f32.gmra.mrb[0].mxu0 %v2040
  %v2638 = vpop.f32.mrb[0].mxu0
  %v2639 = vadd.f32 %v1934, %v2638
  %v2640 = vpop.f32.mrb[0].mxu0
  %2641 = vmatprep.mubr.f32.mxu0 0.0
  %2642 = vmatmul.mubr.f32.gmra.mrb[0].mxu0 %v2043
  %v2643 = vpop.f32.mrb[0].mxu0
  %v2644 = vadd.f32 %v1934, %v2643
  %v2645 = vpop.f32.mrb[0].mxu0
  %2646 = vmatprep.mubr.f32.mxu0 0.0
  %2647 = vmatmul.mubr.f32.gmra.mrb[0].mxu0 %v2046
  %v2648 = vpop.f32.mrb[0].mxu0
  %v2649 = vadd.f32 %v1934, %v2648
  %v2650 = vpop.f32.mrb[0].mxu0
  %2651 = vmatprep.mubr.f32.mxu0 0.0
  %2652 = vmatmul.mubr.f32.gmra.mrb[0].mxu0 %v2049
  %v2653 = vpop.f32.mrb[0].mxu0
  %v2654 = vadd.f32 %v1934, %v2653
  %v2655 = vpop.f32.mrb[0].mxu0
  %2656 = vmatprep.mubr.f32.mxu0 0.0
  %2657 = vmatmul.mubr.f32.gmra.mrb[0].mxu0 %v2052
  %v2658 = vpop.f32.mrb[0].mxu0
  %v2659 = vadd.f32 %v1934, %v2658
  %v2660 = vpop.f32.mrb[0].mxu0
  %2661 = vmatprep.mubr.f32.mxu0 0.0
  %2662 = vmatmul.mubr.f32.gmra.mrb[0].mxu0 %v2055
  %v2663 = vpop.f32.mrb[0].mxu0
  %v2664 = vadd.f32 %v1934, %v2663
  %v2665 = vpop.f32.mrb[0].mxu0
  %2666 = vmatprep.mubr.f32.mxu0 0.0
  %2667 = vmatmul.mubr.f32.gmra.mrb[0].mxu0 %v2058
  %v2668 = vpop.f32.mrb[0].mxu0
  %v2669 = vadd.f32 %v1934, %v2668
  %v2670 = vpop.f32.mrb[0].mxu0
  %2671 = vmatprep.mubr.f32.mxu0 0.0
  %2672 = vmatmul.mubr.f32.gmra.mrb[0].mxu0 %v2061
  %v2673 = vpop.f32.mrb[0].mxu0
  %v2674 = vadd.f32 %v1934, %v2673
  %v2675 = vpop.f32.mrb[0].mxu0
  %2676 = vmatprep.mubr.f32.mxu0 0.0
  %2677 = vmatmul.mubr.f32.gmra.mrb[0].mxu0 %v2064
  %v2678 = vpop.f32.mrb[0].mxu0
  %v2679 = vadd.f32 %v1934, %v2678
  %v2680 = vpop.f32.mrb[0].mxu0
  %2681 = vmatprep.mubr.f32.mxu0 0.0
  %2682 = vmatmul.mubr.f32.gmra.mrb[0].mxu0 %v2067
  %v2683 = vpop.f32.mrb[0].mxu0
  %v2684 = vadd.f32 %v1934, %v2683
  %v2685 = vpop.f32.mrb[0].mxu0
  %2686 = vmatprep.mubr.f32.mxu0 0.0
  %2687 = vmatmul.mubr.f32.gmra.mrb[0].mxu0 %v2070
  %v2688 = vpop.f32.mrb[0].mxu0
  %v2689 = vadd.f32 %v1934, %v2688
  %v2690 = vpop.f32.mrb[0].mxu0
  %2691 = vmatprep.mubr.f32.mxu0 0.0
  %2692 = vmatmul.mubr.f32.gmra.mrb[0].mxu0 %v2073
  %v2693 = vpop.f32.mrb[0].mxu0
  %v2694 = vadd.f32 %v1934, %v2693
  %v2695 = vpop.f32.mrb[0].mxu0
  %2696 = vmatprep.mubr.f32.mxu0 0.0
  %2697 = vmatmul.mubr.f32.gmra.mrb[0].mxu0 %v2076
  %v2698 = vpop.f32.mrb[0].mxu0
  %v2699 = vadd.f32 %v1934, %v2698
  %v2700 = vpop.f32.mrb[0].mxu0
  %2701 = vmatprep.mubr.f32.mxu0 0.0
  %2702 = vmatmul.mubr.f32.gmra.mrb[0].mxu0 %v2079
  %v2703 = vpop.f32.mrb[0].mxu0
  %v2704 = vadd.f32 %v1934, %v2703
  %v2705 = vpop.f32.mrb[0].mxu0
  %2706 = vmatprep.mubr.f32.mxu0 0.0
  %2707 = vmatmul.mubr.f32.gmra.mrb[0].mxu0 %v2082
  %v2708 = vpop.f32.mrb[0].mxu0
  %v2709 = vadd.f32 %v1934, %v2708
  %v2710 = vpop.f32.mrb[0].mxu0
  %2711 = vmatprep.mubr.f32.mxu0 0.0
  %2712 = vmatmul.mubr.f32.gmra.mrb[0].mxu0 %v2085
  %v2713 = vpop.f32.mrb[0].mxu0
  %v2714 = vadd.f32 %v1934, %v2713
  %v2715 = vpop.f32.mrb[0].mxu0
  %2716 = vmatprep.mubr.f32.mxu0 0.0
  %2717 = vmatmul.mubr.f32.gmra.mrb[0].mxu0 %v2088
  %v2718 = vpop.f32.mrb[0].mxu0
  %v2719 = vadd.f32 %v1934, %v2718
  %v2720 = vpop.f32.mrb[0].mxu0
  %2721 = vmatprep.mubr.f32.mxu0 0.0
  %2722 = vmatmul.mubr.f32.gmra.mrb[0].mxu0 %v2091
  %v2723 = vpop.f32.mrb[0].mxu0
  %v2724 = vadd.f32 %v1934, %v2723
  %v2725 = vpop.f32.mrb[0].mxu0
  %2726 = vmatprep.mubr.f32.mxu0 0.0
  %2727 = vmatmul.mubr.f32.gmra.mrb[0].mxu0 %v2094
  %v2728 = vpop.f32.mrb[0].mxu0
  %v2729 = vadd.f32 %v1934, %v2728
  %v2730 = vpop.f32.mrb[0].mxu0
  %2731 = vmatprep.mubr.f32.mxu0 0.0
  %2732 = vmatmul.mubr.f32.gmra.mrb[0].mxu0 %v2097
  %v2733 = vpop.f32.mrb[0].mxu0
  %v2734 = vadd.f32 %v1934, %v2733
  %v2735 = vpop.f32.mrb[0].mxu0
  %2736 = vmatprep.mubr.f32.mxu0 0.0
  %2737 = vmatmul.mubr.f32.gmra.mrb[0].mxu0 %v2100
  %v2738 = vpop.f32.mrb[0].mxu0
  %v2739 = vadd.f32 %v1934, %v2738
  %v2740 = vpop.f32.mrb[0].mxu0
  %2741 = vmatprep.mubr.f32.mxu0 0.0
  %2742 = vmatmul.mubr.f32.gmra.mrb[0].mxu0 %v2103
  %v2743 = vpop.f32.mrb[0].mxu0
  %v2744 = vadd.f32 %v1934, %v2743
  %v2745 = vpop.f32.mrb[0].mxu0
  %2746 = vmatprep.mubr.f32.mxu0 0.0
  %2747 = vmatmul.mubr.f32.gmra.mrb[0].mxu0 %v2106
  %v2748 = vpop.f32.mrb[0].mxu0
  %v2749 = vadd.f32 %v1934, %v2748
  %v2750 = vpop.f32.mrb[0].mxu0
  %2751 = vmatprep.mubr.f32.mxu0 0.0
  %2752 = vmatmul.mubr.f32.gmra.mrb[0].mxu0 %v2109
  %v2753 = vpop.f32.mrb[0].mxu0
  %v2754 = vadd.f32 %v1934, %v2753
  %v2755 = vpop.f32.mrb[0].mxu0
  %2756 = vmatprep.mubr.f32.mxu0 0.0
  %2757 = vmatmul.mubr.f32.gmra.mrb[0].mxu0 %v2112
  %v2758 = vpop.f32.mrb[0].mxu0
  %v2759 = vadd.f32 %v1934, %v2758
  %v2760 = vpop.f32.mrb[0].mxu0
  %2761 = vmatprep.mubr.f32.mxu0 0.0
  %2762 = vmatmul.mubr.f32.gmra.mrb[0].mxu0 %v2115
  %v2763 = vpop.f32.mrb[0].mxu0
  %v2764 = vadd.f32 %v1934, %v2763
  %v2765 = vpop.f32.mrb[0].mxu0
  %2766 = vmatprep.mubr.f32.mxu0 0.0
  %2767 = vmatmul.mubr.f32.gmra.mrb[0].mxu0 %v2118
  %v2768 = vpop.f32.mrb[0].mxu0
  %v2769 = vadd.f32 %v1934, %v2768
  %v2770 = vpop.f32.mrb[0].mxu0
  %2771 = vmatprep.mubr.f32.mxu0 0.0
  %2772 = vmatmul.mubr.f32.gmra.mrb[0].mxu0 %v2121
  %v2773 = vpop.f32.mrb[0].mxu0
  %v2774 = vadd.f32 %v1934, %v2773
  %v2775 = vpop.f32.mrb[0].mxu0
  %2776 = vmatprep.mubr.f32.mxu0 0.0
  %2777 = vmatmul.mubr.f32.gmra.mrb[0].mxu0 %v2124
  %v2778 = vpop.f32.mrb[0].mxu0
  %v2779 = vadd.f32 %v1934, %v2778
  %v2780 = vpop.f32.mrb[0].mxu0
  %2781 = vmatprep.mubr.f32.mxu0 0.0
  %2782 = vmatmul.mubr.f32.gmra.mrb[0].mxu0 %v2127
  %v2783 = vpop.f32.mrb[0].mxu0
  %v2784 = vadd.f32 %v1934, %v2783
  %v2785 = vpop.f32.mrb[0].mxu0
  %2786 = vmatprep.mubr.f32.mxu0 0.0
  %2787 = vmatmul.mubr.f32.gmra.mrb[0].mxu0 %v2130
  %v2788 = vpop.f32.mrb[0].mxu0
  %v2789 = vadd.f32 %v1934, %v2788
  %v2790 = vpop.f32.mrb[0].mxu0
  %2791 = vmatprep.mubr.f32.mxu0 0.0
  %2792 = vmatmul.mubr.f32.gmra.mrb[0].mxu0 %v2133
  %v2793 = vpop.f32.mrb[0].mxu0
  %v2794 = vadd.f32 %v1934, %v2793
  %v2795 = vpop.f32.mrb[0].mxu0
  %2796 = vmatprep.mubr.f32.mxu0 0.0
  %2797 = vmatmul.mubr.f32.gmra.mrb[0].mxu0 %v2136
  %v2798 = vpop.f32.mrb[0].mxu0
  %v2799 = vadd.f32 %v1934, %v2798
  %v2800 = vpop.f32.mrb[0].mxu0
  %2801 = vmatprep.mubr.f32.mxu0 0.0
  %2802 = vmatmul.mubr.f32.gmra.mrb[0].mxu0 %v2139
  %v2803 = vpop.f32.mrb[0].mxu0
  %v2804 = vadd.f32 %v1934, %v2803
  %v2805 = vpop.f32.mrb[0].mxu0
  %2806 = vmatprep.mubr.f32.mxu0 0.0
  %2807 = vmatmul.mubr.f32.gmra.mrb[0].mxu0 %v2142
  %v2808 = vpop.f32.mrb[0].mxu0
  %v2809 = vadd.f32 %v1934, %v2808
  %v2810 = vpop.f32.mrb[0].mxu0
  %2811 = vmatprep.mubr.f32.mxu0 0.0
  %2812 = vmatmul.mubr.f32.gmra.mrb[0].mxu0 %v2145
  %v2813 = vpop.f32.mrb[0].mxu0
  %v2814 = vadd.f32 %v1934, %v2813
  %v2815 = vpop.f32.mrb[0].mxu0
  %2816 = vmatprep.mubr.f32.mxu0 0.0
  %2817 = vmatmul.mubr.f32.gmra.mrb[0].mxu0 %v2148
  %v2818 = vpop.f32.mrb[0].mxu0
  %v2819 = vadd.f32 %v1934, %v2818
  %v2820 = vpop.f32.mrb[0].mxu0
  %2821 = vmatprep.mubr.f32.mxu0 0.0
  %2822 = vmatmul.mubr.f32.gmra.mrb[0].mxu0 %v2151
  %v2823 = vpop.f32.mrb[0].mxu0
  %v2824 = vadd.f32 %v1934, %v2823
  %v2825 = vpop.f32.mrb[0].mxu0
  %2826 = vmatprep.mubr.f32.mxu0 0.0
  %2827 = vmatmul.mubr.f32.gmra.mrb[0].mxu0 %v2154
  %v2828 = vpop.f32.mrb[0].mxu0
  %v2829 = vadd.f32 %v1934, %v2828
  %v2830 = vpop.f32.mrb[0].mxu0
  %2831 = vmatprep.mubr.f32.mxu0 0.0
  %2832 = vmatmul.mubr.f32.gmra.mrb[0].mxu0 %v2157
  %v2833 = vpop.f32.mrb[0].mxu0
  %v2834 = vadd.f32 %v1934, %v2833
  %v2835 = vpop.f32.mrb[0].mxu0
  %2836 = vmatprep.mubr.f32.mxu0 0.0
  %2837 = vmatmul.mubr.f32.gmra.mrb[0].mxu0 %v2160
  %v2838 = vpop.f32.mrb[0].mxu0
  %v2839 = vadd.f32 %v1934, %v2838
  %v2840 = vpop.f32.mrb[0].mxu0
  %2841 = vmatprep.mubr.f32.mxu0 0.0
  %2842 = vmatmul.mubr.f32.gmra.mrb[0].mxu0 %v2163
  %v2843 = vpop.f32.mrb[0].mxu0
  %v2844 = vadd.f32 %v1934, %v2843
  %v2845 = vpop.f32.mrb[0].mxu0
  %2846 = vmatprep.mubr.f32.mxu0 0.0
  %2847 = vmatmul.mubr.f32.gmra.mrb[0].mxu0 %v2166
  %v2848 = vpop.f32.mrb[0].mxu0
  %v2849 = vadd.f32 %v1934, %v2848
  %v2850 = vpop.f32.mrb[0].mxu0
  %2851 = vmatprep.mubr.f32.mxu0 0.0
  %2852 = vmatmul.mubr.f32.gmra.mrb[0].mxu0 %v2169
  %v2853 = vpop.f32.mrb[0].mxu0
  %v2854 = vadd.f32 %v1934, %v2853
  %v2855 = vpop.f32.mrb[0].mxu0
  %2856 = vmatprep.mubr.f32.mxu0 0.0
  %2857 = vmatmul.mubr.f32.gmra.mrb[0].mxu0 %v2172
  %v2858 = vpop.f32.mrb[0].mxu0
  %v2859 = vadd.f32 %v1934, %v2858
  %v2860 = vpop.f32.mrb[0].mxu0
  %2861 = vmatprep.mubr.f32.mxu0 0.0
  %2862 = vmatmul.mubr.f32.gmra.mrb[0].mxu0 %v2175
  %v2863 = vpop.f32.mrb[0].mxu0
  %v2864 = vadd.f32 %v1934, %v2863
  %v2865 = vpop.f32.mrb[0].mxu0
  %2866 = vmatprep.mubr.f32.mxu0 0.0
  %2867 = vmatmul.mubr.f32.gmra.mrb[0].mxu0 %v2178
  %v2868 = vpop.f32.mrb[0].mxu0
  %v2869 = vadd.f32 %v1934, %v2868
  %v2870 = vpop.f32.mrb[0].mxu0
  %2871 = vmatprep.mubr.f32.mxu0 0.0
  %2872 = vmatmul.mubr.f32.gmra.mrb[0].mxu0 %v2181
  %v2873 = vpop.f32.mrb[0].mxu0
  %v2874 = vadd.f32 %v1934, %v2873
  %v2875 = vpop.f32.mrb[0].mxu0
  %2876 = vmatprep.mubr.f32.mxu0 0.0
  %2877 = vmatmul.mubr.f32.gmra.mrb[0].mxu0 %v2184
  %v2878 = vpop.f32.mrb[0].mxu0
  %v2879 = vadd.f32 %v1934, %v2878
  %v2880 = vpop.f32.mrb[0].mxu0
  %2881 = vmatprep.mubr.f32.mxu0 0.0
  %2882 = vmatmul.mubr.f32.gmra.mrb[0].mxu0 %v2187
  %v2883 = vpop.f32.mrb[0].mxu0
  %v2884 = vadd.f32 %v1934, %v2883
  %v2885 = vpop.f32.mrb[0].mxu0
  %2886 = vmatprep.mubr.f32.mxu0 0.0
  %2887 = vmatmul.mubr.f32.gmra.mrb[0].mxu0 %v2190
  %v2888 = vpop.f32.mrb[0].mxu0
  %v2889 = vadd.f32 %v1934, %v2888
  %v2890 = vpop.f32.mrb[0].mxu0
  %2891 = vmatprep.mubr.f32.mxu0 0.0
  %2892 = vmatmul.mubr.f32.gmra.mrb[0].mxu0 %v2193
  %v2893 = vpop.f32.mrb[0].mxu0
  %v2894 = vadd.f32 %v1934, %v2893
  %v2895 = vpop.f32.mrb[0].mxu0
  %2896 = vmatprep.mubr.f32.mxu0 0.0
  %2897 = vmatmul.mubr.f32.gmra.mrb[0].mxu0 %v2196
  %v2898 = vpop.f32.mrb[0].mxu0
  %v2899 = vadd.f32 %v1934, %v2898
  %v2900 = vpop.f32.mrb[0].mxu0
  %2901 = vmatprep.mubr.f32.mxu0 0.0
  %2902 = vmatmul.mubr.f32.gmra.mrb[0].mxu0 %v2199
  %v2903 = vpop.f32.mrb[0].mxu0
  %v2904 = vadd.f32 %v1934, %v2903
  %v2905 = vpop.f32.mrb[0].mxu0
  %2906 = vmatprep.mubr.f32.mxu0 0.0
  %2907 = vmatmul.mubr.f32.gmra.mrb[0].mxu0 %v2202
  %v2908 = vpop.f32.mrb[0].mxu0
  %v2909 = vadd.f32 %v1934, %v2908
  %v2910 = vpop.f32.mrb[0].mxu0
  %2911 = vmatprep.mubr.f32.mxu0 0.0
  %2912 = vmatmul.mubr.f32.gmra.mrb[0].mxu0 %v2205
  %v2913 = vpop.f32.mrb[0].mxu0
  %v2914 = vadd.f32 %v1934, %v2913
  %v2915 = vpop.f32.mrb[0].mxu0
  %2916 = vmatprep.mubr.f32.mxu0 0.0
  %2917 = vmatmul.mubr.f32.gmra.mrb[0].mxu0 %v2208
  %v2918 = vpop.f32.mrb[0].mxu0
  %v2919 = vadd.f32 %v1934, %v2918
  %v2920 = vpop.f32.mrb[0].mxu0
  %2921 = vmatprep.mubr.f32.mxu0 0.0
  %2922 = vmatmul.mubr.f32.gmra.mrb[0].mxu0 %v2211
  %v2923 = vpop.f32.mrb[0].mxu0
  %v2924 = vadd.f32 %v1934, %v2923
  %v2925 = vpop.f32.mrb[0].mxu0
  %2926 = vmatprep.mubr.f32.mxu0 0.0
  %2927 = vmatmul.mubr.f32.gmra.mrb[0].mxu0 %v2214
  %v2928 = vpop.f32.mrb[0].mxu0
  %v2929 = vadd.f32 %v1934, %v2928
  %v2930 = vpop.f32.mrb[0].mxu0
  %2931 = vmatprep.mubr.f32.mxu0 0.0
  %2932 = vmatmul.mubr.f32.gmra.mrb[0].mxu0 %v2217
  %v2933 = vpop.f32.mrb[0].mxu0
  %v2934 = vadd.f32 %v1934, %v2933
  %v2935 = vpop.f32.mrb[0].mxu0
  %2936 = vmatprep.mubr.f32.mxu0 0.0
  %2937 = vmatmul.mubr.f32.gmra.mrb[0].mxu0 %v2220
  %v2938 = vpop.f32.mrb[0].mxu0
  %v2939 = vadd.f32 %v1934, %v2938
  %v2940 = vpop.f32.mrb[0].mxu0
  %2941 = vmatprep.mubr.f32.mxu0 0.0
  %2942 = vmatmul.mubr.f32.gmra.mrb[0].mxu0 %v2223
  %v2943 = vpop.f32.mrb[0].mxu0
  %v2944 = vadd.f32 %v1934, %v2943
  %v2945 = vpop.f32.mrb[0].mxu0
  %2946 = vmatprep.mubr.f32.mxu0 0.0
  %2947 = vmatmul.mubr.f32.gmra.mrb[0].mxu0 %v2226
  %v2948 = vpop.f32.mrb[0].mxu0
  %v2949 = vadd.f32 %v1934, %v2948
  %v2950 = vpop.f32.mrb[0].mxu0
  %2951 = vmatprep.mubr.f32.mxu0 0.0
  %2952 = vmatmul.mubr.f32.gmra.mrb[0].mxu0 %v2229
  %v2953 = vpop.f32.mrb[0].mxu0
  %v2954 = vadd.f32 %v1934, %v2953
  %v2955 = vpop.f32.mrb[0].mxu0
  %2956 = vmatprep.mubr.f32.mxu0 0.0
  %2957 = vmatmul.mubr.f32.gmra.mrb[0].mxu0 %v2232
  %v2958 = vpop.f32.mrb[0].mxu0
  %v2959 = vadd.f32 %v1934, %v2958
  %v2960 = vpop.f32.mrb[0].mxu0
  %2961 = vmatprep.mubr.f32.mxu0 0.0
  %2962 = vmatmul.mubr.f32.gmra.mrb[0].mxu0 %v2235
  %v2963 = vpop.f32.mrb[0].mxu0
  %v2964 = vadd.f32 %v1934, %v2963
  %v2965 = vpop.f32.mrb[0].mxu0
  %2966 = vmatprep.mubr.f32.mxu0 0.0
  %2967 = vmatmul.mubr.f32.gmra.mrb[0].mxu0 %v2238
  %v2968 = vpop.f32.mrb[0].mxu0
  %v2969 = vadd.f32 %v1934, %v2968
  %v2970 = vpop.f32.mrb[0].mxu0
  %2971 = vmatprep.mubr.f32.mxu0 0.0
  %2972 = vmatmul.mubr.f32.gmra.mrb[0].mxu0 %v2241
  %v2973 = vpop.f32.mrb[0].mxu0
  %v2974 = vadd.f32 %v1934, %v2973
  %v2975 = vpop.f32.mrb[0].mxu0
  %2976 = vmatprep.mubr.f32.mxu0 0.0
  %2977 = vmatmul.mubr.f32.gmra.mrb[0].mxu0 %v2244
  %v2978 = vpop.f32.mrb[0].mxu0
  %v2979 = vadd.f32 %v1934, %v2978
  %v2980 = vpop.f32.mrb[0].mxu0
  %2981 = vmatprep.mubr.f32.mxu0 0.0
  %2982 = vmatmul.mubr.f32.gmra.mrb[0].mxu0 %v2247
  %v2983 = vpop.f32.mrb[0].mxu0
  %v2984 = vadd.f32 %v1934, %v2983
  %v2985 = vpop.f32.mrb[0].mxu0
  %2986 = vmatprep.mubr.f32.mxu0 0.0
  %2987 = vmatmul.mubr.f32.gmra.mrb[0].mxu0 %v2250
  %v2988 = vpop.f32.mrb[0].mxu0
  %v2989 = vadd.f32 %v1934, %v2988
  %v2990 = vpop.f32.mrb[0].mxu0
  %2991 = vmatprep.mubr.f32.mxu0 0.0
  %2992 = vmatmul.mubr.f32.gmra.mrb[0].mxu0 %v2253
  %v2993 = vpop.f32.mrb[0].mxu0
  %v2994 = vadd.f32 %v1934, %v2993
  %v2995 = vpop.f32.mrb[0].mxu0
  %2996 = vmatprep.mubr.f32.mxu0 0.0
  %2997 = vmatmul.mubr.f32.gmra.mrb[0].mxu0 %v2256
  %v2998 = vpop.f32.mrb[0].mxu0
  %v2999 = vadd.f32 %v1934, %v2998
  %v3000 = vpop.f32.mrb[0].mxu0
  %3001 = vmatprep.mubr.f32.mxu0 0.0
  %3002 = vmatmul.mubr.f32.gmra.mrb[0].mxu0 %v2259
  %v3003 = vpop.f32.mrb[0].mxu0
  %v3004 = vadd.f32 %v1934, %v3003
  %v3005 = vpop.f32.mrb[0].mxu0
  %3006 = vmatprep.mubr.f32.mxu0 0.0
  %3007 = vmatmul.mubr.f32.gmra.mrb[0].mxu0 %v2262
  %v3008 = vpop.f32.mrb[0].mxu0
  %v3009 = vadd.f32 %v1934, %v3008
  %v3010 = vpop.f32.mrb[0].mxu0
  %3011 = vmatprep.mubr.f32.mxu0 0.0
  %3012 = vmatmul.mubr.f32.gmra.mrb[0].mxu0 %v2265
  %v3013 = vpop.f32.mrb[0].mxu0
  %v3014 = vadd.f32 %v1934, %v3013
  %v3015 = vpop.f32.mrb[0].mxu0
  %3016 = vmatprep.mubr.f32.mxu0 0.0
  %3017 = vmatmul.mubr.f32.gmra.mrb[0].mxu0 %v2268
  %v3018 = vpop.f32.mrb[0].mxu0
  %v3019 = vadd.f32 %v1934, %v3018
  %v3020 = vpop.f32.mrb[0].mxu0
  %3021 = vmatprep.mubr.f32.mxu0 0.0
  %3022 = vmatmul.mubr.f32.gmra.mrb[0].mxu0 %v2271
  %v3023 = vpop.f32.mrb[0].mxu0
  %v3024 = vadd.f32 %v1934, %v3023
  %v3025 = vpop.f32.mrb[0].mxu0
  %3026 = vmatprep.mubr.f32.mxu0 0.0
  %3027 = vmatmul.mubr.f32.gmra.mrb[0].mxu0 %v2274
  %v3028 = vpop.f32.mrb[0].mxu0
  %v3029 = vadd.f32 %v1934, %v3028
  %v3030 = vpop.f32.mrb[0].mxu0
  %3031 = vmatprep.mubr.f32.mxu0 0.0
  %3032 = vmatmul.mubr.f32.gmra.mrb[0].mxu0 %v2277
  %v3033 = vpop.f32.mrb[0].mxu0
  %v3034 = vadd.f32 %v1934, %v3033
  %v3035 = vpop.f32.mrb[0].mxu0
  %3036 = vmatprep.mubr.f32.mxu0 0.0
  %3037 = vmatmul.mubr.f32.gmra.mrb[0].mxu0 %v2280
  %v3038 = vpop.f32.mrb[0].mxu0
  %v3039 = vadd.f32 %v1934, %v3038
  %v3040 = vpop.f32.mrb[0].mxu0
  %3041 = vmatprep.mubr.f32.mxu0 0.0
  %3042 = vmatmul.mubr.f32.gmra.mrb[0].mxu0 %v2283
  %v3043 = vpop.f32.mrb[0].mxu0
  %v3044 = vadd.f32 %v1934, %v3043
  %v3045 = vpop.f32.mrb[0].mxu0
  %3046 = vmatprep.mubr.f32.mxu0 0.0
  %3047 = vmatmul.mubr.f32.gmra.mrb[0].mxu0 %v2286
  %v3048 = vpop.f32.mrb[0].mxu0
  %v3049 = vadd.f32 %v1934, %v3048
  %v3050 = vpop.f32.mrb[0].mxu0
  %3051 = vmatprep.mubr.f32.mxu0 0.0
  %3052 = vmatmul.mubr.f32.gmra.mrb[0].mxu0 %v2289
  %v3053 = vpop.f32.mrb[0].mxu0
  %v3054 = vadd.f32 %v1934, %v3053
  %v3055 = vpop.f32.mrb[0].mxu0
  %3056 = vmatprep.mubr.f32.mxu0 0.0
  %3057 = vmatmul.mubr.f32.gmra.mrb[0].mxu0 %v2292
  %v3058 = vpop.f32.mrb[0].mxu0
  %v3059 = vadd.f32 %v1934, %v3058
  %v3060 = vpop.f32.mrb[0].mxu0
  %3061 = vmatprep.mubr.f32.mxu0 0.0
  %3062 = vmatmul.mubr.f32.gmra.mrb[0].mxu0 %v2295
  %v3063 = vpop.f32.mrb[0].mxu0
  %v3064 = vadd.f32 %v1934, %v3063
  %v3065 = vpop.f32.mrb[0].mxu0
  %3066 = vmatprep.mubr.f32.mxu0 0.0
  %3067 = vmatmul.mubr.f32.gmra.mrb[0].mxu0 %v2298
  %v3068 = vpop.f32.mrb[0].mxu0
  %v3069 = vadd.f32 %v1934, %v3068
  %v3070 = vpop.f32.mrb[0].mxu0
  %3071 = vmatprep.mubr.f32.mxu0 0.0
  %3072 = vmatmul.mubr.f32.gmra.mrb[0].mxu0 %v2301
  %v3073 = vpop.f32.mrb[0].mxu0
  %v3074 = vadd.f32 %v1934, %v3073
  %v3075 = vpop.f32.mrb[0].mxu0
  %3076 = vmatprep.mubr.f32.mxu0 0.0
  %3077 = vmatmul.mubr.f32.gmra.mrb[0].mxu0 %v2304
  %v3078 = vpop.f32.mrb[0].mxu0
  %v3079 = vadd.f32 %v1934, %v3078
  %v3080 = vpop.f32.mrb[0].mxu0
  %3081 = vmatprep.mubr.f32.mxu0 0.0
  %3082 = vmatmul.mubr.f32.gmra.mrb[0].mxu0 %v2307
  %v3083 = vpop.f32.mrb[0].mxu0
  %v3084 = vadd.f32 %v1934, %v3083
  %v3085 = vpop.f32.mrb[0].mxu0
  %3086 = vmatprep.mubr.f32.mxu0 0.0
  %3087 = vmatmul.mubr.f32.gmra.mrb[0].mxu0 %v2310
  %v3088 = vpop.f32.mrb[0].mxu0
  %v3089 = vadd.f32 %v1934, %v3088
  %v3090 = vpop.f32.mrb[0].mxu0
  %3091 = vmatprep.mubr.f32.mxu0 0.0
  %3092 = vmatmul.mubr.f32.gmra.mrb[0].mxu0 %v2313
  %v3093 = vpop.f32.mrb[0].mxu0
  %v3094 = vadd.f32 %v1934, %v3093
  %v3095 = vpop.f32.mrb[0].mxu0
  %3096 = vmatprep.mubr.f32.mxu0 0.0
  %3097 = vmatmul.mubr.f32.gmra.mrb[0].mxu0 %v2316
  %v3098 = vpop.f32.mrb[0].mxu0
  %v3099 = vadd.f32 %v1934, %v3098
  %v3100 = vpop.f32.mrb[0].mxu0
  %3101 = vmatprep.mubr.f32.mxu0 0.0
  %3102 = vmatmul.mubr.f32.gmra.mrb[0].mxu0 %v2319
  %v3103 = vpop.f32.mrb[0].mxu0
  %v3104 = vadd.f32 %v1934, %v3103
  %v3105 = vpop.f32.mrb[0].mxu0
  %3106 = vmatprep.mubr.f32.mxu0 0.0
  %3107 = vmatmul.mubr.f32.gmra.mrb[0].mxu0 %v2322
  %v3108 = vpop.f32.mrb[0].mxu0
  %v3109 = vadd.f32 %v1934, %v3108
  %v3110 = vpop.f32.mrb[0].mxu0
  %3111 = vmatprep.mubr.f32.mxu0 0.0
  %3112 = vmatmul.mubr.f32.gmra.mrb[0].mxu0 %v2325
  %v3113 = vpop.f32.mrb[0].mxu0
  %v3114 = vadd.f32 %v1934, %v3113
  %v3115 = vpop.f32.mrb[0].mxu0
  %3116 = vmatprep.mubr.f32.mxu0 0.0
  %3117 = vmatmul.mubr.f32.gmra.mrb[0].mxu0 %v2328
  %v3118 = vpop.f32.mrb[0].mxu0
  %v3119 = vadd.f32 %v1934, %v3118
  %v3120 = vpop.f32.mrb[0].mxu0
  %3121 = vmatprep.mubr.f32.mxu0 0.0
  %3122 = vmatmul.mubr.f32.gmra.mrb[0].mxu0 %v2331
  %v3123 = vpop.f32.mrb[0].mxu0
  %v3124 = vadd.f32 %v1934, %v3123
  %v3125 = vpop.f32.mrb[0].mxu0
  %3126 = vmatprep.mubr.f32.mxu0 0.0
  %3127 = vmatmul.mubr.f32.gmra.mrb[0].mxu0 %v2334
  %v3128 = vpop.f32.mrb[0].mxu0
  %v3129 = vadd.f32 %v1934, %v3128
  %v3130 = vpop.f32.mrb[0].mxu0
  %3131 = vmatprep.mubr.f32.mxu0 0.0
  %3132 = vmatmul.mubr.f32.gmra.mrb[0].mxu0 %v2337
  %v3133 = vpop.f32.mrb[0].mxu0
  %v3134 = vadd.f32 %v1934, %v3133
  %v3135 = vpop.f32.mrb[0].mxu0
  %3136 = vmatprep.mubr.f32.mxu0 0.0
  %3137 = vmatmul.mubr.f32.gmra.mrb[0].mxu0 %v2340
  %v3138 = vpop.f32.mrb[0].mxu0
  %v3139 = vadd.f32 %v1934, %v3138
  %v3140 = vpop.f32.mrb[0].mxu0
  %3141 = vmatprep.mubr.f32.mxu0 0.0
  %3142 = vmatmul.mubr.f32.gmra.mrb[0].mxu0 %v2343
  %v3143 = vpop.f32.mrb[0].mxu0
  %v3144 = vadd.f32 %v1934, %v3143
  %v3145 = vpop.f32.mrb[0].mxu0
  %3146 = vmatprep.mubr.f32.mxu0 0.0
  %3147 = vmatmul.mubr.f32.gmra.mrb[0].mxu0 %v2346
  %v3148 = vpop.f32.mrb[0].mxu0
  %v3149 = vadd.f32 %v1934, %v3148
  %v3150 = vpop.f32.mrb[0].mxu0
  %3151 = vmatprep.mubr.f32.mxu0 0.0
  %3152 = vmatmul.mubr.f32.gmra.mrb[0].mxu0 %v2349
  %v3153 = vpop.f32.mrb[0].mxu0
  %v3154 = vadd.f32 %v1934, %v3153
  %v3155 = vpop.f32.mrb[0].mxu0
  %3156 = vmatprep.mubr.f32.mxu0 0.0
  %3157 = vmatmul.mubr.f32.gmra.mrb[0].mxu0 %v2352
  %v3158 = vpop.f32.mrb[0].mxu0
  %v3159 = vadd.f32 %v1934, %v3158
  %v3160 = vpop.f32.mrb[0].mxu0
  %3161 = vmatprep.mubr.f32.mxu0 0.0
  %3162 = vmatmul.mubr.f32.gmra.mrb[0].mxu0 %v2355
  %v3163 = vpop.f32.mrb[0].mxu0
  %v3164 = vadd.f32 %v1934, %v3163
  %v3165 = vpop.f32.mrb[0].mxu0
  %3166 = vmatprep.mubr.f32.mxu0 0.0
  %3167 = vmatmul.mubr.f32.gmra.mrb[0].mxu0 %v2358
  %v3168 = vpop.f32.mrb[0].mxu0
  %v3169 = vadd.f32 %v1934, %v3168
  %v3170 = vpop.f32.mrb[0].mxu0
  %3171 = vmatprep.mubr.f32.mxu0 0.0
  %3172 = vmatmul.mubr.f32.gmra.mrb[0].mxu0 %v2361
  %v3173 = vpop.f32.mrb[0].mxu0
  %v3174 = vadd.f32 %v1934, %v3173
  %v3175 = vpop.f32.mrb[0].mxu0
  %3176 = vmatprep.mubr.f32.mxu0 0.0
  %3177 = vmatmul.mubr.f32.gmra.mrb[0].mxu0 %v2364
  %v3178 = vpop.f32.mrb[0].mxu0
  %v3179 = vadd.f32 %v1934, %v3178
  %v3180 = vpop.f32.mrb[0].mxu0
  %3181 = vmatprep.mubr.f32.mxu0 0.0
  %3182 = vmatmul.mubr.f32.gmra.mrb[0].mxu0 %v2367
  %v3183 = vpop.f32.mrb[0].mxu0
  %v3184 = vadd.f32 %v1934, %v3183
  %v3185 = vpop.f32.mrb[0].mxu0
  %3186 = vmatprep.mubr.f32.mxu0 0.0
  %3187 = vmatmul.mubr.f32.gmra.mrb[0].mxu0 %v2370
  %v3188 = vpop.f32.mrb[0].mxu0
  %v3189 = vadd.f32 %v1934, %v3188
  %v3190 = vpop.f32.mrb[0].mxu0
  %3191 = vmatprep.mubr.f32.mxu0 0.0
  %3192 = vmatmul.mubr.f32.gmra.mrb[0].mxu0 %v2373
  %v3193 = vpop.f32.mrb[0].mxu0
  %v3194 = vadd.f32 %v1934, %v3193
  %v3195 = vpop.f32.mrb[0].mxu0
  %3196 = vmatprep.mubr.f32.mxu0 0.0
  %3197 = vmatmul.mubr.f32.gmra.mrb[0].mxu0 %v2376
  %v3198 = vpop.f32.mrb[0].mxu0
  %v3199 = vadd.f32 %v1934, %v3198
  %v3200 = vpop.f32.mrb[0].mxu0
  %3201 = vmatprep.mubr.f32.mxu0 0.0
  %3202 = vmatmul.mubr.f32.gmra.mrb[0].mxu0 %v2379
  %v3203 = vpop.f32.mrb[0].mxu0
  %v3204 = vadd.f32 %v1934, %v3203
  %v3205 = vpop.f32.mrb[0].mxu0
  %3206 = vmatprep.mubr.f32.mxu0 0.0
  %3207 = vmatmul.mubr.f32.gmra.mrb[0].mxu0 %v2382
  %v3208 = vpop.f32.mrb[0].mxu0
  %v3209 = vadd.f32 %v1934, %v3208
  %v3210 = vpop.f32.mrb[0].mxu0
  %3211 = vmatprep.mubr.f32.mxu0 0.0
  %3212 = vmatmul.mubr.f32.gmra.mrb[0].mxu0 %v2385
  %v3213 = vpop.f32.mrb[0].mxu0
  %v3214 = vadd.f32 %v1934, %v3213
  %v3215 = vpop.f32.mrb[0].mxu0
  %3216 = vmatprep.mubr.f32.mxu0 0.0
  %3217 = vmatmul.mubr.f32.gmra.mrb[0].mxu0 %v2388
  %v3218 = vpop.f32.mrb[0].mxu0
  %v3219 = vadd.f32 %v1934, %v3218
  %v3220 = vpop.f32.mrb[0].mxu0
  %3221 = vmatprep.mubr.f32.mxu0 0.0
  %3222 = vmatmul.mubr.f32.gmra.mrb[0].mxu0 %v2391
  %v3223 = vpop.f32.mrb[0].mxu0
  %v3224 = vadd.f32 %v1934, %v3223
  %v3225 = vpop.f32.mrb[0].mxu0
  %3226 = vmatprep.mubr.f32.mxu0 0.0
  %3227 = vmatmul.mubr.f32.gmra.mrb[0].mxu0 %v2394
  %v3228 = vpop.f32.mrb[0].mxu0
  %v3229 = vadd.f32 %v1934, %v3228
  %v3230 = vpop.f32.mrb[0].mxu0
  %3231 = vmatprep.mubr.f32.mxu0 0.0
  %3232 = vmatmul.mubr.f32.gmra.mrb[0].mxu0 %v2397
  %v3233 = vpop.f32.mrb[0].mxu0
  %v3234 = vadd.f32 %v1934, %v3233
  %v3235 = vpop.f32.mrb[0].mxu0
  %3236 = vmatprep.mubr.f32.mxu0 0.0
  %3237 = vmatmul.mubr.f32.gmra.mrb[0].mxu0 %v2400
  %v3238 = vpop.f32.mrb[0].mxu0
  %v3239 = vadd.f32 %v1934, %v3238
  %v3240 = vpop.f32.mrb[0].mxu0
  %3241 = vdwg.mxu0
  %vm3242 = vcmask 64512
  %3243 = vst.msk [vmem:[%s6] sm:$0xff] %vm3242, %v2469
  %3244 = vst.msk [vmem:[%s6 + $0x8] sm:$0xff] %vm3242, %v2474
  %3245 = vst.msk [vmem:[%s6 + $0x10] sm:$0xff] %vm3242, %v2479
  %3246 = vst.msk [vmem:[%s6 + $0x18] sm:$0xff] %vm3242, %v2484
  %3247 = vst.msk [vmem:[%s6 + $0x20] sm:$0xff] %vm3242, %v2489
  %3248 = vst.msk [vmem:[%s6 + $0x28] sm:$0xff] %vm3242, %v2494
  %3249 = vst.msk [vmem:[%s6 + $0x30] sm:$0xff] %vm3242, %v2499
  %3250 = vst.msk [vmem:[%s6 + $0x38] sm:$0xff] %vm3242, %v2504
  %3251 = vst.msk [vmem:[%s6 + $0x40] sm:$0xff] %vm3242, %v2509
  %3252 = vst.msk [vmem:[%s6 + $0x48] sm:$0xff] %vm3242, %v2514
  %3253 = vst.msk [vmem:[%s6 + $0x50] sm:$0xff] %vm3242, %v2519
  %3254 = vst.msk [vmem:[%s6 + $0x58] sm:$0xff] %vm3242, %v2524
  %3255 = vst.msk [vmem:[%s6 + $0x60] sm:$0xff] %vm3242, %v2529
  %3256 = vst.msk [vmem:[%s6 + $0x68] sm:$0xff] %vm3242, %v2534
  %3257 = vst.msk [vmem:[%s6 + $0x70] sm:$0xff] %vm3242, %v2539
  %3258 = vst.msk [vmem:[%s6 + $0x78] sm:$0xff] %vm3242, %v2544
  %3259 = vst.msk [vmem:[%s6 + $0x80] sm:$0xff] %vm3242, %v2549
  %3260 = vst.msk [vmem:[%s6 + $0x88] sm:$0xff] %vm3242, %v2554
  %3261 = vst.msk [vmem:[%s6 + $0x90] sm:$0xff] %vm3242, %v2559
  %3262 = vst.msk [vmem:[%s6 + $0x98] sm:$0xff] %vm3242, %v2564
  %3263 = vst.msk [vmem:[%s6 + $0xa0] sm:$0xff] %vm3242, %v2569
  %3264 = vst.msk [vmem:[%s6 + $0xa8] sm:$0xff] %vm3242, %v2574
  %3265 = vst.msk [vmem:[%s6 + $0xb0] sm:$0xff] %vm3242, %v2579
  %3266 = vst.msk [vmem:[%s6 + $0xb8] sm:$0xff] %vm3242, %v2584
  %3267 = vst.msk [vmem:[%s6 + $0xc0] sm:$0xff] %vm3242, %v2589
  %3268 = vst.msk [vmem:[%s6 + $0xc8] sm:$0xff] %vm3242, %v2594
  %3269 = vst.msk [vmem:[%s6 + $0xd0] sm:$0xff] %vm3242, %v2599
  %3270 = vst.msk [vmem:[%s6 + $0xd8] sm:$0xff] %vm3242, %v2604
  %3271 = vst.msk [vmem:[%s6 + $0xe0] sm:$0xff] %vm3242, %v2609
  %3272 = vst.msk [vmem:[%s6 + $0xe8] sm:$0xff] %vm3242, %v2614
  %3273 = vst.msk [vmem:[%s6 + $0xf0] sm:$0xff] %vm3242, %v2619
  %3274 = vst.msk [vmem:[%s6 + $0xf8] sm:$0xff] %vm3242, %v2624
  %3275 = vst.msk [vmem:[%s6 + $0x100] sm:$0xff] %vm3242, %v2629
  %3276 = vst.msk [vmem:[%s6 + $0x108] sm:$0xff] %vm3242, %v2634
  %3277 = vst.msk [vmem:[%s6 + $0x110] sm:$0xff] %vm3242, %v2639
  %3278 = vst.msk [vmem:[%s6 + $0x118] sm:$0xff] %vm3242, %v2644
  %3279 = vst.msk [vmem:[%s6 + $0x120] sm:$0xff] %vm3242, %v2649
  %3280 = vst.msk [vmem:[%s6 + $0x128] sm:$0xff] %vm3242, %v2654
  %3281 = vst.msk [vmem:[%s6 + $0x130] sm:$0xff] %vm3242, %v2659
  %3282 = vst.msk [vmem:[%s6 + $0x138] sm:$0xff] %vm3242, %v2664
  %3283 = vst.msk [vmem:[%s6 + $0x140] sm:$0xff] %vm3242, %v2669
  %3284 = vst.msk [vmem:[%s6 + $0x148] sm:$0xff] %vm3242, %v2674
  %3285 = vst.msk [vmem:[%s6 + $0x150] sm:$0xff] %vm3242, %v2679
  %3286 = vst.msk [vmem:[%s6 + $0x158] sm:$0xff] %vm3242, %v2684
  %3287 = vst.msk [vmem:[%s6 + $0x160] sm:$0xff] %vm3242, %v2689
  %3288 = vst.msk [vmem:[%s6 + $0x168] sm:$0xff] %vm3242, %v2694
  %3289 = vst.msk [vmem:[%s6 + $0x170] sm:$0xff] %vm3242, %v2699
  %3290 = vst.msk [vmem:[%s6 + $0x178] sm:$0xff] %vm3242, %v2704
  %3291 = vst.msk [vmem:[%s6 + $0x180] sm:$0xff] %vm3242, %v2709
  %3292 = vst.msk [vmem:[%s6 + $0x188] sm:$0xff] %vm3242, %v2714
  %3293 = vst.msk [vmem:[%s6 + $0x190] sm:$0xff] %vm3242, %v2719
  %3294 = vst.msk [vmem:[%s6 + $0x198] sm:$0xff] %vm3242, %v2724
  %3295 = vst.msk [vmem:[%s6 + $0x1a0] sm:$0xff] %vm3242, %v2729
  %3296 = vst.msk [vmem:[%s6 + $0x1a8] sm:$0xff] %vm3242, %v2734
  %3297 = vst.msk [vmem:[%s6 + $0x1b0] sm:$0xff] %vm3242, %v2739
  %3298 = vst.msk [vmem:[%s6 + $0x1b8] sm:$0xff] %vm3242, %v2744
  %3299 = vst.msk [vmem:[%s6 + $0x1c0] sm:$0xff] %vm3242, %v2749
  %3300 = vst.msk [vmem:[%s6 + $0x1c8] sm:$0xff] %vm3242, %v2754
  %3301 = vst.msk [vmem:[%s6 + $0x1d0] sm:$0xff] %vm3242, %v2759
  %3302 = vst.msk [vmem:[%s6 + $0x1d8] sm:$0xff] %vm3242, %v2764
  %3303 = vst.msk [vmem:[%s6 + $0x1e0] sm:$0xff] %vm3242, %v2769
  %3304 = vst.msk [vmem:[%s6 + $0x1e8] sm:$0xff] %vm3242, %v2774
  %3305 = vst.msk [vmem:[%s6 + $0x1f0] sm:$0xff] %vm3242, %v2779
  %3306 = vst.msk [vmem:[%s6 + $0x1f8] sm:$0xff] %vm3242, %v2784
  %3307 = vst.msk [vmem:[%s6 + $0x200] sm:$0xff] %vm3242, %v2789
  %3308 = vst.msk [vmem:[%s6 + $0x208] sm:$0xff] %vm3242, %v2794
  %3309 = vst.msk [vmem:[%s6 + $0x210] sm:$0xff] %vm3242, %v2799
  %3310 = vst.msk [vmem:[%s6 + $0x218] sm:$0xff] %vm3242, %v2804
  %3311 = vst.msk [vmem:[%s6 + $0x220] sm:$0xff] %vm3242, %v2809
  %3312 = vst.msk [vmem:[%s6 + $0x228] sm:$0xff] %vm3242, %v2814
  %3313 = vst.msk [vmem:[%s6 + $0x230] sm:$0xff] %vm3242, %v2819
  %3314 = vst.msk [vmem:[%s6 + $0x238] sm:$0xff] %vm3242, %v2824
  %3315 = vst.msk [vmem:[%s6 + $0x240] sm:$0xff] %vm3242, %v2829
  %3316 = vst.msk [vmem:[%s6 + $0x248] sm:$0xff] %vm3242, %v2834
  %3317 = vst.msk [vmem:[%s6 + $0x250] sm:$0xff] %vm3242, %v2839
  %3318 = vst.msk [vmem:[%s6 + $0x258] sm:$0xff] %vm3242, %v2844
  %3319 = vst.msk [vmem:[%s6 + $0x260] sm:$0xff] %vm3242, %v2849
  %3320 = vst.msk [vmem:[%s6 + $0x268] sm:$0xff] %vm3242, %v2854
  %3321 = vst.msk [vmem:[%s6 + $0x270] sm:$0xff] %vm3242, %v2859
  %3322 = vst.msk [vmem:[%s6 + $0x278] sm:$0xff] %vm3242, %v2864
  %3323 = vst.msk [vmem:[%s6 + $0x280] sm:$0xff] %vm3242, %v2869
  %3324 = vst.msk [vmem:[%s6 + $0x288] sm:$0xff] %vm3242, %v2874
  %3325 = vst.msk [vmem:[%s6 + $0x290] sm:$0xff] %vm3242, %v2879
  %3326 = vst.msk [vmem:[%s6 + $0x298] sm:$0xff] %vm3242, %v2884
  %3327 = vst.msk [vmem:[%s6 + $0x2a0] sm:$0xff] %vm3242, %v2889
  %3328 = vst.msk [vmem:[%s6 + $0x2a8] sm:$0xff] %vm3242, %v2894
  %3329 = vst.msk [vmem:[%s6 + $0x2b0] sm:$0xff] %vm3242, %v2899
  %3330 = vst.msk [vmem:[%s6 + $0x2b8] sm:$0xff] %vm3242, %v2904
  %3331 = vst.msk [vmem:[%s6 + $0x2c0] sm:$0xff] %vm3242, %v2909
  %3332 = vst.msk [vmem:[%s6 + $0x2c8] sm:$0xff] %vm3242, %v2914
  %3333 = vst.msk [vmem:[%s6 + $0x2d0] sm:$0xff] %vm3242, %v2919
  %3334 = vst.msk [vmem:[%s6 + $0x2d8] sm:$0xff] %vm3242, %v2924
  %3335 = vst.msk [vmem:[%s6 + $0x2e0] sm:$0xff] %vm3242, %v2929
  %3336 = vst.msk [vmem:[%s6 + $0x2e8] sm:$0xff] %vm3242, %v2934
  %3337 = vst.msk [vmem:[%s6 + $0x2f0] sm:$0xff] %vm3242, %v2939
  %3338 = vst.msk [vmem:[%s6 + $0x2f8] sm:$0xff] %vm3242, %v2944
  %3339 = vst.msk [vmem:[%s6 + $0x300] sm:$0xff] %vm3242, %v2949
  %3340 = vst.msk [vmem:[%s6 + $0x308] sm:$0xff] %vm3242, %v2954
  %3341 = vst.msk [vmem:[%s6 + $0x310] sm:$0xff] %vm3242, %v2959
  %3342 = vst.msk [vmem:[%s6 + $0x318] sm:$0xff] %vm3242, %v2964
  %3343 = vst.msk [vmem:[%s6 + $0x320] sm:$0xff] %vm3242, %v2969
  %3344 = vst.msk [vmem:[%s6 + $0x328] sm:$0xff] %vm3242, %v2974
  %3345 = vst.msk [vmem:[%s6 + $0x330] sm:$0xff] %vm3242, %v2979
  %3346 = vst.msk [vmem:[%s6 + $0x338] sm:$0xff] %vm3242, %v2984
  %3347 = vst.msk [vmem:[%s6 + $0x340] sm:$0xff] %vm3242, %v2989
  %3348 = vst.msk [vmem:[%s6 + $0x348] sm:$0xff] %vm3242, %v2994
  %3349 = vst.msk [vmem:[%s6 + $0x350] sm:$0xff] %vm3242, %v2999
  %3350 = vst.msk [vmem:[%s6 + $0x358] sm:$0xff] %vm3242, %v3004
  %3351 = vst.msk [vmem:[%s6 + $0x360] sm:$0xff] %vm3242, %v3009
  %3352 = vst.msk [vmem:[%s6 + $0x368] sm:$0xff] %vm3242, %v3014
  %3353 = vst.msk [vmem:[%s6 + $0x370] sm:$0xff] %vm3242, %v3019
  %3354 = vst.msk [vmem:[%s6 + $0x378] sm:$0xff] %vm3242, %v3024
  %3355 = vst.msk [vmem:[%s6 + $0x380] sm:$0xff] %vm3242, %v3029
  %3356 = vst.msk [vmem:[%s6 + $0x388] sm:$0xff] %vm3242, %v3034
  %3357 = vst.msk [vmem:[%s6 + $0x390] sm:$0xff] %vm3242, %v3039
  %3358 = vst.msk [vmem:[%s6 + $0x398] sm:$0xff] %vm3242, %v3044
  %3359 = vst.msk [vmem:[%s6 + $0x3a0] sm:$0xff] %vm3242, %v3049
  %3360 = vst.msk [vmem:[%s6 + $0x3a8] sm:$0xff] %vm3242, %v3054
  %3361 = vst.msk [vmem:[%s6 + $0x3b0] sm:$0xff] %vm3242, %v3059
  %3362 = vst.msk [vmem:[%s6 + $0x3b8] sm:$0xff] %vm3242, %v3064
  %3363 = vst.msk [vmem:[%s6 + $0x3c0] sm:$0xff] %vm3242, %v3069
  %3364 = vst.msk [vmem:[%s6 + $0x3c8] sm:$0xff] %vm3242, %v3074
  %3365 = vst.msk [vmem:[%s6 + $0x3d0] sm:$0xff] %vm3242, %v3079
  %3366 = vst.msk [vmem:[%s6 + $0x3d8] sm:$0xff] %vm3242, %v3084
  %3367 = vst.msk [vmem:[%s6 + $0x3e0] sm:$0xff] %vm3242, %v3089
  %3368 = vst.msk [vmem:[%s6 + $0x3e8] sm:$0xff] %vm3242, %v3094
  %3369 = vst.msk [vmem:[%s6 + $0x3f0] sm:$0xff] %vm3242, %v3099
  %3370 = vst.msk [vmem:[%s6 + $0x3f8] sm:$0xff] %vm3242, %v3104
  %3371 = vst.msk [vmem:[%s6 + $0x400] sm:$0xff] %vm3242, %v3109
  %3372 = vst.msk [vmem:[%s6 + $0x408] sm:$0xff] %vm3242, %v3114
  %3373 = vst.msk [vmem:[%s6 + $0x410] sm:$0xff] %vm3242, %v3119
  %3374 = vst.msk [vmem:[%s6 + $0x418] sm:$0xff] %vm3242, %v3124
  %3375 = vst.msk [vmem:[%s6 + $0x420] sm:$0xff] %vm3242, %v3129
  %3376 = vst.msk [vmem:[%s6 + $0x428] sm:$0xff] %vm3242, %v3134
  %3377 = vst.msk [vmem:[%s6 + $0x430] sm:$0xff] %vm3242, %v3139
  %3378 = vst.msk [vmem:[%s6 + $0x438] sm:$0xff] %vm3242, %v3144
  %3379 = vst.msk [vmem:[%s6 + $0x440] sm:$0xff] %vm3242, %v3149
  %3380 = vst.msk [vmem:[%s6 + $0x448] sm:$0xff] %vm3242, %v3154
  %3381 = vst.msk [vmem:[%s6 + $0x450] sm:$0xff] %vm3242, %v3159
  %3382 = vst.msk [vmem:[%s6 + $0x458] sm:$0xff] %vm3242, %v3164
  %3383 = vst.msk [vmem:[%s6 + $0x460] sm:$0xff] %vm3242, %v3169
  %3384 = vst.msk [vmem:[%s6 + $0x468] sm:$0xff] %vm3242, %v3174
  %3385 = vst.msk [vmem:[%s6 + $0x470] sm:$0xff] %vm3242, %v3179
  %3386 = vst.msk [vmem:[%s6 + $0x478] sm:$0xff] %vm3242, %v3184
  %3387 = vst.msk [vmem:[%s6 + $0x480] sm:$0xff] %vm3242, %v3189
  %3388 = vst.msk [vmem:[%s6 + $0x488] sm:$0xff] %vm3242, %v3194
  %3389 = vst.msk [vmem:[%s6 + $0x490] sm:$0xff] %vm3242, %v3199
  %3390 = vst.msk [vmem:[%s6 + $0x498] sm:$0xff] %vm3242, %v3204
  %3391 = vst.msk [vmem:[%s6 + $0x4a0] sm:$0xff] %vm3242, %v3209
  %3392 = vst.msk [vmem:[%s6 + $0x4a8] sm:$0xff] %vm3242, %v3214
  %3393 = vst.msk [vmem:[%s6 + $0x4b0] sm:$0xff] %vm3242, %v3219
  %3394 = vst.msk [vmem:[%s6 + $0x4b8] sm:$0xff] %vm3242, %v3224
  %3395 = vst.msk [vmem:[%s6 + $0x4c0] sm:$0xff] %vm3242, %v3229
  %3396 = vst.msk [vmem:[%s6 + $0x4c8] sm:$0xff] %vm3242, %v3234
  %3397 = vst.msk [vmem:[%s6 + $0x4d0] sm:$0xff] %vm3242, %v3239
  // Predicated region
  $region33: #{lstm_tagger_forward.2} parent=0 // pred_check
    _
  $region34: #{lstm_tagger_forward.2} parent=0 // pred_check_branch
    %3399 = sbr.rel (0) target = $region36
  $region35: #{lstm_tagger_forward.2} parent=0 // pred_region
    _
  $region36: #{lstm_tagger_forward.2} parent=0 // pred_fallthru
    _
  // Predicated region
  $region37: #{lstm_tagger_forward.2} parent=0 // pred_check
    _
  $region38: #{lstm_tagger_forward.2} parent=0 // pred_check_branch
    %3401 = sbr.rel (0) target = $region40
  $region39: #{lstm_tagger_forward.2} parent=0 // pred_region
    _
  $region40: #{lstm_tagger_forward.2} parent=0 // pred_fallthru
    _

</llo_original>
